<compile_context>
chip_gen: v7x
topology: tpu7x:2x2x1
jax: 0.10.0
libtpu: 0.0.40
codegen_flags: <defaults>
</compile_context>

<pallas_src>
import functools
import math

import jax
import jax.numpy as jnp
from jax.experimental import pallas as pl
from jax.experimental.pallas import tpu as pltpu


# ---------------------------------------------------------------------------
# In-kernel helpers (operate on VMEM-resident values; no HBM traffic)
# ---------------------------------------------------------------------------
def _add_layernorm(x, res, gamma, beta, eps):
    """LayerNorm(x + res) over the last dim, f32 math (v5e has no bf16 VPU)."""
    y = x + res
    mean = jnp.mean(y, axis=-1, keepdims=True)
    var = jnp.mean((y - mean) ** 2, axis=-1, keepdims=True)
    return (y - mean) * jax.lax.rsqrt(var + eps) * gamma + beta


def _attention(q, k, v, wo, *, H, hd):
    """Multi-head attention + fused output projection for ONE batch element.

    q: (Sq, E) f32 (1/sqrt(hd) already folded into the Q weights),
    k, v: (Sk, E) f32, wo: (E, E) bf16.
    Heads are static lane slices; instead of concatenating head outputs, the
    output projection is accumulated per head: sum_h oh @ Wo[h*hd:(h+1)*hd, :]
    (no cross-lane concat).  Contractions run on the last dim of both operands
    so no k.T is materialised.  Returns (Sq, E) f32 (bias added by caller).
    """
    out = None
    for h in range(H):                       # H is small & static -> unrolled
        lo = h * hd
        qh = q[:, lo:lo + hd].astype(jnp.bfloat16)
        kh = k[:, lo:lo + hd].astype(jnp.bfloat16)
        vh = v[:, lo:lo + hd].astype(jnp.bfloat16)
        s = jnp.einsum("qd,kd->qk", qh, kh,
                       preferred_element_type=jnp.float32)          # (Sq, Sk)
        m = jnp.max(s, axis=-1, keepdims=True)
        p = jnp.exp(s - m)
        denom = jnp.sum(p, axis=-1, keepdims=True)
        p = p * pl.reciprocal(denom, approx=True)                    # EUP slot
        oh = jnp.einsum("qk,kd->qd", p.astype(jnp.bfloat16), vh,
                        preferred_element_type=jnp.float32)          # (Sq, hd)
        contrib = jnp.dot(oh.astype(jnp.bfloat16), wo[lo:lo + hd, :],
                          preferred_element_type=jnp.float32)        # (Sq, E)
        out = contrib if out is None else out + contrib
    return out


# ---------------------------------------------------------------------------
# Kernel 1: embedding + learnable positional encoding (runs once, outside the
# fused layer kernel so emb_w / tgt / pe are not resident across every layer)
# ---------------------------------------------------------------------------
def _embed_kernel(tgt_ref, emb_w_ref, emb_b_ref, pe_ref, x0_ref):
    y = jnp.dot(tgt_ref[...].astype(jnp.bfloat16), emb_w_ref[...],
                preferred_element_type=jnp.float32)
    # pe is (1, S); with S == E it broadcasts along the embedding axis, exactly
    # like PyTorch's `x + self.pe[:, :x.size(1)]` with embed_dim=1.
    x0_ref[...] = (y + emb_b_ref[...] + pe_ref[...]).astype(x0_ref.dtype)


# ---------------------------------------------------------------------------
# Kernel 2: fused decoder stack.  grid = (batch, layer); one grid step = one
# decoder layer applied to one batch element's (S, E) tile.
# ---------------------------------------------------------------------------
def _layers_kernel(
    # batch-tiled activations
    x0_ref, mem_ref,
    # per-layer stacked weights (leading axis indexed by the layer grid axis)
    sa_wqkv_ref, sa_bqkv_ref, sa_wo_ref, sa_bo_ref,
    ca_wq_ref, ca_bq_ref, ca_wkv_ref, ca_bkv_ref, ca_wo_ref, ca_bo_ref,
    w1_ref, b1_ref, w2_ref, b2_ref, ln_ref,
    # output head (constant across the grid)
    fc_w_ref, fc_b_ref,
    # output + scratch
    out_ref, x_ref,
    *, H, eps):
    layer = pl.program_id(1)
    E = x_ref.shape[1]
    hd = E // H

    # ---- layer-0 prologue: pull the embedded tile into the bf16 carry -----
    @pl.when(layer == 0)
    def _init():
        x_ref[...] = x0_ref[0]

    x_bf = x_ref[...]                               # (S, E) bf16 carry
    x = x_bf.astype(jnp.float32)                    # f32 residual stream
    mem_bf = mem_ref[0]                             # (Smem, E) bf16
    ln = ln_ref[0]                                  # (6, E): g1,b1,g2,b2,g3,b3

    # ---- self-attention block (fused QKV projection, scale pre-folded) ----
    qkv = jnp.dot(x_bf, sa_wqkv_ref[0],
                  preferred_element_type=jnp.float32) + sa_bqkv_ref[0]
    sa_out = _attention(qkv[:, :E], qkv[:, E:2 * E], qkv[:, 2 * E:],
                        sa_wo_ref[0], H=H, hd=hd) + sa_bo_ref[0]
    x1 = _add_layernorm(x, sa_out, ln[0:1], ln[1:2], eps)

    # ---- cross-attention block (fused K/V projection of memory) -----------
    qc = jnp.dot(x1.astype(jnp.bfloat16), ca_wq_ref[0],
                 preferred_element_type=jnp.float32) + ca_bq_ref[0]
    kv = jnp.dot(mem_bf, ca_wkv_ref[0],
                 preferred_element_type=jnp.float32) + ca_bkv_ref[0]
    ca_out = _attention(qc, kv[:, :E], kv[:, E:],
                        ca_wo_ref[0], H=H, hd=hd) + ca_bo_ref[0]
    x2 = _add_layernorm(x1, ca_out, ln[2:3], ln[3:4], eps)

    # ---- feed-forward block (linear1 + relu + linear2 + add + LN) ---------
    h = jnp.dot(x2.astype(jnp.bfloat16), w1_ref[0],
                preferred_element_type=jnp.float32) + b1_ref[0]
    h = jnp.maximum(h, 0.0)
    f = jnp.dot(h.astype(jnp.bfloat16), w2_ref[0],
                preferred_element_type=jnp.float32) + b2_ref[0]
    x3 = _add_layernorm(x2, f, ln[4:5], ln[5:6], eps)

    x_ref[...] = x3.astype(jnp.bfloat16)            # bf16 carry to next layer

    # ---- last-layer epilogue: fc_out.  The output block index depends only
    # on the batch axis, so this single write per batch element lands on the
    # block's final visit before writeback. --------------------------------
    @pl.when(layer == pl.num_programs(1) - 1)
    def _final():
        out = jnp.dot(x3.astype(jnp.bfloat16), fc_w_ref[...],
                      preferred_element_type=jnp.float32) + fc_b_ref[...]
        out_ref[0] = out.astype(out_ref.dtype)


# ---------------------------------------------------------------------------
# Wrapper
# ---------------------------------------------------------------------------
@functools.partial(jax.jit, static_argnums=(3,))
def transformer_decoder_forward(tgt, memory, params, nhead):
    B, S, Din = tgt.shape
    _, Smem, E = memory.shape
    L = params["sa_wqkv"].shape[0]
    F = params["w1"].shape[2]
    Dout = params["fc_w"].shape[1]
    # LearnablePositionalEncoding(embed_dim=1) broadcast requires S == E.
    assert S == E, "seq_len must equal embed_dim for the (1, S) pe broadcast"
    M = B * S

    # ---- stage 1: embedding + positional encoding (single tiny call) ------
    x0 = pl.pallas_call(
        _embed_kernel,
        out_shape=jax.ShapeDtypeStruct((M, E), jnp.bfloat16),
    )(tgt.reshape(M, Din), params["emb_w"], params["emb_b"],
      params["pe"][:, :S])
    x0 = x0.reshape(B, S, E)

    mem_bf = memory.astype(jnp.bfloat16)            # halve resident memory tile

    const2 = lambda shape: pl.BlockSpec(shape, lambda b, l: (0, 0))
    batch3 = lambda shape: pl.BlockSpec(shape, lambda b, l: (b, 0, 0))
    layer3 = lambda shape: pl.BlockSpec(shape, lambda b, l: (l, 0, 0))

    kernel = functools.partial(_layers_kernel, H=nhead, eps=1e-5)

    out = pl.pallas_call(
        kernel,
        out_shape=jax.ShapeDtypeStruct((B, S, Dout), jnp.float32),
        grid=(B, L),
        in_specs=[
            batch3((1, S, E)),             # embedded x0 (read at layer 0)
            batch3((1, Smem, E)),          # memory
            layer3((1, E, 3 * E)),         # self-attn fused Wqkv (Q pre-scaled)
            layer3((1, 1, 3 * E)),         # self-attn fused bqkv
            layer3((1, E, E)),             # self-attn Wo
            layer3((1, 1, E)),             # self-attn bo
            layer3((1, E, E)),             # cross-attn Wq (pre-scaled)
            layer3((1, 1, E)),             # cross-attn bq
            layer3((1, E, 2 * E)),         # cross-attn fused Wkv
            layer3((1, 1, 2 * E)),         # cross-attn fused bkv
            layer3((1, E, E)),             # cross-attn Wo
            layer3((1, 1, E)),             # cross-attn bo
            layer3((1, E, F)),             # FFN W1
            layer3((1, 1, F)),             # FFN b1
            layer3((1, F, E)),             # FFN W2
            layer3((1, 1, E)),             # FFN b2
            layer3((1, 6, E)),             # LN params [g1,b1,g2,b2,g3,b3]
            const2((E, Dout)),             # fc_w
            const2((1, Dout)),             # fc_b
        ],
        out_specs=batch3((1, S, Dout)),
        scratch_shapes=[pltpu.VMEM((S, E), jnp.bfloat16)],   # bf16 carry
        compiler_params=pltpu.CompilerParams(
            # batch tiles are independent -> parallel (megacore on v7x);
            # layers carry state through the VMEM scratch -> arbitrary.
            dimension_semantics=("parallel", "arbitrary"),
            vmem_limit_bytes=48 * 1024 * 1024,
        ),
    )(
        x0, mem_bf,
        params["sa_wqkv"], params["sa_bqkv"], params["sa_wo"], params["sa_bo"],
        params["ca_wq"], params["ca_bq"], params["ca_wkv"], params["ca_bkv"],
        params["ca_wo"], params["ca_bo"],
        params["w1"], params["b1"], params["w2"], params["b2"], params["ln"],
        params["fc_w"], params["fc_b"],
    )
    return out


# ---------------------------------------------------------------------------
# One-time parameter preparation: bf16 weight storage, fold 1/sqrt(hd) into
# the Q projections (weights AND biases), reshape biases to 2-D.
# ---------------------------------------------------------------------------
def prepare_params(params, nhead):
    E = params["emb_w"].shape[1]
    hd = E // nhead
    scale = 1.0 / math.sqrt(hd)
    bf = lambda a: a.astype(jnp.bfloat16)

    sa_wqkv = params["sa_wqkv"].at[:, :, :E].multiply(scale)
    sa_bqkv = params["sa_bqkv"].at[:, :, :E].multiply(scale)
    ca_wq = params["ca_wq"] * scale
    ca_bq = params["ca_bq"] * scale

    return {
        "emb_w": bf(params["emb_w"]),
        "emb_b": params["emb_b"].reshape(1, E),
        "pe": params["pe"],
        "sa_wqkv": bf(sa_wqkv), "sa_bqkv": sa_bqkv,
        "sa_wo": bf(params["sa_wo"]), "sa_bo": params["sa_bo"],
        "ca_wq": bf(ca_wq), "ca_bq": ca_bq,
        "ca_wkv": bf(params["ca_wkv"]), "ca_bkv": params["ca_bkv"],
        "ca_wo": bf(params["ca_wo"]), "ca_bo": params["ca_bo"],
        "w1": bf(params["w1"]), "b1": params["b1"],
        "w2": bf(params["w2"]), "b2": params["b2"],
        "ln": params["ln"],
        "fc_w": bf(params["fc_w"]),
        "fc_b": params["fc_b"].reshape(1, -1),
    }


# ---------------------------------------------------------------------------
# Deterministic synthetic parameter init (PyTorch-Linear-style uniform)
# ---------------------------------------------------------------------------
def init_params(key, input_dim, embed_dim, nhead, num_layers, output_dim,
                dim_feedforward=128, max_len=5000):
    E, F = embed_dim, dim_feedforward

    def uniform(k, shape, fan_in):
        s = 1.0 / math.sqrt(fan_in)
        return jax.random.uniform(k, shape, jnp.float32, -s, s)

    keys = jax.random.split(key, 2 + num_layers)
    ke_w, ke_b = jax.random.split(keys[0])
    emb_w = uniform(ke_w, (input_dim, E), input_dim)
    emb_b = uniform(ke_b, (E,), input_dim)
    kf_w, kf_b = jax.random.split(keys[1])
    fc_w = uniform(kf_w, (E, output_dim), E)
    fc_b = uniform(kf_b, (output_dim,), E)

    names = ["sa_wqkv", "sa_bqkv", "sa_wo", "sa_bo",
             "ca_wq", "ca_bq", "ca_wkv", "ca_bkv", "ca_wo", "ca_bo",
             "w1", "b1", "w2", "b2", "ln"]
    stacks = {n: [] for n in names}
    ones = jnp.ones((E,), jnp.float32)
    zeros = jnp.zeros((E,), jnp.float32)
    ln_one = jnp.stack([ones, zeros, ones, zeros, ones, zeros])   # (6, E)

    for li in range(num_layers):
        ks = jax.random.split(keys[2 + li], 14)
        stacks["sa_wqkv"].append(uniform(ks[0], (E, 3 * E), E))
        stacks["sa_bqkv"].append(uniform(ks[1], (1, 3 * E), E))
        stacks["sa_wo"].append(uniform(ks[2], (E, E), E))
        stacks["sa_bo"].append(uniform(ks[3], (1, E), E))
        stacks["ca_wq"].append(uniform(ks[4], (E, E), E))
        stacks["ca_bq"].append(uniform(ks[5], (1, E), E))
        stacks["ca_wkv"].append(uniform(ks[6], (E, 2 * E), E))
        stacks["ca_bkv"].append(uniform(ks[7], (1, 2 * E), E))
        stacks["ca_wo"].append(uniform(ks[8], (E, E), E))
        stacks["ca_bo"].append(uniform(ks[9], (1, E), E))
        stacks["w1"].append(uniform(ks[10], (E, F), E))
        stacks["b1"].append(uniform(ks[11], (1, F), E))
        stacks["w2"].append(uniform(ks[12], (F, E), F))
        stacks["b2"].append(uniform(ks[13], (1, E), F))
        stacks["ln"].append(ln_one)

    params = {n: jnp.stack(v, axis=0) for n, v in stacks.items()}
    params.update(
        emb_w=emb_w, emb_b=emb_b,
        pe=jnp.zeros((1, max_len), jnp.float32),   # nn.Parameter(torch.zeros(1, max_len))
        fc_w=fc_w, fc_b=fc_b,
    )
    return params


# ---------------------------------------------------------------------------
if __name__ == "__main__":
    # Small shapes consistent with the module; seq_len == embed_dim so the
    # (1, S) positional-encoding broadcast is valid (as required by PyTorch).
    # NOTE: with E=16 / Dout=4 everything is a single masked (8,128) tile —
    # these shapes are a functional test, not a performance benchmark.
    B = 2
    input_dim = 4
    embed_dim = 16
    seq_len = 16          # must equal embed_dim for the pe broadcast
    mem_len = 8
    nhead = 4
    num_layers = 2
    output_dim = 4

    root = jax.random.PRNGKey(0)
    k_p, k_t, k_m = jax.random.split(root, 3)
    raw = init_params(k_p, input_dim, embed_dim, nhead, num_layers, output_dim)
    params = prepare_params(raw, nhead)           # one-time weight transform

    tgt = jax.random.normal(k_t, (B, seq_len, input_dim), jnp.float32)
    memory = jax.random.normal(k_m, (B, mem_len, embed_dim), jnp.float32)

    out = transformer_decoder_forward(tgt, memory, params, nhead)
    out = jax.block_until_ready(out)
    assert out.shape == (B, seq_len, output_dim), out.shape
    assert bool(jnp.all(jnp.isfinite(out)))
    print("KERNEL_OK")
</pallas_src>

<mosaic_0001>
module attributes {stable_mosaic.version = 11 : i64} {
  func.func @_embed_kernel(%arg0: memref<32x4xf32, #tpu.memory_space<vmem>>, %arg1: memref<4x16xbf16, #tpu.memory_space<vmem>>, %arg2: memref<1x16xf32, #tpu.memory_space<vmem>>, %arg3: memref<1x16xf32, #tpu.memory_space<vmem>>, %arg4: memref<32x16xbf16, #tpu.memory_space<vmem>>) attributes {dimension_semantics = [], scalar_prefetch = 0 : i64, scratch_operands = 0 : i64, tpu.core_type = #tpu.core_type<tc>} {
    %c0 = arith.constant 0 : index
    %c0_0 = arith.constant 0 : index
    %0 = vector.load %arg0[%c0, %c0_0] : memref<32x4xf32, #tpu.memory_space<vmem>>, vector<32x4xf32>
    %1 = arith.truncf %0 : vector<32x4xf32> to vector<32x4xbf16>
    %c0_1 = arith.constant 0 : index
    %c0_2 = arith.constant 0 : index
    %2 = vector.load %arg1[%c0_1, %c0_2] : memref<4x16xbf16, #tpu.memory_space<vmem>>, vector<4x16xbf16>
    %cst = arith.constant dense<0.000000e+00> : vector<32x16xf32>
    %3 = tpu.matmul %1, %2, %cst {dimension_numbers = #tpu.dot_dimension_numbers<[1], [0], [0], [1], [0, 0, 1, 1], [], []>} : vector<32x4xbf16>, vector<4x16xbf16>, vector<32x16xf32> -> vector<32x16xf32>
    %c0_3 = arith.constant 0 : index
    %c0_4 = arith.constant 0 : index
    %4 = vector.load %arg2[%c0_3, %c0_4] : memref<1x16xf32, #tpu.memory_space<vmem>>, vector<1x16xf32>
    %5 = vector.broadcast %4 : vector<1x16xf32> to vector<32x16xf32>
    %6 = arith.addf %3, %5 : vector<32x16xf32>
    %c0_5 = arith.constant 0 : index
    %c0_6 = arith.constant 0 : index
    %7 = vector.load %arg3[%c0_5, %c0_6] : memref<1x16xf32, #tpu.memory_space<vmem>>, vector<1x16xf32>
    %8 = vector.broadcast %7 : vector<1x16xf32> to vector<32x16xf32>
    %9 = arith.addf %6, %8 : vector<32x16xf32>
    %10 = arith.truncf %9 : vector<32x16xf32> to vector<32x16xbf16>
    %c0_7 = arith.constant 0 : index
    %c0_8 = arith.constant 0 : index
    %11 = vector.load %arg4[%c0_7, %c0_8] : memref<32x16xbf16, #tpu.memory_space<vmem>>, vector<32x16xbf16>
    tpu.vector_store %arg4[%c0_7, %c0_8], %10 {strides = array<i32>} : memref<32x16xbf16, #tpu.memory_space<vmem>>, vector<32x16xbf16>,
    return
  }
}

module attributes {stable_mosaic.version = 11 : i64} {
  func.func @_layers_kernel(%arg0: i32, %arg1: i32, %arg2: memref<1x16x16xbf16, #tpu.memory_space<vmem>>, %arg3: memref<1x8x16xbf16, #tpu.memory_space<vmem>>, %arg4: memref<1x16x48xbf16, #tpu.memory_space<vmem>>, %arg5: memref<1x1x48xf32, #tpu.memory_space<vmem>>, %arg6: memref<1x16x16xbf16, #tpu.memory_space<vmem>>, %arg7: memref<1x1x16xf32, #tpu.memory_space<vmem>>, %arg8: memref<1x16x16xbf16, #tpu.memory_space<vmem>>, %arg9: memref<1x1x16xf32, #tpu.memory_space<vmem>>, %arg10: memref<1x16x32xbf16, #tpu.memory_space<vmem>>, %arg11: memref<1x1x32xf32, #tpu.memory_space<vmem>>, %arg12: memref<1x16x16xbf16, #tpu.memory_space<vmem>>, %arg13: memref<1x1x16xf32, #tpu.memory_space<vmem>>, %arg14: memref<1x16x128xbf16, #tpu.memory_space<vmem>>, %arg15: memref<1x1x128xf32, #tpu.memory_space<vmem>>, %arg16: memref<1x128x16xbf16, #tpu.memory_space<vmem>>, %arg17: memref<1x1x16xf32, #tpu.memory_space<vmem>>, %arg18: memref<1x6x16xf32, #tpu.memory_space<vmem>>, %arg19: memref<16x4xbf16, #tpu.memory_space<vmem>>, %arg20: memref<1x4xf32, #tpu.memory_space<vmem>>, %arg21: memref<1x16x4xf32, #tpu.memory_space<vmem>>, %arg22: memref<16x16xbf16, #tpu.memory_space<vmem>>) attributes {dimension_semantics = [#tpu.dimension_semantics<parallel>, #tpu.dimension_semantics<arbitrary>], iteration_bounds = array<i64: 2, 2>, scalar_prefetch = 0 : i64, scratch_operands = 1 : i64, tpu.core_type = #tpu.core_type<tc>, window_params = [{transform_indices = @transform_0, window_bounds = array<i64: 1, 16, 16>}, {transform_indices = @transform_1, window_bounds = array<i64: 1, 8, 16>}, {transform_indices = @transform_2, window_bounds = array<i64: 1, 16, 48>}, {transform_indices = @transform_3, window_bounds = array<i64: 1, 1, 48>}, {transform_indices = @transform_4, window_bounds = array<i64: 1, 16, 16>}, {transform_indices = @transform_5, window_bounds = array<i64: 1, 1, 16>}, {transform_indices = @transform_6, window_bounds = array<i64: 1, 16, 16>}, {transform_indices = @transform_7, window_bounds = array<i64: 1, 1, 16>}, {transform_indices = @transform_8, window_bounds = array<i64: 1, 16, 32>}, {transform_indices = @transform_9, window_bounds = array<i64: 1, 1, 32>}, {transform_indices = @transform_10, window_bounds = array<i64: 1, 16, 16>}, {transform_indices = @transform_11, window_bounds = array<i64: 1, 1, 16>}, {transform_indices = @transform_12, window_bounds = array<i64: 1, 16, 128>}, {transform_indices = @transform_13, window_bounds = array<i64: 1, 1, 128>}, {transform_indices = @transform_14, window_bounds = array<i64: 1, 128, 16>}, {transform_indices = @transform_15, window_bounds = array<i64: 1, 1, 16>}, {transform_indices = @transform_16, window_bounds = array<i64: 1, 6, 16>}, {pipeline_mode = #tpu.pipeline_mode<synchronous>, transform_indices = @transform_17, window_bounds = array<i64: 16, 4>}, {pipeline_mode = #tpu.pipeline_mode<synchronous>, transform_indices = @transform_18, window_bounds = array<i64: 1, 4>}, {transform_indices = @transform_19, window_bounds = array<i64: 1, 16, 4>}]} {
    %c0_i32 = arith.constant 0 : i32
    %0 = arith.cmpi eq, %arg1, %c0_i32 : i32
    %1 = arith.extui %0 : i1 to i32
    %c0_i32_0 = arith.constant 0 : i32
    %2 = arith.cmpi ne, %1, %c0_i32_0 : i32
    scf.if %2 {
      %c0_113 = arith.constant 0 : index
      %c0_114 = arith.constant 0 : index
      %c0_115 = arith.constant 0 : index
      %328 = vector.load %arg2[%c0_113, %c0_114, %c0_115] : memref<1x16x16xbf16, #tpu.memory_space<vmem>>, vector<1x16x16xbf16>
      %329 = vector.shape_cast %328 : vector<1x16x16xbf16> to vector<16x16xbf16>
      %c0_116 = arith.constant 0 : index
      %c0_117 = arith.constant 0 : index
      %330 = vector.load %arg22[%c0_116, %c0_117] : memref<16x16xbf16, #tpu.memory_space<vmem>>, vector<16x16xbf16>
      tpu.vector_store %arg22[%c0_116, %c0_117], %329 {strides = array<i32>} : memref<16x16xbf16, #tpu.memory_space<vmem>>, vector<16x16xbf16>,
    } else {
    }
    %c0 = arith.constant 0 : index
    %c0_1 = arith.constant 0 : index
    %3 = vector.load %arg22[%c0, %c0_1] : memref<16x16xbf16, #tpu.memory_space<vmem>>, vector<16x16xbf16>
    %4 = arith.extf %3 : vector<16x16xbf16> to vector<16x16xf32>
    %c0_2 = arith.constant 0 : index
    %c0_3 = arith.constant 0 : index
    %c0_4 = arith.constant 0 : index
    %5 = vector.load %arg3[%c0_2, %c0_3, %c0_4] : memref<1x8x16xbf16, #tpu.memory_space<vmem>>, vector<1x8x16xbf16>
    %6 = vector.shape_cast %5 : vector<1x8x16xbf16> to vector<8x16xbf16>
    %c0_5 = arith.constant 0 : index
    %c0_6 = arith.constant 0 : index
    %c0_7 = arith.constant 0 : index
    %7 = vector.load %arg18[%c0_5, %c0_6, %c0_7] : memref<1x6x16xf32, #tpu.memory_space<vmem>>, vector<1x6x16xf32>
    %8 = vector.shape_cast %7 : vector<1x6x16xf32> to vector<6x16xf32>
    %c0_8 = arith.constant 0 : index
    %c0_9 = arith.constant 0 : index
    %c0_10 = arith.constant 0 : index
    %9 = vector.load %arg4[%c0_8, %c0_9, %c0_10] : memref<1x16x48xbf16, #tpu.memory_space<vmem>>, vector<1x16x48xbf16>
    %10 = vector.shape_cast %9 : vector<1x16x48xbf16> to vector<16x48xbf16>
    %cst = arith.constant dense<0.000000e+00> : vector<16x48xf32>
    %11 = tpu.matmul %3, %10, %cst {dimension_numbers = #tpu.dot_dimension_numbers<[1], [0], [0], [1], [0, 0, 1, 1], [], []>} : vector<16x16xbf16>, vector<16x48xbf16>, vector<16x48xf32> -> vector<16x48xf32>
    %c0_11 = arith.constant 0 : index
    %c0_12 = arith.constant 0 : index
    %c0_13 = arith.constant 0 : index
    %12 = vector.load %arg5[%c0_11, %c0_12, %c0_13] : memref<1x1x48xf32, #tpu.memory_space<vmem>>, vector<1x1x48xf32>
    %13 = vector.shape_cast %12 : vector<1x1x48xf32> to vector<1x48xf32>
    %14 = vector.broadcast %13 : vector<1x48xf32> to vector<16x48xf32>
    %15 = arith.addf %11, %14 : vector<16x48xf32>
    %16 = vector.extract_strided_slice %15 {offsets = [0, 0], sizes = [16, 16], strides = [1, 1]} : vector<16x48xf32> to vector<16x16xf32>
    %17 = vector.extract_strided_slice %15 {offsets = [0, 16], sizes = [16, 16], strides = [1, 1]} : vector<16x48xf32> to vector<16x16xf32>
    %18 = vector.extract_strided_slice %15 {offsets = [0, 32], sizes = [16, 16], strides = [1, 1]} : vector<16x48xf32> to vector<16x16xf32>
    %c0_14 = arith.constant 0 : index
    %c0_15 = arith.constant 0 : index
    %c0_16 = arith.constant 0 : index
    %19 = vector.load %arg6[%c0_14, %c0_15, %c0_16] : memref<1x16x16xbf16, #tpu.memory_space<vmem>>, vector<1x16x16xbf16>
    %20 = vector.shape_cast %19 : vector<1x16x16xbf16> to vector<16x16xbf16>
    %21 = vector.extract_strided_slice %16 {offsets = [0, 0], sizes = [16, 4], strides = [1, 1]} : vector<16x16xf32> to vector<16x4xf32>
    %22 = arith.truncf %21 : vector<16x4xf32> to vector<16x4xbf16>
    %23 = vector.extract_strided_slice %17 {offsets = [0, 0], sizes = [16, 4], strides = [1, 1]} : vector<16x16xf32> to vector<16x4xf32>
    %24 = arith.truncf %23 : vector<16x4xf32> to vector<16x4xbf16>
    %25 = vector.extract_strided_slice %18 {offsets = [0, 0], sizes = [16, 4], strides = [1, 1]} : vector<16x16xf32> to vector<16x4xf32>
    %26 = arith.truncf %25 : vector<16x4xf32> to vector<16x4xbf16>
    "tpu.trace_start"() <{level = 10 : i32, message = "qd,kd->qk"}> : () -> ()
    %cst_17 = arith.constant dense<0.000000e+00> : vector<16x16xf32>
    %27 = tpu.matmul %22, %24, %cst_17 {dimension_numbers = #tpu.dot_dimension_numbers<[1], [1], [0], [0], [0, 0, 1, 0], [], []>} : vector<16x4xbf16>, vector<16x4xbf16>, vector<16x16xf32> -> vector<16x16xf32>
    "tpu.trace_stop"() : () -> ()
    %cst_18 = arith.constant dense<0xFF800000> : vector<16xf32>
    %28 = vector.multi_reduction <maximumf>, %27, %cst_18 [1] : vector<16x16xf32> to vector<16xf32>
    %29 = vector.shape_cast %28 : vector<16xf32> to vector<16x1xf32>
    %30 = vector.broadcast %29 : vector<16x1xf32> to vector<16x16xf32>
    %31 = arith.subf %27, %30 : vector<16x16xf32>
    %32 = math.exp %31 : vector<16x16xf32>
    %cst_19 = arith.constant dense<0.000000e+00> : vector<16xf32>
    %33 = vector.multi_reduction <add>, %32, %cst_19 [1] : vector<16x16xf32> to vector<16xf32>
    %34 = vector.shape_cast %33 : vector<16xf32> to vector<16x1xf32>
    %35 = tpu.reciprocal %34 {approx = true} : vector<16x1xf32> -> vector<16x1xf32>
    %36 = vector.broadcast %35 : vector<16x1xf32> to vector<16x16xf32>
    %37 = arith.mulf %32, %36 : vector<16x16xf32>
    %38 = arith.truncf %37 : vector<16x16xf32> to vector<16x16xbf16>
    "tpu.trace_start"() <{level = 10 : i32, message = "qk,kd->qd"}> : () -> ()
    %cst_20 = arith.constant dense<0.000000e+00> : vector<16x4xf32>
    %39 = tpu.matmul %38, %26, %cst_20 {dimension_numbers = #tpu.dot_dimension_numbers<[1], [0], [0], [1], [0, 0, 1, 1], [], []>} : vector<16x16xbf16>, vector<16x4xbf16>, vector<16x4xf32> -> vector<16x4xf32>
    "tpu.trace_stop"() : () -> ()
    %40 = arith.truncf %39 : vector<16x4xf32> to vector<16x4xbf16>
    %41 = vector.extract_strided_slice %20 {offsets = [0, 0], sizes = [4, 16], strides = [1, 1]} : vector<16x16xbf16> to vector<4x16xbf16>
    %cst_21 = arith.constant dense<0.000000e+00> : vector<16x16xf32>
    %42 = tpu.matmul %40, %41, %cst_21 {dimension_numbers = #tpu.dot_dimension_numbers<[1], [0], [0], [1], [0, 0, 1, 1], [], []>} : vector<16x4xbf16>, vector<4x16xbf16>, vector<16x16xf32> -> vector<16x16xf32>
    %43 = vector.extract_strided_slice %16 {offsets = [0, 4], sizes = [16, 4], strides = [1, 1]} : vector<16x16xf32> to vector<16x4xf32>
    %44 = arith.truncf %43 : vector<16x4xf32> to vector<16x4xbf16>
    %45 = vector.extract_strided_slice %17 {offsets = [0, 4], sizes = [16, 4], strides = [1, 1]} : vector<16x16xf32> to vector<16x4xf32>
    %46 = arith.truncf %45 : vector<16x4xf32> to vector<16x4xbf16>
    %47 = vector.extract_strided_slice %18 {offsets = [0, 4], sizes = [16, 4], strides = [1, 1]} : vector<16x16xf32> to vector<16x4xf32>
    %48 = arith.truncf %47 : vector<16x4xf32> to vector<16x4xbf16>
    "tpu.trace_start"() <{level = 10 : i32, message = "qd,kd->qk"}> : () -> ()
    %cst_22 = arith.constant dense<0.000000e+00> : vector<16x16xf32>
    %49 = tpu.matmul %44, %46, %cst_22 {dimension_numbers = #tpu.dot_dimension_numbers<[1], [1], [0], [0], [0, 0, 1, 0], [], []>} : vector<16x4xbf16>, vector<16x4xbf16>, vector<16x16xf32> -> vector<16x16xf32>
    "tpu.trace_stop"() : () -> ()
    %cst_23 = arith.constant dense<0xFF800000> : vector<16xf32>
    %50 = vector.multi_reduction <maximumf>, %49, %cst_23 [1] : vector<16x16xf32> to vector<16xf32>
    %51 = vector.shape_cast %50 : vector<16xf32> to vector<16x1xf32>
    %52 = vector.broadcast %51 : vector<16x1xf32> to vector<16x16xf32>
    %53 = arith.subf %49, %52 : vector<16x16xf32>
    %54 = math.exp %53 : vector<16x16xf32>
    %cst_24 = arith.constant dense<0.000000e+00> : vector<16xf32>
    %55 = vector.multi_reduction <add>, %54, %cst_24 [1] : vector<16x16xf32> to vector<16xf32>
    %56 = vector.shape_cast %55 : vector<16xf32> to vector<16x1xf32>
    %57 = tpu.reciprocal %56 {approx = true} : vector<16x1xf32> -> vector<16x1xf32>
    %58 = vector.broadcast %57 : vector<16x1xf32> to vector<16x16xf32>
    %59 = arith.mulf %54, %58 : vector<16x16xf32>
    %60 = arith.truncf %59 : vector<16x16xf32> to vector<16x16xbf16>
    "tpu.trace_start"() <{level = 10 : i32, message = "qk,kd->qd"}> : () -> ()
    %cst_25 = arith.constant dense<0.000000e+00> : vector<16x4xf32>
    %61 = tpu.matmul %60, %48, %cst_25 {dimension_numbers = #tpu.dot_dimension_numbers<[1], [0], [0], [1], [0, 0, 1, 1], [], []>} : vector<16x16xbf16>, vector<16x4xbf16>, vector<16x4xf32> -> vector<16x4xf32>
    "tpu.trace_stop"() : () -> ()
    %62 = arith.truncf %61 : vector<16x4xf32> to vector<16x4xbf16>
    %63 = vector.extract_strided_slice %20 {offsets = [4, 0], sizes = [4, 16], strides = [1, 1]} : vector<16x16xbf16> to vector<4x16xbf16>
    %cst_26 = arith.constant dense<0.000000e+00> : vector<16x16xf32>
    %64 = tpu.matmul %62, %63, %cst_26 {dimension_numbers = #tpu.dot_dimension_numbers<[1], [0], [0], [1], [0, 0, 1, 1], [], []>} : vector<16x4xbf16>, vector<4x16xbf16>, vector<16x16xf32> -> vector<16x16xf32>
    %65 = arith.addf %42, %64 : vector<16x16xf32>
    %66 = vector.extract_strided_slice %16 {offsets = [0, 8], sizes = [16, 4], strides = [1, 1]} : vector<16x16xf32> to vector<16x4xf32>
    %67 = arith.truncf %66 : vector<16x4xf32> to vector<16x4xbf16>
    %68 = vector.extract_strided_slice %17 {offsets = [0, 8], sizes = [16, 4], strides = [1, 1]} : vector<16x16xf32> to vector<16x4xf32>
    %69 = arith.truncf %68 : vector<16x4xf32> to vector<16x4xbf16>
    %70 = vector.extract_strided_slice %18 {offsets = [0, 8], sizes = [16, 4], strides = [1, 1]} : vector<16x16xf32> to vector<16x4xf32>
    %71 = arith.truncf %70 : vector<16x4xf32> to vector<16x4xbf16>
    "tpu.trace_start"() <{level = 10 : i32, message = "qd,kd->qk"}> : () -> ()
    %cst_27 = arith.constant dense<0.000000e+00> : vector<16x16xf32>
    %72 = tpu.matmul %67, %69, %cst_27 {dimension_numbers = #tpu.dot_dimension_numbers<[1], [1], [0], [0], [0, 0, 1, 0], [], []>} : vector<16x4xbf16>, vector<16x4xbf16>, vector<16x16xf32> -> vector<16x16xf32>
    "tpu.trace_stop"() : () -> ()
    %cst_28 = arith.constant dense<0xFF800000> : vector<16xf32>
    %73 = vector.multi_reduction <maximumf>, %72, %cst_28 [1] : vector<16x16xf32> to vector<16xf32>
    %74 = vector.shape_cast %73 : vector<16xf32> to vector<16x1xf32>
    %75 = vector.broadcast %74 : vector<16x1xf32> to vector<16x16xf32>
    %76 = arith.subf %72, %75 : vector<16x16xf32>
    %77 = math.exp %76 : vector<16x16xf32>
    %cst_29 = arith.constant dense<0.000000e+00> : vector<16xf32>
    %78 = vector.multi_reduction <add>, %77, %cst_29 [1] : vector<16x16xf32> to vector<16xf32>
    %79 = vector.shape_cast %78 : vector<16xf32> to vector<16x1xf32>
    %80 = tpu.reciprocal %79 {approx = true} : vector<16x1xf32> -> vector<16x1xf32>
    %81 = vector.broadcast %80 : vector<16x1xf32> to vector<16x16xf32>
    %82 = arith.mulf %77, %81 : vector<16x16xf32>
    %83 = arith.truncf %82 : vector<16x16xf32> to vector<16x16xbf16>
    "tpu.trace_start"() <{level = 10 : i32, message = "qk,kd->qd"}> : () -> ()
    %cst_30 = arith.constant dense<0.000000e+00> : vector<16x4xf32>
    %84 = tpu.matmul %83, %71, %cst_30 {dimension_numbers = #tpu.dot_dimension_numbers<[1], [0], [0], [1], [0, 0, 1, 1], [], []>} : vector<16x16xbf16>, vector<16x4xbf16>, vector<16x4xf32> -> vector<16x4xf32>
    "tpu.trace_stop"() : () -> ()
    %85 = arith.truncf %84 : vector<16x4xf32> to vector<16x4xbf16>
    %86 = vector.extract_strided_slice %20 {offsets = [8, 0], sizes = [4, 16], strides = [1, 1]} : vector<16x16xbf16> to vector<4x16xbf16>
    %cst_31 = arith.constant dense<0.000000e+00> : vector<16x16xf32>
    %87 = tpu.matmul %85, %86, %cst_31 {dimension_numbers = #tpu.dot_dimension_numbers<[1], [0], [0], [1], [0, 0, 1, 1], [], []>} : vector<16x4xbf16>, vector<4x16xbf16>, vector<16x16xf32> -> vector<16x16xf32>
    %88 = arith.addf %65, %87 : vector<16x16xf32>
    %89 = vector.extract_strided_slice %16 {offsets = [0, 12], sizes = [16, 4], strides = [1, 1]} : vector<16x16xf32> to vector<16x4xf32>
    %90 = arith.truncf %89 : vector<16x4xf32> to vector<16x4xbf16>
    %91 = vector.extract_strided_slice %17 {offsets = [0, 12], sizes = [16, 4], strides = [1, 1]} : vector<16x16xf32> to vector<16x4xf32>
    %92 = arith.truncf %91 : vector<16x4xf32> to vector<16x4xbf16>
    %93 = vector.extract_strided_slice %18 {offsets = [0, 12], sizes = [16, 4], strides = [1, 1]} : vector<16x16xf32> to vector<16x4xf32>
    %94 = arith.truncf %93 : vector<16x4xf32> to vector<16x4xbf16>
    "tpu.trace_start"() <{level = 10 : i32, message = "qd,kd->qk"}> : () -> ()
    %cst_32 = arith.constant dense<0.000000e+00> : vector<16x16xf32>
    %95 = tpu.matmul %90, %92, %cst_32 {dimension_numbers = #tpu.dot_dimension_numbers<[1], [1], [0], [0], [0, 0, 1, 0], [], []>} : vector<16x4xbf16>, vector<16x4xbf16>, vector<16x16xf32> -> vector<16x16xf32>
    "tpu.trace_stop"() : () -> ()
    %cst_33 = arith.constant dense<0xFF800000> : vector<16xf32>
    %96 = vector.multi_reduction <maximumf>, %95, %cst_33 [1] : vector<16x16xf32> to vector<16xf32>
    %97 = vector.shape_cast %96 : vector<16xf32> to vector<16x1xf32>
    %98 = vector.broadcast %97 : vector<16x1xf32> to vector<16x16xf32>
    %99 = arith.subf %95, %98 : vector<16x16xf32>
    %100 = math.exp %99 : vector<16x16xf32>
    %cst_34 = arith.constant dense<0.000000e+00> : vector<16xf32>
    %101 = vector.multi_reduction <add>, %100, %cst_34 [1] : vector<16x16xf32> to vector<16xf32>
    %102 = vector.shape_cast %101 : vector<16xf32> to vector<16x1xf32>
    %103 = tpu.reciprocal %102 {approx = true} : vector<16x1xf32> -> vector<16x1xf32>
    %104 = vector.broadcast %103 : vector<16x1xf32> to vector<16x16xf32>
    %105 = arith.mulf %100, %104 : vector<16x16xf32>
    %106 = arith.truncf %105 : vector<16x16xf32> to vector<16x16xbf16>
    "tpu.trace_start"() <{level = 10 : i32, message = "qk,kd->qd"}> : () -> ()
    %cst_35 = arith.constant dense<0.000000e+00> : vector<16x4xf32>
    %107 = tpu.matmul %106, %94, %cst_35 {dimension_numbers = #tpu.dot_dimension_numbers<[1], [0], [0], [1], [0, 0, 1, 1], [], []>} : vector<16x16xbf16>, vector<16x4xbf16>, vector<16x4xf32> -> vector<16x4xf32>
    "tpu.trace_stop"() : () -> ()
    %108 = arith.truncf %107 : vector<16x4xf32> to vector<16x4xbf16>
    %109 = vector.extract_strided_slice %20 {offsets = [12, 0], sizes = [4, 16], strides = [1, 1]} : vector<16x16xbf16> to vector<4x16xbf16>
    %cst_36 = arith.constant dense<0.000000e+00> : vector<16x16xf32>
    %110 = tpu.matmul %108, %109, %cst_36 {dimension_numbers = #tpu.dot_dimension_numbers<[1], [0], [0], [1], [0, 0, 1, 1], [], []>} : vector<16x4xbf16>, vector<4x16xbf16>, vector<16x16xf32> -> vector<16x16xf32>
    %111 = arith.addf %88, %110 : vector<16x16xf32>
    %c0_37 = arith.constant 0 : index
    %c0_38 = arith.constant 0 : index
    %c0_39 = arith.constant 0 : index
    %112 = vector.load %arg7[%c0_37, %c0_38, %c0_39] : memref<1x1x16xf32, #tpu.memory_space<vmem>>, vector<1x1x16xf32>
    %113 = vector.shape_cast %112 : vector<1x1x16xf32> to vector<1x16xf32>
    %114 = vector.broadcast %113 : vector<1x16xf32> to vector<16x16xf32>
    %115 = arith.addf %111, %114 : vector<16x16xf32>
    %116 = vector.extract_strided_slice %8 {offsets = [0, 0], sizes = [1, 16], strides = [1, 1]} : vector<6x16xf32> to vector<1x16xf32>
    %117 = vector.extract_strided_slice %8 {offsets = [1, 0], sizes = [1, 16], strides = [1, 1]} : vector<6x16xf32> to vector<1x16xf32>
    %118 = arith.addf %4, %115 : vector<16x16xf32>
    %cst_40 = arith.constant dense<0.000000e+00> : vector<16xf32>
    %119 = vector.multi_reduction <add>, %118, %cst_40 [1] : vector<16x16xf32> to vector<16xf32>
    %120 = vector.shape_cast %119 : vector<16xf32> to vector<16x1xf32>
    %cst_41 = arith.constant 1.600000e+01 : f32
    %121 = vector.broadcast %cst_41 : f32 to vector<16x1xf32>
    %122 = arith.divf %120, %121 : vector<16x1xf32>
    %123 = vector.broadcast %122 : vector<16x1xf32> to vector<16x16xf32>
    %124 = arith.subf %118, %123 : vector<16x16xf32>
    %125 = arith.mulf %124, %124 : vector<16x16xf32>
    %cst_42 = arith.constant dense<0.000000e+00> : vector<16xf32>
    %126 = vector.multi_reduction <add>, %125, %cst_42 [1] : vector<16x16xf32> to vector<16xf32>
    %127 = vector.shape_cast %126 : vector<16xf32> to vector<16x1xf32>
    %cst_43 = arith.constant 1.600000e+01 : f32
    %128 = vector.broadcast %cst_43 : f32 to vector<16x1xf32>
    %129 = arith.divf %127, %128 : vector<16x1xf32>
    %130 = vector.broadcast %122 : vector<16x1xf32> to vector<16x16xf32>
    %131 = arith.subf %118, %130 : vector<16x16xf32>
    %cst_44 = arith.constant 9.99999974E-6 : f32
    %132 = vector.broadcast %cst_44 : f32 to vector<16x1xf32>
    %133 = arith.addf %129, %132 : vector<16x1xf32>
    %134 = math.rsqrt %133 : vector<16x1xf32>
    %135 = vector.broadcast %134 : vector<16x1xf32> to vector<16x16xf32>
    %136 = arith.mulf %131, %135 : vector<16x16xf32>
    %137 = vector.broadcast %116 : vector<1x16xf32> to vector<16x16xf32>
    %138 = arith.mulf %136, %137 : vector<16x16xf32>
    %139 = vector.broadcast %117 : vector<1x16xf32> to vector<16x16xf32>
    %140 = arith.addf %138, %139 : vector<16x16xf32>
    %141 = arith.truncf %140 : vector<16x16xf32> to vector<16x16xbf16>
    %c0_45 = arith.constant 0 : index
    %c0_46 = arith.constant 0 : index
    %c0_47 = arith.constant 0 : index
    %142 = vector.load %arg8[%c0_45, %c0_46, %c0_47] : memref<1x16x16xbf16, #tpu.memory_space<vmem>>, vector<1x16x16xbf16>
    %143 = vector.shape_cast %142 : vector<1x16x16xbf16> to vector<16x16xbf16>
    %cst_48 = arith.constant dense<0.000000e+00> : vector<16x16xf32>
    %144 = tpu.matmul %141, %143, %cst_48 {dimension_numbers = #tpu.dot_dimension_numbers<[1], [0], [0], [1], [0, 0, 1, 1], [], []>} : vector<16x16xbf16>, vector<16x16xbf16>, vector<16x16xf32> -> vector<16x16xf32>
    %c0_49 = arith.constant 0 : index
    %c0_50 = arith.constant 0 : index
    %c0_51 = arith.constant 0 : index
    %145 = vector.load %arg9[%c0_49, %c0_50, %c0_51] : memref<1x1x16xf32, #tpu.memory_space<vmem>>, vector<1x1x16xf32>
    %146 = vector.shape_cast %145 : vector<1x1x16xf32> to vector<1x16xf32>
    %147 = vector.broadcast %146 : vector<1x16xf32> to vector<16x16xf32>
    %148 = arith.addf %144, %147 : vector<16x16xf32>
    %c0_52 = arith.constant 0 : index
    %c0_53 = arith.constant 0 : index
    %c0_54 = arith.constant 0 : index
    %149 = vector.load %arg10[%c0_52, %c0_53, %c0_54] : memref<1x16x32xbf16, #tpu.memory_space<vmem>>, vector<1x16x32xbf16>
    %150 = vector.shape_cast %149 : vector<1x16x32xbf16> to vector<16x32xbf16>
    %cst_55 = arith.constant dense<0.000000e+00> : vector<8x32xf32>
    %151 = tpu.matmul %6, %150, %cst_55 {dimension_numbers = #tpu.dot_dimension_numbers<[1], [0], [0], [1], [0, 0, 1, 1], [], []>} : vector<8x16xbf16>, vector<16x32xbf16>, vector<8x32xf32> -> vector<8x32xf32>
    %c0_56 = arith.constant 0 : index
    %c0_57 = arith.constant 0 : index
    %c0_58 = arith.constant 0 : index
    %152 = vector.load %arg11[%c0_56, %c0_57, %c0_58] : memref<1x1x32xf32, #tpu.memory_space<vmem>>, vector<1x1x32xf32>
    %153 = vector.shape_cast %152 : vector<1x1x32xf32> to vector<1x32xf32>
    %154 = vector.broadcast %153 : vector<1x32xf32> to vector<8x32xf32>
    %155 = arith.addf %151, %154 : vector<8x32xf32>
    %156 = vector.extract_strided_slice %155 {offsets = [0, 0], sizes = [8, 16], strides = [1, 1]} : vector<8x32xf32> to vector<8x16xf32>
    %157 = vector.extract_strided_slice %155 {offsets = [0, 16], sizes = [8, 16], strides = [1, 1]} : vector<8x32xf32> to vector<8x16xf32>
    %c0_59 = arith.constant 0 : index
    %c0_60 = arith.constant 0 : index
    %c0_61 = arith.constant 0 : index
    %158 = vector.load %arg12[%c0_59, %c0_60, %c0_61] : memref<1x16x16xbf16, #tpu.memory_space<vmem>>, vector<1x16x16xbf16>
    %159 = vector.shape_cast %158 : vector<1x16x16xbf16> to vector<16x16xbf16>
    %160 = vector.extract_strided_slice %148 {offsets = [0, 0], sizes = [16, 4], strides = [1, 1]} : vector<16x16xf32> to vector<16x4xf32>
    %161 = arith.truncf %160 : vector<16x4xf32> to vector<16x4xbf16>
    %162 = vector.extract_strided_slice %156 {offsets = [0, 0], sizes = [8, 4], strides = [1, 1]} : vector<8x16xf32> to vector<8x4xf32>
    %163 = arith.truncf %162 : vector<8x4xf32> to vector<8x4xbf16>
    %164 = vector.extract_strided_slice %157 {offsets = [0, 0], sizes = [8, 4], strides = [1, 1]} : vector<8x16xf32> to vector<8x4xf32>
    %165 = arith.truncf %164 : vector<8x4xf32> to vector<8x4xbf16>
    "tpu.trace_start"() <{level = 10 : i32, message = "qd,kd->qk"}> : () -> ()
    %cst_62 = arith.constant dense<0.000000e+00> : vector<16x8xf32>
    %166 = tpu.matmul %161, %163, %cst_62 {dimension_numbers = #tpu.dot_dimension_numbers<[1], [1], [0], [0], [0, 0, 1, 0], [], []>} : vector<16x4xbf16>, vector<8x4xbf16>, vector<16x8xf32> -> vector<16x8xf32>
    "tpu.trace_stop"() : () -> ()
    %cst_63 = arith.constant dense<0xFF800000> : vector<16xf32>
    %167 = vector.multi_reduction <maximumf>, %166, %cst_63 [1] : vector<16x8xf32> to vector<16xf32>
    %168 = vector.shape_cast %167 : vector<16xf32> to vector<16x1xf32>
    %169 = vector.broadcast %168 : vector<16x1xf32> to vector<16x8xf32>
    %170 = arith.subf %166, %169 : vector<16x8xf32>
    %171 = math.exp %170 : vector<16x8xf32>
    %cst_64 = arith.constant dense<0.000000e+00> : vector<16xf32>
    %172 = vector.multi_reduction <add>, %171, %cst_64 [1] : vector<16x8xf32> to vector<16xf32>
    %173 = vector.shape_cast %172 : vector<16xf32> to vector<16x1xf32>
    %174 = tpu.reciprocal %173 {approx = true} : vector<16x1xf32> -> vector<16x1xf32>
    %175 = vector.broadcast %174 : vector<16x1xf32> to vector<16x8xf32>
    %176 = arith.mulf %171, %175 : vector<16x8xf32>
    %177 = arith.truncf %176 : vector<16x8xf32> to vector<16x8xbf16>
    "tpu.trace_start"() <{level = 10 : i32, message = "qk,kd->qd"}> : () -> ()
    %cst_65 = arith.constant dense<0.000000e+00> : vector<16x4xf32>
    %178 = tpu.matmul %177, %165, %cst_65 {dimension_numbers = #tpu.dot_dimension_numbers<[1], [0], [0], [1], [0, 0, 1, 1], [], []>} : vector<16x8xbf16>, vector<8x4xbf16>, vector<16x4xf32> -> vector<16x4xf32>
    "tpu.trace_stop"() : () -> ()
    %179 = arith.truncf %178 : vector<16x4xf32> to vector<16x4xbf16>
    %180 = vector.extract_strided_slice %159 {offsets = [0, 0], sizes = [4, 16], strides = [1, 1]} : vector<16x16xbf16> to vector<4x16xbf16>
    %cst_66 = arith.constant dense<0.000000e+00> : vector<16x16xf32>
    %181 = tpu.matmul %179, %180, %cst_66 {dimension_numbers = #tpu.dot_dimension_numbers<[1], [0], [0], [1], [0, 0, 1, 1], [], []>} : vector<16x4xbf16>, vector<4x16xbf16>, vector<16x16xf32> -> vector<16x16xf32>
    %182 = vector.extract_strided_slice %148 {offsets = [0, 4], sizes = [16, 4], strides = [1, 1]} : vector<16x16xf32> to vector<16x4xf32>
    %183 = arith.truncf %182 : vector<16x4xf32> to vector<16x4xbf16>
    %184 = vector.extract_strided_slice %156 {offsets = [0, 4], sizes = [8, 4], strides = [1, 1]} : vector<8x16xf32> to vector<8x4xf32>
    %185 = arith.truncf %184 : vector<8x4xf32> to vector<8x4xbf16>
    %186 = vector.extract_strided_slice %157 {offsets = [0, 4], sizes = [8, 4], strides = [1, 1]} : vector<8x16xf32> to vector<8x4xf32>
    %187 = arith.truncf %186 : vector<8x4xf32> to vector<8x4xbf16>
    "tpu.trace_start"() <{level = 10 : i32, message = "qd,kd->qk"}> : () -> ()
    %cst_67 = arith.constant dense<0.000000e+00> : vector<16x8xf32>
    %188 = tpu.matmul %183, %185, %cst_67 {dimension_numbers = #tpu.dot_dimension_numbers<[1], [1], [0], [0], [0, 0, 1, 0], [], []>} : vector<16x4xbf16>, vector<8x4xbf16>, vector<16x8xf32> -> vector<16x8xf32>
    "tpu.trace_stop"() : () -> ()
    %cst_68 = arith.constant dense<0xFF800000> : vector<16xf32>
    %189 = vector.multi_reduction <maximumf>, %188, %cst_68 [1] : vector<16x8xf32> to vector<16xf32>
    %190 = vector.shape_cast %189 : vector<16xf32> to vector<16x1xf32>
    %191 = vector.broadcast %190 : vector<16x1xf32> to vector<16x8xf32>
    %192 = arith.subf %188, %191 : vector<16x8xf32>
    %193 = math.exp %192 : vector<16x8xf32>
    %cst_69 = arith.constant dense<0.000000e+00> : vector<16xf32>
    %194 = vector.multi_reduction <add>, %193, %cst_69 [1] : vector<16x8xf32> to vector<16xf32>
    %195 = vector.shape_cast %194 : vector<16xf32> to vector<16x1xf32>
    %196 = tpu.reciprocal %195 {approx = true} : vector<16x1xf32> -> vector<16x1xf32>
    %197 = vector.broadcast %196 : vector<16x1xf32> to vector<16x8xf32>
    %198 = arith.mulf %193, %197 : vector<16x8xf32>
    %199 = arith.truncf %198 : vector<16x8xf32> to vector<16x8xbf16>
    "tpu.trace_start"() <{level = 10 : i32, message = "qk,kd->qd"}> : () -> ()
    %cst_70 = arith.constant dense<0.000000e+00> : vector<16x4xf32>
    %200 = tpu.matmul %199, %187, %cst_70 {dimension_numbers = #tpu.dot_dimension_numbers<[1], [0], [0], [1], [0, 0, 1, 1], [], []>} : vector<16x8xbf16>, vector<8x4xbf16>, vector<16x4xf32> -> vector<16x4xf32>
    "tpu.trace_stop"() : () -> ()
    %201 = arith.truncf %200 : vector<16x4xf32> to vector<16x4xbf16>
    %202 = vector.extract_strided_slice %159 {offsets = [4, 0], sizes = [4, 16], strides = [1, 1]} : vector<16x16xbf16> to vector<4x16xbf16>
    %cst_71 = arith.constant dense<0.000000e+00> : vector<16x16xf32>
    %203 = tpu.matmul %201, %202, %cst_71 {dimension_numbers = #tpu.dot_dimension_numbers<[1], [0], [0], [1], [0, 0, 1, 1], [], []>} : vector<16x4xbf16>, vector<4x16xbf16>, vector<16x16xf32> -> vector<16x16xf32>
    %204 = arith.addf %181, %203 : vector<16x16xf32>
    %205 = vector.extract_strided_slice %148 {offsets = [0, 8], sizes = [16, 4], strides = [1, 1]} : vector<16x16xf32> to vector<16x4xf32>
    %206 = arith.truncf %205 : vector<16x4xf32> to vector<16x4xbf16>
    %207 = vector.extract_strided_slice %156 {offsets = [0, 8], sizes = [8, 4], strides = [1, 1]} : vector<8x16xf32> to vector<8x4xf32>
    %208 = arith.truncf %207 : vector<8x4xf32> to vector<8x4xbf16>
    %209 = vector.extract_strided_slice %157 {offsets = [0, 8], sizes = [8, 4], strides = [1, 1]} : vector<8x16xf32> to vector<8x4xf32>
    %210 = arith.truncf %209 : vector<8x4xf32> to vector<8x4xbf16>
    "tpu.trace_start"() <{level = 10 : i32, message = "qd,kd->qk"}> : () -> ()
    %cst_72 = arith.constant dense<0.000000e+00> : vector<16x8xf32>
    %211 = tpu.matmul %206, %208, %cst_72 {dimension_numbers = #tpu.dot_dimension_numbers<[1], [1], [0], [0], [0, 0, 1, 0], [], []>} : vector<16x4xbf16>, vector<8x4xbf16>, vector<16x8xf32> -> vector<16x8xf32>
    "tpu.trace_stop"() : () -> ()
    %cst_73 = arith.constant dense<0xFF800000> : vector<16xf32>
    %212 = vector.multi_reduction <maximumf>, %211, %cst_73 [1] : vector<16x8xf32> to vector<16xf32>
    %213 = vector.shape_cast %212 : vector<16xf32> to vector<16x1xf32>
    %214 = vector.broadcast %213 : vector<16x1xf32> to vector<16x8xf32>
    %215 = arith.subf %211, %214 : vector<16x8xf32>
    %216 = math.exp %215 : vector<16x8xf32>
    %cst_74 = arith.constant dense<0.000000e+00> : vector<16xf32>
    %217 = vector.multi_reduction <add>, %216, %cst_74 [1] : vector<16x8xf32> to vector<16xf32>
    %218 = vector.shape_cast %217 : vector<16xf32> to vector<16x1xf32>
    %219 = tpu.reciprocal %218 {approx = true} : vector<16x1xf32> -> vector<16x1xf32>
    %220 = vector.broadcast %219 : vector<16x1xf32> to vector<16x8xf32>
    %221 = arith.mulf %216, %220 : vector<16x8xf32>
    %222 = arith.truncf %221 : vector<16x8xf32> to vector<16x8xbf16>
    "tpu.trace_start"() <{level = 10 : i32, message = "qk,kd->qd"}> : () -> ()
    %cst_75 = arith.constant dense<0.000000e+00> : vector<16x4xf32>
    %223 = tpu.matmul %222, %210, %cst_75 {dimension_numbers = #tpu.dot_dimension_numbers<[1], [0], [0], [1], [0, 0, 1, 1], [], []>} : vector<16x8xbf16>, vector<8x4xbf16>, vector<16x4xf32> -> vector<16x4xf32>
    "tpu.trace_stop"() : () -> ()
    %224 = arith.truncf %223 : vector<16x4xf32> to vector<16x4xbf16>
    %225 = vector.extract_strided_slice %159 {offsets = [8, 0], sizes = [4, 16], strides = [1, 1]} : vector<16x16xbf16> to vector<4x16xbf16>
    %cst_76 = arith.constant dense<0.000000e+00> : vector<16x16xf32>
    %226 = tpu.matmul %224, %225, %cst_76 {dimension_numbers = #tpu.dot_dimension_numbers<[1], [0], [0], [1], [0, 0, 1, 1], [], []>} : vector<16x4xbf16>, vector<4x16xbf16>, vector<16x16xf32> -> vector<16x16xf32>
    %227 = arith.addf %204, %226 : vector<16x16xf32>
    %228 = vector.extract_strided_slice %148 {offsets = [0, 12], sizes = [16, 4], strides = [1, 1]} : vector<16x16xf32> to vector<16x4xf32>
    %229 = arith.truncf %228 : vector<16x4xf32> to vector<16x4xbf16>
    %230 = vector.extract_strided_slice %156 {offsets = [0, 12], sizes = [8, 4], strides = [1, 1]} : vector<8x16xf32> to vector<8x4xf32>
    %231 = arith.truncf %230 : vector<8x4xf32> to vector<8x4xbf16>
    %232 = vector.extract_strided_slice %157 {offsets = [0, 12], sizes = [8, 4], strides = [1, 1]} : vector<8x16xf32> to vector<8x4xf32>
    %233 = arith.truncf %232 : vector<8x4xf32> to vector<8x4xbf16>
    "tpu.trace_start"() <{level = 10 : i32, message = "qd,kd->qk"}> : () -> ()
    %cst_77 = arith.constant dense<0.000000e+00> : vector<16x8xf32>
    %234 = tpu.matmul %229, %231, %cst_77 {dimension_numbers = #tpu.dot_dimension_numbers<[1], [1], [0], [0], [0, 0, 1, 0], [], []>} : vector<16x4xbf16>, vector<8x4xbf16>, vector<16x8xf32> -> vector<16x8xf32>
    "tpu.trace_stop"() : () -> ()
    %cst_78 = arith.constant dense<0xFF800000> : vector<16xf32>
    %235 = vector.multi_reduction <maximumf>, %234, %cst_78 [1] : vector<16x8xf32> to vector<16xf32>
    %236 = vector.shape_cast %235 : vector<16xf32> to vector<16x1xf32>
    %237 = vector.broadcast %236 : vector<16x1xf32> to vector<16x8xf32>
    %238 = arith.subf %234, %237 : vector<16x8xf32>
    %239 = math.exp %238 : vector<16x8xf32>
    %cst_79 = arith.constant dense<0.000000e+00> : vector<16xf32>
    %240 = vector.multi_reduction <add>, %239, %cst_79 [1] : vector<16x8xf32> to vector<16xf32>
    %241 = vector.shape_cast %240 : vector<16xf32> to vector<16x1xf32>
    %242 = tpu.reciprocal %241 {approx = true} : vector<16x1xf32> -> vector<16x1xf32>
    %243 = vector.broadcast %242 : vector<16x1xf32> to vector<16x8xf32>
    %244 = arith.mulf %239, %243 : vector<16x8xf32>
    %245 = arith.truncf %244 : vector<16x8xf32> to vector<16x8xbf16>
    "tpu.trace_start"() <{level = 10 : i32, message = "qk,kd->qd"}> : () -> ()
    %cst_80 = arith.constant dense<0.000000e+00> : vector<16x4xf32>
    %246 = tpu.matmul %245, %233, %cst_80 {dimension_numbers = #tpu.dot_dimension_numbers<[1], [0], [0], [1], [0, 0, 1, 1], [], []>} : vector<16x8xbf16>, vector<8x4xbf16>, vector<16x4xf32> -> vector<16x4xf32>
    "tpu.trace_stop"() : () -> ()
    %247 = arith.truncf %246 : vector<16x4xf32> to vector<16x4xbf16>
    %248 = vector.extract_strided_slice %159 {offsets = [12, 0], sizes = [4, 16], strides = [1, 1]} : vector<16x16xbf16> to vector<4x16xbf16>
    %cst_81 = arith.constant dense<0.000000e+00> : vector<16x16xf32>
    %249 = tpu.matmul %247, %248, %cst_81 {dimension_numbers = #tpu.dot_dimension_numbers<[1], [0], [0], [1], [0, 0, 1, 1], [], []>} : vector<16x4xbf16>, vector<4x16xbf16>, vector<16x16xf32> -> vector<16x16xf32>
    %250 = arith.addf %227, %249 : vector<16x16xf32>
    %c0_82 = arith.constant 0 : index
    %c0_83 = arith.constant 0 : index
    %c0_84 = arith.constant 0 : index
    %251 = vector.load %arg13[%c0_82, %c0_83, %c0_84] : memref<1x1x16xf32, #tpu.memory_space<vmem>>, vector<1x1x16xf32>
    %252 = vector.shape_cast %251 : vector<1x1x16xf32> to vector<1x16xf32>
    %253 = vector.broadcast %252 : vector<1x16xf32> to vector<16x16xf32>
    %254 = arith.addf %250, %253 : vector<16x16xf32>
    %255 = vector.extract_strided_slice %8 {offsets = [2, 0], sizes = [1, 16], strides = [1, 1]} : vector<6x16xf32> to vector<1x16xf32>
    %256 = vector.extract_strided_slice %8 {offsets = [3, 0], sizes = [1, 16], strides = [1, 1]} : vector<6x16xf32> to vector<1x16xf32>
    %257 = arith.addf %140, %254 : vector<16x16xf32>
    %cst_85 = arith.constant dense<0.000000e+00> : vector<16xf32>
    %258 = vector.multi_reduction <add>, %257, %cst_85 [1] : vector<16x16xf32> to vector<16xf32>
    %259 = vector.shape_cast %258 : vector<16xf32> to vector<16x1xf32>
    %cst_86 = arith.constant 1.600000e+01 : f32
    %260 = vector.broadcast %cst_86 : f32 to vector<16x1xf32>
    %261 = arith.divf %259, %260 : vector<16x1xf32>
    %262 = vector.broadcast %261 : vector<16x1xf32> to vector<16x16xf32>
    %263 = arith.subf %257, %262 : vector<16x16xf32>
    %264 = arith.mulf %263, %263 : vector<16x16xf32>
    %cst_87 = arith.constant dense<0.000000e+00> : vector<16xf32>
    %265 = vector.multi_reduction <add>, %264, %cst_87 [1] : vector<16x16xf32> to vector<16xf32>
    %266 = vector.shape_cast %265 : vector<16xf32> to vector<16x1xf32>
    %cst_88 = arith.constant 1.600000e+01 : f32
    %267 = vector.broadcast %cst_88 : f32 to vector<16x1xf32>
    %268 = arith.divf %266, %267 : vector<16x1xf32>
    %269 = vector.broadcast %261 : vector<16x1xf32> to vector<16x16xf32>
    %270 = arith.subf %257, %269 : vector<16x16xf32>
    %cst_89 = arith.constant 9.99999974E-6 : f32
    %271 = vector.broadcast %cst_89 : f32 to vector<16x1xf32>
    %272 = arith.addf %268, %271 : vector<16x1xf32>
    %273 = math.rsqrt %272 : vector<16x1xf32>
    %274 = vector.broadcast %273 : vector<16x1xf32> to vector<16x16xf32>
    %275 = arith.mulf %270, %274 : vector<16x16xf32>
    %276 = vector.broadcast %255 : vector<1x16xf32> to vector<16x16xf32>
    %277 = arith.mulf %275, %276 : vector<16x16xf32>
    %278 = vector.broadcast %256 : vector<1x16xf32> to vector<16x16xf32>
    %279 = arith.addf %277, %278 : vector<16x16xf32>
    %280 = arith.truncf %279 : vector<16x16xf32> to vector<16x16xbf16>
    %c0_90 = arith.constant 0 : index
    %c0_91 = arith.constant 0 : index
    %c0_92 = arith.constant 0 : index
    %281 = vector.load %arg14[%c0_90, %c0_91, %c0_92] : memref<1x16x128xbf16, #tpu.memory_space<vmem>>, vector<1x16x128xbf16>
    %282 = vector.shape_cast %281 : vector<1x16x128xbf16> to vector<16x128xbf16>
    %cst_93 = arith.constant dense<0.000000e+00> : vector<16x128xf32>
    %283 = tpu.matmul %280, %282, %cst_93 {dimension_numbers = #tpu.dot_dimension_numbers<[1], [0], [0], [1], [0, 0, 1, 1], [], []>} : vector<16x16xbf16>, vector<16x128xbf16>, vector<16x128xf32> -> vector<16x128xf32>
    %c0_94 = arith.constant 0 : index
    %c0_95 = arith.constant 0 : index
    %c0_96 = arith.constant 0 : index
    %284 = vector.load %arg15[%c0_94, %c0_95, %c0_96] : memref<1x1x128xf32, #tpu.memory_space<vmem>>, vector<1x1x128xf32>
    %285 = vector.shape_cast %284 : vector<1x1x128xf32> to vector<1x128xf32>
    %286 = vector.broadcast %285 : vector<1x128xf32> to vector<16x128xf32>
    %287 = arith.addf %283, %286 : vector<16x128xf32>
    %cst_97 = arith.constant 0.000000e+00 : f32
    %288 = vector.broadcast %cst_97 : f32 to vector<16x128xf32>
    %289 = arith.maximumf %287, %288 : vector<16x128xf32>
    %290 = arith.truncf %289 : vector<16x128xf32> to vector<16x128xbf16>
    %c0_98 = arith.constant 0 : index
    %c0_99 = arith.constant 0 : index
    %c0_100 = arith.constant 0 : index
    %291 = vector.load %arg16[%c0_98, %c0_99, %c0_100] : memref<1x128x16xbf16, #tpu.memory_space<vmem>>, vector<1x128x16xbf16>
    %292 = vector.shape_cast %291 : vector<1x128x16xbf16> to vector<128x16xbf16>
    %cst_101 = arith.constant dense<0.000000e+00> : vector<16x16xf32>
    %293 = tpu.matmul %290, %292, %cst_101 {dimension_numbers = #tpu.dot_dimension_numbers<[1], [0], [0], [1], [0, 0, 1, 1], [], []>} : vector<16x128xbf16>, vector<128x16xbf16>, vector<16x16xf32> -> vector<16x16xf32>
    %c0_102 = arith.constant 0 : index
    %c0_103 = arith.constant 0 : index
    %c0_104 = arith.constant 0 : index
    %294 = vector.load %arg17[%c0_102, %c0_103, %c0_104] : memref<1x1x16xf32, #tpu.memory_space<vmem>>, vector<1x1x16xf32>
    %295 = vector.shape_cast %294 : vector<1x1x16xf32> to vector<1x16xf32>
    %296 = vector.broadcast %295 : vector<1x16xf32> to vector<16x16xf32>
    %297 = arith.addf %293, %296 : vector<16x16xf32>
    %298 = vector.extract_strided_slice %8 {offsets = [4, 0], sizes = [1, 16], strides = [1, 1]} : vector<6x16xf32> to vector<1x16xf32>
    %299 = vector.extract_strided_slice %8 {offsets = [5, 0], sizes = [1, 16], strides = [1, 1]} : vector<6x16xf32> to vector<1x16xf32>
    %300 = arith.addf %279, %297 : vector<16x16xf32>
    %cst_105 = arith.constant dense<0.000000e+00> : vector<16xf32>
    %301 = vector.multi_reduction <add>, %300, %cst_105 [1] : vector<16x16xf32> to vector<16xf32>
    %302 = vector.shape_cast %301 : vector<16xf32> to vector<16x1xf32>
    %cst_106 = arith.constant 1.600000e+01 : f32
    %303 = vector.broadcast %cst_106 : f32 to vector<16x1xf32>
    %304 = arith.divf %302, %303 : vector<16x1xf32>
    %305 = vector.broadcast %304 : vector<16x1xf32> to vector<16x16xf32>
    %306 = arith.subf %300, %305 : vector<16x16xf32>
    %307 = arith.mulf %306, %306 : vector<16x16xf32>
    %cst_107 = arith.constant dense<0.000000e+00> : vector<16xf32>
    %308 = vector.multi_reduction <add>, %307, %cst_107 [1] : vector<16x16xf32> to vector<16xf32>
    %309 = vector.shape_cast %308 : vector<16xf32> to vector<16x1xf32>
    %cst_108 = arith.constant 1.600000e+01 : f32
    %310 = vector.broadcast %cst_108 : f32 to vector<16x1xf32>
    %311 = arith.divf %309, %310 : vector<16x1xf32>
    %312 = vector.broadcast %304 : vector<16x1xf32> to vector<16x16xf32>
    %313 = arith.subf %300, %312 : vector<16x16xf32>
    %cst_109 = arith.constant 9.99999974E-6 : f32
    %314 = vector.broadcast %cst_109 : f32 to vector<16x1xf32>
    %315 = arith.addf %311, %314 : vector<16x1xf32>
    %316 = math.rsqrt %315 : vector<16x1xf32>
    %317 = vector.broadcast %316 : vector<16x1xf32> to vector<16x16xf32>
    %318 = arith.mulf %313, %317 : vector<16x16xf32>
    %319 = vector.broadcast %298 : vector<1x16xf32> to vector<16x16xf32>
    %320 = arith.mulf %318, %319 : vector<16x16xf32>
    %321 = vector.broadcast %299 : vector<1x16xf32> to vector<16x16xf32>
    %322 = arith.addf %320, %321 : vector<16x16xf32>
    %323 = arith.truncf %322 : vector<16x16xf32> to vector<16x16xbf16>
    %c0_110 = arith.constant 0 : index
    %c0_111 = arith.constant 0 : index
    %324 = vector.load %arg22[%c0_110, %c0_111] : memref<16x16xbf16, #tpu.memory_space<vmem>>, vector<16x16xbf16>
    tpu.vector_store %arg22[%c0_110, %c0_111], %323 {strides = array<i32>} : memref<16x16xbf16, #tpu.memory_space<vmem>>, vector<16x16xbf16>,
    %c1_i32 = arith.constant 1 : i32
    %325 = arith.cmpi eq, %arg1, %c1_i32 : i32
    %326 = arith.extui %325 : i1 to i32
    %c0_i32_112 = arith.constant 0 : i32
    %327 = arith.cmpi ne, %326, %c0_i32_112 : i32
    scf.if %327 {
      %328 = arith.truncf %322 : vector<16x16xf32> to vector<16x16xbf16>
      %c0_113 = arith.constant 0 : index
      %c0_114 = arith.constant 0 : index
      %329 = vector.load %arg19[%c0_113, %c0_114] : memref<16x4xbf16, #tpu.memory_space<vmem>>, vector<16x4xbf16>
      %cst_115 = arith.constant dense<0.000000e+00> : vector<16x4xf32>
      %330 = tpu.matmul %328, %329, %cst_115 {dimension_numbers = #tpu.dot_dimension_numbers<[1], [0], [0], [1], [0, 0, 1, 1], [], []>} : vector<16x16xbf16>, vector<16x4xbf16>, vector<16x4xf32> -> vector<16x4xf32>
      %c0_116 = arith.constant 0 : index
      %c0_117 = arith.constant 0 : index
      %331 = vector.load %arg20[%c0_116, %c0_117] : memref<1x4xf32, #tpu.memory_space<vmem>>, vector<1x4xf32>
      %332 = vector.broadcast %331 : vector<1x4xf32> to vector<16x4xf32>
      %333 = arith.addf %330, %332 : vector<16x4xf32>
      %c0_118 = arith.constant 0 : index
      %c0_119 = arith.constant 0 : index
      %c0_120 = arith.constant 0 : index
      %334 = vector.load %arg21[%c0_118, %c0_119, %c0_120] : memref<1x16x4xf32, #tpu.memory_space<vmem>>, vector<1x16x4xf32>
      %335 = vector.shape_cast %334 : vector<1x16x4xf32> to vector<16x4xf32>
      %336 = vector.shape_cast %333 : vector<16x4xf32> to vector<1x16x4xf32>
      tpu.vector_store %arg21[%c0_118, %c0_119, %c0_120], %336 {strides = array<i32>} : memref<1x16x4xf32, #tpu.memory_space<vmem>>, vector<1x16x4xf32>,
    } else {
    }
    return
  }
  func.func @transform_0(%arg0: i32, %arg1: i32) -> (i32, i32, i32) {
    %c0_i32 = arith.constant 0 : i32
    %c0_i32_0 = arith.constant 0 : i32
    %c0_i32_1 = arith.constant 0 : i32
    return %arg0, %c0_i32, %c0_i32_0 : i32, i32, i32
  }
  func.func @transform_1(%arg0: i32, %arg1: i32) -> (i32, i32, i32) {
    %c0_i32 = arith.constant 0 : i32
    %c0_i32_0 = arith.constant 0 : i32
    %c0_i32_1 = arith.constant 0 : i32
    return %arg0, %c0_i32, %c0_i32_0 : i32, i32, i32
  }
  func.func @transform_2(%arg0: i32, %arg1: i32) -> (i32, i32, i32) {
    %c0_i32 = arith.constant 0 : i32
    %c0_i32_0 = arith.constant 0 : i32
    %c0_i32_1 = arith.constant 0 : i32
    return %arg1, %c0_i32, %c0_i32_0 : i32, i32, i32
  }
  func.func @transform_3(%arg0: i32, %arg1: i32) -> (i32, i32, i32) {
    %c0_i32 = arith.constant 0 : i32
    %c0_i32_0 = arith.constant 0 : i32
    %c0_i32_1 = arith.constant 0 : i32
    return %arg1, %c0_i32, %c0_i32_0 : i32, i32, i32
  }
  func.func @transform_4(%arg0: i32, %arg1: i32) -> (i32, i32, i32) {
    %c0_i32 = arith.constant 0 : i32
    %c0_i32_0 = arith.constant 0 : i32
    %c0_i32_1 = arith.constant 0 : i32
    return %arg1, %c0_i32, %c0_i32_0 : i32, i32, i32
  }
  func.func @transform_5(%arg0: i32, %arg1: i32) -> (i32, i32, i32) {
    %c0_i32 = arith.constant 0 : i32
    %c0_i32_0 = arith.constant 0 : i32
    %c0_i32_1 = arith.constant 0 : i32
    return %arg1, %c0_i32, %c0_i32_0 : i32, i32, i32
  }
  func.func @transform_6(%arg0: i32, %arg1: i32) -> (i32, i32, i32) {
    %c0_i32 = arith.constant 0 : i32
    %c0_i32_0 = arith.constant 0 : i32
    %c0_i32_1 = arith.constant 0 : i32
    return %arg1, %c0_i32, %c0_i32_0 : i32, i32, i32
  }
  func.func @transform_7(%arg0: i32, %arg1: i32) -> (i32, i32, i32) {
    %c0_i32 = arith.constant 0 : i32
    %c0_i32_0 = arith.constant 0 : i32
    %c0_i32_1 = arith.constant 0 : i32
    return %arg1, %c0_i32, %c0_i32_0 : i32, i32, i32
  }
  func.func @transform_8(%arg0: i32, %arg1: i32) -> (i32, i32, i32) {
    %c0_i32 = arith.constant 0 : i32
    %c0_i32_0 = arith.constant 0 : i32
    %c0_i32_1 = arith.constant 0 : i32
    return %arg1, %c0_i32, %c0_i32_0 : i32, i32, i32
  }
  func.func @transform_9(%arg0: i32, %arg1: i32) -> (i32, i32, i32) {
    %c0_i32 = arith.constant 0 : i32
    %c0_i32_0 = arith.constant 0 : i32
    %c0_i32_1 = arith.constant 0 : i32
    return %arg1, %c0_i32, %c0_i32_0 : i32, i32, i32
  }
  func.func @transform_10(%arg0: i32, %arg1: i32) -> (i32, i32, i32) {
    %c0_i32 = arith.constant 0 : i32
    %c0_i32_0 = arith.constant 0 : i32
    %c0_i32_1 = arith.constant 0 : i32
    return %arg1, %c0_i32, %c0_i32_0 : i32, i32, i32
  }
  func.func @transform_11(%arg0: i32, %arg1: i32) -> (i32, i32, i32) {
    %c0_i32 = arith.constant 0 : i32
    %c0_i32_0 = arith.constant 0 : i32
    %c0_i32_1 = arith.constant 0 : i32
    return %arg1, %c0_i32, %c0_i32_0 : i32, i32, i32
  }
  func.func @transform_12(%arg0: i32, %arg1: i32) -> (i32, i32, i32) {
    %c0_i32 = arith.constant 0 : i32
    %c0_i32_0 = arith.constant 0 : i32
    %c0_i32_1 = arith.constant 0 : i32
    return %arg1, %c0_i32, %c0_i32_0 : i32, i32, i32
  }
  func.func @transform_13(%arg0: i32, %arg1: i32) -> (i32, i32, i32) {
    %c0_i32 = arith.constant 0 : i32
    %c0_i32_0 = arith.constant 0 : i32
    %c0_i32_1 = arith.constant 0 : i32
    return %arg1, %c0_i32, %c0_i32_0 : i32, i32, i32
  }
  func.func @transform_14(%arg0: i32, %arg1: i32) -> (i32, i32, i32) {
    %c0_i32 = arith.constant 0 : i32
    %c0_i32_0 = arith.constant 0 : i32
    %c0_i32_1 = arith.constant 0 : i32
    return %arg1, %c0_i32, %c0_i32_0 : i32, i32, i32
  }
  func.func @transform_15(%arg0: i32, %arg1: i32) -> (i32, i32, i32) {
    %c0_i32 = arith.constant 0 : i32
    %c0_i32_0 = arith.constant 0 : i32
    %c0_i32_1 = arith.constant 0 : i32
    return %arg1, %c0_i32, %c0_i32_0 : i32, i32, i32
  }
  func.func @transform_16(%arg0: i32, %arg1: i32) -> (i32, i32, i32) {
    %c0_i32 = arith.constant 0 : i32
    %c0_i32_0 = arith.constant 0 : i32
    %c0_i32_1 = arith.constant 0 : i32
    return %arg1, %c0_i32, %c0_i32_0 : i32, i32, i32
  }
  func.func @transform_17(%arg0: i32, %arg1: i32) -> (i32, i32) {
    %c0_i32 = arith.constant 0 : i32
    %c0_i32_0 = arith.constant 0 : i32
    %c0_i32_1 = arith.constant 0 : i32
    return %c0_i32, %c0_i32_0 : i32, i32
  }
  func.func @transform_18(%arg0: i32, %arg1: i32) -> (i32, i32) {
    %c0_i32 = arith.constant 0 : i32
    %c0_i32_0 = arith.constant 0 : i32
    %c0_i32_1 = arith.constant 0 : i32
    return %c0_i32, %c0_i32_0 : i32, i32
  }
  func.func @transform_19(%arg0: i32, %arg1: i32) -> (i32, i32, i32) {
    %c0_i32 = arith.constant 0 : i32
    %c0_i32_0 = arith.constant 0 : i32
    %c0_i32_1 = arith.constant 0 : i32
    return %arg0, %c0_i32, %c0_i32_0 : i32, i32, i32
  }
}

</mosaic_0001>

<llo_original>
// kernel: transformer_decoder_forward.2
$region0: #{transformer_decoder_forward.2}
  #allocation0 [shape = 'u32[]', space=smem, size = 0x4, offset = 0x4, fixed_abs, tag = 'smem constant byte address 0x4 - core index']
  #allocation1 [shape = 'u32[144,128]{1,0:T(1,128)}', space=vmem, size = 0x12000, scoped, tag = 'internal scratch']
  %s0 = inlined_call_operand.vmem [shape: f32[32,4], index: 0, kind: input, shape index: {}]
  %s1 = inlined_call_operand.vmem [shape: bf16[4,16], index: 1, kind: input, shape index: {}]
  %s2 = inlined_call_operand.vmem [shape: f32[1,16], index: 2, kind: input, shape index: {}]
  %s3 = inlined_call_operand.vmem [shape: f32[1,16], index: 3, kind: input, shape index: {}]
  %s4 = inlined_call_operand.vmem [shape: bf16[32,16], index: 4, kind: output, shape index: {}]
  %s5 = sld [smem:[#allocation0]]
  $region26: #{transformer_decoder_forward.2} parent=0
    _
  %s7 = ssub.s32 1, %s5
  %s8 = scalar_select 0, %s7, %s5
  // Predicated region
  $region2: #{transformer_decoder_forward.2} parent=0 // pred_check
    _
  $region3: #{transformer_decoder_forward.2} parent=0 // pred_check_branch
    %10 = sbr.rel (0) target = $region5
  $region4: #{transformer_decoder_forward.2} parent=0 // pred_region
    _
  $region5: #{transformer_decoder_forward.2} parent=0 // pred_fallthru
    _
  // Predicated region
  $region6: #{transformer_decoder_forward.2} parent=0 // pred_check
    _
  $region7: #{transformer_decoder_forward.2} parent=0 // pred_check_branch
    %12 = sbr.rel (0) target = $region9
  $region8: #{transformer_decoder_forward.2} parent=0 // pred_region
    _
  $region9: #{transformer_decoder_forward.2} parent=0 // pred_fallthru
    _
  // Predicated region
  $region10: #{transformer_decoder_forward.2} parent=0 // pred_check
    _
  $region11: #{transformer_decoder_forward.2} parent=0 // pred_check_branch
    %14 = sbr.rel (0) target = $region13
  $region12: #{transformer_decoder_forward.2} parent=0 // pred_region
    _
  $region13: #{transformer_decoder_forward.2} parent=0 // pred_fallthru
    _
  // Predicated region
  $region14: #{transformer_decoder_forward.2} parent=0 // pred_check
    _
  $region15: #{transformer_decoder_forward.2} parent=0 // pred_check_branch
    %16 = sbr.rel (0) target = $region17
  $region16: #{transformer_decoder_forward.2} parent=0 // pred_region
    _
  $region17: #{transformer_decoder_forward.2} parent=0 // pred_fallthru
    _
  %v18 = vld [vmem:[%s0] sm:$0xff]
  %v19 = vld [vmem:[%s0 + $0x8] sm:$0xff]
  %v20 = vld [vmem:[%s0 + $0x10] sm:$0xff]
  %v21 = vld [vmem:[%s0 + $0x18] sm:$0xff]
  %v22 = vpack.c.bf16 %v19, %v18
  %v23 = vpack.c.bf16 %v21, %v20
  %v24 = vld [vmem:[%s1] sm:$0x3]
  %v25 = vld [vmem:[%s2] sm:$0x1]
  %v27 = vlaneseq
  %v28 = vshrl.u32 %v27, 7
  %v29 = vsub.s32 0, %v28
  %v30 = vrot.slane %v25, %v29
  %vm32 = vcmask 31744
  %v34 = vsel %vm32, %v22, 0
  %v37 = vsel %vm32, %v23, 0
  %vm39 = vcmask 1041408
  %v41 = vsel %vm39, %v24, 0
  %43 = vmatprep.subr.bf16.mxu0 0
  %44 = vmatpush1.bf16.msra.mxu0 %v41
  %45 = vmatprep.subr.bf16.mxu0 0
  %46 = vmatpush1.bf16.msra.mxu0 0
  %47 = vmatprep.subr.bf16.mxu0 0
  %48 = vmatpush1.bf16.msra.mxu0 0
  %49 = vmatprep.subr.bf16.mxu0 0
  %50 = vmatpush1.bf16.msra.mxu0 0
  %51 = vmatprep.subr.bf16.mxu0 0
  %52 = vmatpush1.bf16.msra.mxu0 0
  %53 = vmatprep.subr.bf16.mxu0 0
  %54 = vmatpush1.bf16.msra.mxu0 0
  %55 = vmatprep.subr.bf16.mxu0 0
  %56 = vmatpush1.bf16.msra.mxu0 0
  %57 = vmatprep.subr.bf16.mxu0 0
  %58 = vmatpush1.bf16.msra.mxu0 0
  %59 = vmatprep.subr.bf16.mxu0 0
  %60 = vmatpush1.bf16.msra.mxu0 0
  %61 = vmatprep.subr.bf16.mxu0 0
  %62 = vmatpush1.bf16.msra.mxu0 0
  %63 = vmatprep.subr.bf16.mxu0 0
  %64 = vmatpush1.bf16.msra.mxu0 0
  %65 = vmatprep.subr.bf16.mxu0 0
  %66 = vmatpush1.bf16.msra.mxu0 0
  %67 = vmatprep.subr.bf16.mxu0 0
  %68 = vmatpush1.bf16.msra.mxu0 0
  %69 = vmatprep.subr.bf16.mxu0 0
  %70 = vmatpush1.bf16.msra.mxu0 0
  %71 = vmatprep.subr.bf16.mxu0 0
  %72 = vmatpush1.bf16.msra.mxu0 0
  %73 = vmatprep.subr.bf16.mxu0 0
  %74 = vmatpush1.bf16.msra.mxu0 0
  %75 = vmatprep.mubr.bf16.mxu0 0
  %76 = vmatmul.mubr.bf16.gmra.mrb[0].mxu0 %v34
  %v77 = vpop.f32.mrb[0].mxu0
  %v78 = vadd.f32 %v30, %v77
  %v79 = vpop.f32.mrb[0].mxu0
  %v80 = vpop.f32.mrb[0].mxu0
  %v81 = vadd.f32 %v30, %v80
  %v82 = vpop.f32.mrb[0].mxu0
  %83 = vmatprep.mubr.bf16.mxu0 0
  %84 = vmatmul.mubr.bf16.gmra.mrb[0].mxu0 %v37
  %v85 = vpop.f32.mrb[0].mxu0
  %v86 = vadd.f32 %v30, %v85
  %v87 = vpop.f32.mrb[0].mxu0
  %v88 = vpop.f32.mrb[0].mxu0
  %v89 = vadd.f32 %v30, %v88
  %v90 = vpop.f32.mrb[0].mxu0
  %91 = vdwg.mxu0
  %v92 = vld [vmem:[%s3] sm:$0x1]
  %v94 = vlaneseq
  %v95 = vshrl.u32 %v94, 7
  %v96 = vsub.s32 0, %v95
  %v97 = vrot.slane %v92, %v96
  %v99 = vadd.f32 %v78, %v97
  %v100 = vadd.f32 %v81, %v97
  %v101 = vadd.f32 %v86, %v97
  %v102 = vadd.f32 %v89, %v97
  %v103 = vpack.c.bf16 %v100, %v99
  %v104 = vpack.c.bf16 %v102, %v101
  %v107 = vunpack.c.l.b16 %v103
  %v108 = vunpack.c.h.b16 %v103
  %v109 = vunpack.c.l.b16 %v104
  %v110 = vunpack.c.h.b16 %v104
  %v111 = vpack.c.b16 %v107, %v107
  %v112 = vpack.c.b16 %v108, %v108
  %v113 = vpack.c.b16 %v109, %v109
  %v114 = vpack.c.b16 %v110, %v110
  %vm119 = vcmask 125952
  %120 = vst.msk [vmem:[%s4] sm:$0xf] %vm119, %v111
  %121 = vst.msk [vmem:[%s4 + $0x4] sm:$0xf] %vm119, %v112
  %122 = vst.msk [vmem:[%s4 + $0x8] sm:$0xf] %vm119, %v113
  %123 = vst.msk [vmem:[%s4 + $0xc] sm:$0xf] %vm119, %v114
  // Predicated region
  $region18: #{transformer_decoder_forward.2} parent=0 // pred_check
    _
  $region19: #{transformer_decoder_forward.2} parent=0 // pred_check_branch
    %125 = sbr.rel (0) target = $region21
  $region20: #{transformer_decoder_forward.2} parent=0 // pred_region
    _
  $region21: #{transformer_decoder_forward.2} parent=0 // pred_fallthru
    _
  // Predicated region
  $region22: #{transformer_decoder_forward.2} parent=0 // pred_check
    _
  $region23: #{transformer_decoder_forward.2} parent=0 // pred_check_branch
    %127 = sbr.rel (0) target = $region25
  $region24: #{transformer_decoder_forward.2} parent=0 // pred_region
    _
  $region25: #{transformer_decoder_forward.2} parent=0 // pred_fallthru
    _

// kernel: transformer_decoder_forward.3
$region0: #{transformer_decoder_forward.3}
  #allocation0 [shape = 'u32[]', space=smem, size = 0x4, offset = 0x4, fixed_abs, tag = 'smem constant byte address 0x4 - core index']
  #allocation1 [shape = 'u32[144,128]{1,0:T(1,128)}', space=vmem, size = 0x12000, scoped, tag = 'internal scratch']
  #allocation2 [shape = 'bf16[16,16]{1,0:T(16,128)(2,1)}', space=vmem, size = 0x1000, scoped, tag = 'scratch operand']
  %s0 = inlined_call_operand.vmem [shape: bf16[2,16,16], index: 0, kind: input, shape index: {}]
  %s1 = inlined_call_operand.vmem [shape: bf16[2,8,16], index: 1, kind: input, shape index: {}]
  %s2 = inlined_call_operand.vmem [shape: bf16[2,16,48], index: 2, kind: input, shape index: {}]
  %s3 = inlined_call_operand.vmem [shape: f32[2,1,48], index: 3, kind: input, shape index: {}]
  %s4 = inlined_call_operand.vmem [shape: bf16[2,16,16], index: 4, kind: input, shape index: {}]
  %s5 = inlined_call_operand.vmem [shape: f32[2,1,16], index: 5, kind: input, shape index: {}]
  %s6 = inlined_call_operand.vmem [shape: bf16[2,16,16], index: 6, kind: input, shape index: {}]
  %s7 = inlined_call_operand.vmem [shape: f32[2,1,16], index: 7, kind: input, shape index: {}]
  %s8 = inlined_call_operand.vmem [shape: bf16[2,16,32], index: 8, kind: input, shape index: {}]
  %s9 = inlined_call_operand.vmem [shape: f32[2,1,32], index: 9, kind: input, shape index: {}]
  %s10 = inlined_call_operand.vmem [shape: bf16[2,16,16], index: 10, kind: input, shape index: {}]
  %s11 = inlined_call_operand.vmem [shape: f32[2,1,16], index: 11, kind: input, shape index: {}]
  %s12 = inlined_call_operand.vmem [shape: bf16[2,16,128], index: 12, kind: input, shape index: {}]
  %s13 = inlined_call_operand.vmem [shape: f32[2,1,128], index: 13, kind: input, shape index: {}]
  %s14 = inlined_call_operand.vmem [shape: bf16[2,128,16], index: 14, kind: input, shape index: {}]
  %s15 = inlined_call_operand.vmem [shape: f32[2,1,16], index: 15, kind: input, shape index: {}]
  %s16 = inlined_call_operand.vmem [shape: f32[2,6,16], index: 16, kind: input, shape index: {}]
  %s17 = inlined_call_operand.vmem [shape: bf16[16,4], index: 17, kind: input, shape index: {}]
  %s18 = inlined_call_operand.vmem [shape: f32[1,4], index: 18, kind: input, shape index: {}]
  %s19 = inlined_call_operand.vmem [shape: f32[2,16,4], index: 19, kind: output, shape index: {}]
  %s20 = sld [smem:[#allocation0]]
  $region117: #{transformer_decoder_forward.3} parent=0
    _
  %s22 = ssub.s32 1, %s20
  %s23 = scalar_select 0, %s22, %s20
  loop: start=0, step=1, limit=6
  $region2: #{transformer_decoder_forward.3} parent=0 // loop_pre_header
    _
  $region3: #{transformer_decoder_forward.3} parent=0 // loop_header
    %s25 = sphi 0, %s29
    %p26 = scmp.ge.s32.totalorder %s25, 6
    %s32 = sphi 0, %s44
    %s33 = sphi 0, %s40
    %s34 = sphi 0, %s32
    %s35 = sphi 0, %s33
    %s36 = sphi 0, %s34
    %s37 = sphi 0, %s35
    %s47 = sphi 0, %s49
    %s50 = sphi 0, %s47
    %s51 = sphi 0, %s50
    %s67 = sphi 0, %s51
    %s73 = sphi 0, %s75
    %s76 = sphi 0, %s73
    %s77 = sphi 0, %s76
    %s93 = sphi 0, %s77
    %s99 = sphi 0, %s101
    %s102 = sphi 0, %s99
    %s103 = sphi 0, %s102
    %s119 = sphi 0, %s103
    %s125 = sphi 0, %s127
    %s128 = sphi 0, %s125
    %s129 = sphi 0, %s128
    %s145 = sphi 0, %s129
    %s151 = sphi 0, %s153
    %s154 = sphi 0, %s151
    %s155 = sphi 0, %s154
    %s171 = sphi 0, %s155
    %s177 = sphi 0, %s179
    %s180 = sphi 0, %s177
    %s181 = sphi 0, %s180
    %s197 = sphi 0, %s181
    %s203 = sphi 0, %s205
    %s206 = sphi 0, %s203
    %s207 = sphi 0, %s206
    %s223 = sphi 0, %s207
    %s229 = sphi 0, %s231
    %s232 = sphi 0, %s229
    %s233 = sphi 0, %s232
    %s249 = sphi 0, %s233
    %s255 = sphi 0, %s257
    %s258 = sphi 0, %s255
    %s259 = sphi 0, %s258
    %s275 = sphi 0, %s259
    %s281 = sphi 0, %s283
    %s284 = sphi 0, %s281
    %s285 = sphi 0, %s284
    %s301 = sphi 0, %s285
    %s307 = sphi 0, %s309
    %s310 = sphi 0, %s307
    %s311 = sphi 0, %s310
    %s327 = sphi 0, %s311
    %s333 = sphi 0, %s335
    %s336 = sphi 0, %s333
    %s337 = sphi 0, %s336
    %s353 = sphi 0, %s337
    %s359 = sphi 0, %s361
    %s362 = sphi 0, %s359
    %s363 = sphi 0, %s362
    %s379 = sphi 0, %s363
    %s385 = sphi 0, %s387
    %s388 = sphi 0, %s385
    %s389 = sphi 0, %s388
    %s405 = sphi 0, %s389
    %s411 = sphi 0, %s413
    %s414 = sphi 0, %s411
    %s415 = sphi 0, %s414
    %s431 = sphi 0, %s415
    %s437 = sphi 0, %s439
    %s440 = sphi 0, %s437
    %s441 = sphi 0, %s440
    %s457 = sphi 0, %s441
    %s463 = sphi 0, %s465
    %s466 = sphi 0, %s463
    %s467 = sphi 0, %s466
    %s483 = sphi 0, %s467
    %s487 = sphi 0, %s487
    %s489 = sphi 0, %s487
    %s490 = sphi 0, %s489
    %s504 = sphi 0, %s490
    %s508 = sphi 0, %s508
    %s510 = sphi 0, %s508
    %s511 = sphi 0, %s510
    %s525 = sphi 0, %s511
    %s531 = sphi 0, %s533
    %s534 = sphi 0, %s531
    %s535 = sphi 0, %s534
    %s551 = sphi 0, %s535
  $region4: #{transformer_decoder_forward.3} parent=0 // loop_header_branch
    %28 = sbr.rel (%p26) target = $region8
  $region5: #{transformer_decoder_forward.3} parent=0 // loop_body
    %s30 = ssub.s32 %s25, 1
    %s31 = ssub.s32 %s25, 2
    %s38 = sadd.s32 1, %s33
    %p39 = scmp.ge.s32.totalorder %s38, 2
    %s40 = scalar_select %p39, 0, %s38
    %s41 = sadd.s32 1, %s32
    %s42 = scalar_select %p39, %s41, %s32
    %p43 = scmp.ge.s32.totalorder %s42, 2
    %s44 = scalar_select %p43, 0, %s42
    %s45 = ssub.s32 %s32, %s44
    %p46 = scmp.eq.s32.totalorder %s45, 0
    %s48 = sadd.s32 %s47, 1
    %s49 = scalar_select %p46, %s47, %s48
    %p52 = pneg %p46
    %p53 = scmp.eq.s32.totalorder %s25, 3
    %p54 = por %p52, %p53
    %p55 = scmp.ne.s32.totalorder %s47, %s50
    %p56 = scmp.eq.s32.totalorder %s25, 0
    %p57 = por %p55, %p56
    %p58 = scmp.ne.s32.totalorder %s47, %s50
    %p59 = scmp.eq.s32.totalorder %s30, 3
    %p60 = por %p58, %p59
    %p61 = scmp.ne.s32.totalorder %s50, %s51
    %p62 = scmp.eq.s32.totalorder %s30, 0
    %p63 = por %p61, %p62
    %p64 = scmp.ne.s32.totalorder %s50, %s51
    %p65 = scmp.eq.s32.totalorder %s31, 3
    %p66 = por %p64, %p65
    %p68 = scmp.ne.s32.totalorder %s51, %s67
    %p69 = scmp.eq.s32.totalorder %s31, 0
    %p70 = por %p68, %p69
    %s71 = ssub.s32 %s32, %s44
    %p72 = scmp.eq.s32.totalorder %s71, 0
    %s74 = sadd.s32 %s73, 1
    %s75 = scalar_select %p72, %s73, %s74
    %p78 = pneg %p72
    %p79 = scmp.eq.s32.totalorder %s25, 3
    %p80 = por %p78, %p79
    %p81 = scmp.ne.s32.totalorder %s73, %s76
    %p82 = scmp.eq.s32.totalorder %s25, 0
    %p83 = por %p81, %p82
    %p84 = scmp.ne.s32.totalorder %s73, %s76
    %p85 = scmp.eq.s32.totalorder %s30, 3
    %p86 = por %p84, %p85
    %p87 = scmp.ne.s32.totalorder %s76, %s77
    %p88 = scmp.eq.s32.totalorder %s30, 0
    %p89 = por %p87, %p88
    %p90 = scmp.ne.s32.totalorder %s76, %s77
    %p91 = scmp.eq.s32.totalorder %s31, 3
    %p92 = por %p90, %p91
    %p94 = scmp.ne.s32.totalorder %s77, %s93
    %p95 = scmp.eq.s32.totalorder %s31, 0
    %p96 = por %p94, %p95
    %s97 = ssub.s32 %s33, %s40
    %p98 = scmp.eq.s32.totalorder %s97, 0
    %s100 = sadd.s32 %s99, 1
    %s101 = scalar_select %p98, %s99, %s100
    %p104 = pneg %p98
    %p105 = scmp.eq.s32.totalorder %s25, 3
    %p106 = por %p104, %p105
    %p107 = scmp.ne.s32.totalorder %s99, %s102
    %p108 = scmp.eq.s32.totalorder %s25, 0
    %p109 = por %p107, %p108
    %p110 = scmp.ne.s32.totalorder %s99, %s102
    %p111 = scmp.eq.s32.totalorder %s30, 3
    %p112 = por %p110, %p111
    %p113 = scmp.ne.s32.totalorder %s102, %s103
    %p114 = scmp.eq.s32.totalorder %s30, 0
    %p115 = por %p113, %p114
    %p116 = scmp.ne.s32.totalorder %s102, %s103
    %p117 = scmp.eq.s32.totalorder %s31, 3
    %p118 = por %p116, %p117
    %p120 = scmp.ne.s32.totalorder %s103, %s119
    %p121 = scmp.eq.s32.totalorder %s31, 0
    %p122 = por %p120, %p121
    %s123 = ssub.s32 %s33, %s40
    %p124 = scmp.eq.s32.totalorder %s123, 0
    %s126 = sadd.s32 %s125, 1
    %s127 = scalar_select %p124, %s125, %s126
    %p130 = pneg %p124
    %p131 = scmp.eq.s32.totalorder %s25, 3
    %p132 = por %p130, %p131
    %p133 = scmp.ne.s32.totalorder %s125, %s128
    %p134 = scmp.eq.s32.totalorder %s25, 0
    %p135 = por %p133, %p134
    %p136 = scmp.ne.s32.totalorder %s125, %s128
    %p137 = scmp.eq.s32.totalorder %s30, 3
    %p138 = por %p136, %p137
    %p139 = scmp.ne.s32.totalorder %s128, %s129
    %p140 = scmp.eq.s32.totalorder %s30, 0
    %p141 = por %p139, %p140
    %p142 = scmp.ne.s32.totalorder %s128, %s129
    %p143 = scmp.eq.s32.totalorder %s31, 3
    %p144 = por %p142, %p143
    %p146 = scmp.ne.s32.totalorder %s129, %s145
    %p147 = scmp.eq.s32.totalorder %s31, 0
    %p148 = por %p146, %p147
    %s149 = ssub.s32 %s33, %s40
    %p150 = scmp.eq.s32.totalorder %s149, 0
    %s152 = sadd.s32 %s151, 1
    %s153 = scalar_select %p150, %s151, %s152
    %p156 = pneg %p150
    %p157 = scmp.eq.s32.totalorder %s25, 3
    %p158 = por %p156, %p157
    %p159 = scmp.ne.s32.totalorder %s151, %s154
    %p160 = scmp.eq.s32.totalorder %s25, 0
    %p161 = por %p159, %p160
    %p162 = scmp.ne.s32.totalorder %s151, %s154
    %p163 = scmp.eq.s32.totalorder %s30, 3
    %p164 = por %p162, %p163
    %p165 = scmp.ne.s32.totalorder %s154, %s155
    %p166 = scmp.eq.s32.totalorder %s30, 0
    %p167 = por %p165, %p166
    %p168 = scmp.ne.s32.totalorder %s154, %s155
    %p169 = scmp.eq.s32.totalorder %s31, 3
    %p170 = por %p168, %p169
    %p172 = scmp.ne.s32.totalorder %s155, %s171
    %p173 = scmp.eq.s32.totalorder %s31, 0
    %p174 = por %p172, %p173
    %s175 = ssub.s32 %s33, %s40
    %p176 = scmp.eq.s32.totalorder %s175, 0
    %s178 = sadd.s32 %s177, 1
    %s179 = scalar_select %p176, %s177, %s178
    %p182 = pneg %p176
    %p183 = scmp.eq.s32.totalorder %s25, 3
    %p184 = por %p182, %p183
    %p185 = scmp.ne.s32.totalorder %s177, %s180
    %p186 = scmp.eq.s32.totalorder %s25, 0
    %p187 = por %p185, %p186
    %p188 = scmp.ne.s32.totalorder %s177, %s180
    %p189 = scmp.eq.s32.totalorder %s30, 3
    %p190 = por %p188, %p189
    %p191 = scmp.ne.s32.totalorder %s180, %s181
    %p192 = scmp.eq.s32.totalorder %s30, 0
    %p193 = por %p191, %p192
    %p194 = scmp.ne.s32.totalorder %s180, %s181
    %p195 = scmp.eq.s32.totalorder %s31, 3
    %p196 = por %p194, %p195
    %p198 = scmp.ne.s32.totalorder %s181, %s197
    %p199 = scmp.eq.s32.totalorder %s31, 0
    %p200 = por %p198, %p199
    %s201 = ssub.s32 %s33, %s40
    %p202 = scmp.eq.s32.totalorder %s201, 0
    %s204 = sadd.s32 %s203, 1
    %s205 = scalar_select %p202, %s203, %s204
    %p208 = pneg %p202
    %p209 = scmp.eq.s32.totalorder %s25, 3
    %p210 = por %p208, %p209
    %p211 = scmp.ne.s32.totalorder %s203, %s206
    %p212 = scmp.eq.s32.totalorder %s25, 0
    %p213 = por %p211, %p212
    %p214 = scmp.ne.s32.totalorder %s203, %s206
    %p215 = scmp.eq.s32.totalorder %s30, 3
    %p216 = por %p214, %p215
    %p217 = scmp.ne.s32.totalorder %s206, %s207
    %p218 = scmp.eq.s32.totalorder %s30, 0
    %p219 = por %p217, %p218
    %p220 = scmp.ne.s32.totalorder %s206, %s207
    %p221 = scmp.eq.s32.totalorder %s31, 3
    %p222 = por %p220, %p221
    %p224 = scmp.ne.s32.totalorder %s207, %s223
    %p225 = scmp.eq.s32.totalorder %s31, 0
    %p226 = por %p224, %p225
    %s227 = ssub.s32 %s33, %s40
    %p228 = scmp.eq.s32.totalorder %s227, 0
    %s230 = sadd.s32 %s229, 1
    %s231 = scalar_select %p228, %s229, %s230
    %p234 = pneg %p228
    %p235 = scmp.eq.s32.totalorder %s25, 3
    %p236 = por %p234, %p235
    %p237 = scmp.ne.s32.totalorder %s229, %s232
    %p238 = scmp.eq.s32.totalorder %s25, 0
    %p239 = por %p237, %p238
    %p240 = scmp.ne.s32.totalorder %s229, %s232
    %p241 = scmp.eq.s32.totalorder %s30, 3
    %p242 = por %p240, %p241
    %p243 = scmp.ne.s32.totalorder %s232, %s233
    %p244 = scmp.eq.s32.totalorder %s30, 0
    %p245 = por %p243, %p244
    %p246 = scmp.ne.s32.totalorder %s232, %s233
    %p247 = scmp.eq.s32.totalorder %s31, 3
    %p248 = por %p246, %p247
    %p250 = scmp.ne.s32.totalorder %s233, %s249
    %p251 = scmp.eq.s32.totalorder %s31, 0
    %p252 = por %p250, %p251
    %s253 = ssub.s32 %s33, %s40
    %p254 = scmp.eq.s32.totalorder %s253, 0
    %s256 = sadd.s32 %s255, 1
    %s257 = scalar_select %p254, %s255, %s256
    %p260 = pneg %p254
    %p261 = scmp.eq.s32.totalorder %s25, 3
    %p262 = por %p260, %p261
    %p263 = scmp.ne.s32.totalorder %s255, %s258
    %p264 = scmp.eq.s32.totalorder %s25, 0
    %p265 = por %p263, %p264
    %p266 = scmp.ne.s32.totalorder %s255, %s258
    %p267 = scmp.eq.s32.totalorder %s30, 3
    %p268 = por %p266, %p267
    %p269 = scmp.ne.s32.totalorder %s258, %s259
    %p270 = scmp.eq.s32.totalorder %s30, 0
    %p271 = por %p269, %p270
    %p272 = scmp.ne.s32.totalorder %s258, %s259
    %p273 = scmp.eq.s32.totalorder %s31, 3
    %p274 = por %p272, %p273
    %p276 = scmp.ne.s32.totalorder %s259, %s275
    %p277 = scmp.eq.s32.totalorder %s31, 0
    %p278 = por %p276, %p277
    %s279 = ssub.s32 %s33, %s40
    %p280 = scmp.eq.s32.totalorder %s279, 0
    %s282 = sadd.s32 %s281, 1
    %s283 = scalar_select %p280, %s281, %s282
    %p286 = pneg %p280
    %p287 = scmp.eq.s32.totalorder %s25, 3
    %p288 = por %p286, %p287
    %p289 = scmp.ne.s32.totalorder %s281, %s284
    %p290 = scmp.eq.s32.totalorder %s25, 0
    %p291 = por %p289, %p290
    %p292 = scmp.ne.s32.totalorder %s281, %s284
    %p293 = scmp.eq.s32.totalorder %s30, 3
    %p294 = por %p292, %p293
    %p295 = scmp.ne.s32.totalorder %s284, %s285
    %p296 = scmp.eq.s32.totalorder %s30, 0
    %p297 = por %p295, %p296
    %p298 = scmp.ne.s32.totalorder %s284, %s285
    %p299 = scmp.eq.s32.totalorder %s31, 3
    %p300 = por %p298, %p299
    %p302 = scmp.ne.s32.totalorder %s285, %s301
    %p303 = scmp.eq.s32.totalorder %s31, 0
    %p304 = por %p302, %p303
    %s305 = ssub.s32 %s33, %s40
    %p306 = scmp.eq.s32.totalorder %s305, 0
    %s308 = sadd.s32 %s307, 1
    %s309 = scalar_select %p306, %s307, %s308
    %p312 = pneg %p306
    %p313 = scmp.eq.s32.totalorder %s25, 3
    %p314 = por %p312, %p313
    %p315 = scmp.ne.s32.totalorder %s307, %s310
    %p316 = scmp.eq.s32.totalorder %s25, 0
    %p317 = por %p315, %p316
    %p318 = scmp.ne.s32.totalorder %s307, %s310
    %p319 = scmp.eq.s32.totalorder %s30, 3
    %p320 = por %p318, %p319
    %p321 = scmp.ne.s32.totalorder %s310, %s311
    %p322 = scmp.eq.s32.totalorder %s30, 0
    %p323 = por %p321, %p322
    %p324 = scmp.ne.s32.totalorder %s310, %s311
    %p325 = scmp.eq.s32.totalorder %s31, 3
    %p326 = por %p324, %p325
    %p328 = scmp.ne.s32.totalorder %s311, %s327
    %p329 = scmp.eq.s32.totalorder %s31, 0
    %p330 = por %p328, %p329
    %s331 = ssub.s32 %s33, %s40
    %p332 = scmp.eq.s32.totalorder %s331, 0
    %s334 = sadd.s32 %s333, 1
    %s335 = scalar_select %p332, %s333, %s334
    %p338 = pneg %p332
    %p339 = scmp.eq.s32.totalorder %s25, 3
    %p340 = por %p338, %p339
    %p341 = scmp.ne.s32.totalorder %s333, %s336
    %p342 = scmp.eq.s32.totalorder %s25, 0
    %p343 = por %p341, %p342
    %p344 = scmp.ne.s32.totalorder %s333, %s336
    %p345 = scmp.eq.s32.totalorder %s30, 3
    %p346 = por %p344, %p345
    %p347 = scmp.ne.s32.totalorder %s336, %s337
    %p348 = scmp.eq.s32.totalorder %s30, 0
    %p349 = por %p347, %p348
    %p350 = scmp.ne.s32.totalorder %s336, %s337
    %p351 = scmp.eq.s32.totalorder %s31, 3
    %p352 = por %p350, %p351
    %p354 = scmp.ne.s32.totalorder %s337, %s353
    %p355 = scmp.eq.s32.totalorder %s31, 0
    %p356 = por %p354, %p355
    %s357 = ssub.s32 %s33, %s40
    %p358 = scmp.eq.s32.totalorder %s357, 0
    %s360 = sadd.s32 %s359, 1
    %s361 = scalar_select %p358, %s359, %s360
    %p364 = pneg %p358
    %p365 = scmp.eq.s32.totalorder %s25, 3
    %p366 = por %p364, %p365
    %p367 = scmp.ne.s32.totalorder %s359, %s362
    %p368 = scmp.eq.s32.totalorder %s25, 0
    %p369 = por %p367, %p368
    %p370 = scmp.ne.s32.totalorder %s359, %s362
    %p371 = scmp.eq.s32.totalorder %s30, 3
    %p372 = por %p370, %p371
    %p373 = scmp.ne.s32.totalorder %s362, %s363
    %p374 = scmp.eq.s32.totalorder %s30, 0
    %p375 = por %p373, %p374
    %p376 = scmp.ne.s32.totalorder %s362, %s363
    %p377 = scmp.eq.s32.totalorder %s31, 3
    %p378 = por %p376, %p377
    %p380 = scmp.ne.s32.totalorder %s363, %s379
    %p381 = scmp.eq.s32.totalorder %s31, 0
    %p382 = por %p380, %p381
    %s383 = ssub.s32 %s33, %s40
    %p384 = scmp.eq.s32.totalorder %s383, 0
    %s386 = sadd.s32 %s385, 1
    %s387 = scalar_select %p384, %s385, %s386
    %p390 = pneg %p384
    %p391 = scmp.eq.s32.totalorder %s25, 3
    %p392 = por %p390, %p391
    %p393 = scmp.ne.s32.totalorder %s385, %s388
    %p394 = scmp.eq.s32.totalorder %s25, 0
    %p395 = por %p393, %p394
    %p396 = scmp.ne.s32.totalorder %s385, %s388
    %p397 = scmp.eq.s32.totalorder %s30, 3
    %p398 = por %p396, %p397
    %p399 = scmp.ne.s32.totalorder %s388, %s389
    %p400 = scmp.eq.s32.totalorder %s30, 0
    %p401 = por %p399, %p400
    %p402 = scmp.ne.s32.totalorder %s388, %s389
    %p403 = scmp.eq.s32.totalorder %s31, 3
    %p404 = por %p402, %p403
    %p406 = scmp.ne.s32.totalorder %s389, %s405
    %p407 = scmp.eq.s32.totalorder %s31, 0
    %p408 = por %p406, %p407
    %s409 = ssub.s32 %s33, %s40
    %p410 = scmp.eq.s32.totalorder %s409, 0
    %s412 = sadd.s32 %s411, 1
    %s413 = scalar_select %p410, %s411, %s412
    %p416 = pneg %p410
    %p417 = scmp.eq.s32.totalorder %s25, 3
    %p418 = por %p416, %p417
    %p419 = scmp.ne.s32.totalorder %s411, %s414
    %p420 = scmp.eq.s32.totalorder %s25, 0
    %p421 = por %p419, %p420
    %p422 = scmp.ne.s32.totalorder %s411, %s414
    %p423 = scmp.eq.s32.totalorder %s30, 3
    %p424 = por %p422, %p423
    %p425 = scmp.ne.s32.totalorder %s414, %s415
    %p426 = scmp.eq.s32.totalorder %s30, 0
    %p427 = por %p425, %p426
    %p428 = scmp.ne.s32.totalorder %s414, %s415
    %p429 = scmp.eq.s32.totalorder %s31, 3
    %p430 = por %p428, %p429
    %p432 = scmp.ne.s32.totalorder %s415, %s431
    %p433 = scmp.eq.s32.totalorder %s31, 0
    %p434 = por %p432, %p433
    %s435 = ssub.s32 %s33, %s40
    %p436 = scmp.eq.s32.totalorder %s435, 0
    %s438 = sadd.s32 %s437, 1
    %s439 = scalar_select %p436, %s437, %s438
    %p442 = pneg %p436
    %p443 = scmp.eq.s32.totalorder %s25, 3
    %p444 = por %p442, %p443
    %p445 = scmp.ne.s32.totalorder %s437, %s440
    %p446 = scmp.eq.s32.totalorder %s25, 0
    %p447 = por %p445, %p446
    %p448 = scmp.ne.s32.totalorder %s437, %s440
    %p449 = scmp.eq.s32.totalorder %s30, 3
    %p450 = por %p448, %p449
    %p451 = scmp.ne.s32.totalorder %s440, %s441
    %p452 = scmp.eq.s32.totalorder %s30, 0
    %p453 = por %p451, %p452
    %p454 = scmp.ne.s32.totalorder %s440, %s441
    %p455 = scmp.eq.s32.totalorder %s31, 3
    %p456 = por %p454, %p455
    %p458 = scmp.ne.s32.totalorder %s441, %s457
    %p459 = scmp.eq.s32.totalorder %s31, 0
    %p460 = por %p458, %p459
    %s461 = ssub.s32 %s33, %s40
    %p462 = scmp.eq.s32.totalorder %s461, 0
    %s464 = sadd.s32 %s463, 1
    %s465 = scalar_select %p462, %s463, %s464
    %p468 = pneg %p462
    %p469 = scmp.eq.s32.totalorder %s25, 3
    %p470 = por %p468, %p469
    %p471 = scmp.ne.s32.totalorder %s463, %s466
    %p472 = scmp.eq.s32.totalorder %s25, 0
    %p473 = por %p471, %p472
    %p474 = scmp.ne.s32.totalorder %s463, %s466
    %p475 = scmp.eq.s32.totalorder %s30, 3
    %p476 = por %p474, %p475
    %p477 = scmp.ne.s32.totalorder %s466, %s467
    %p478 = scmp.eq.s32.totalorder %s30, 0
    %p479 = por %p477, %p478
    %p480 = scmp.ne.s32.totalorder %s466, %s467
    %p481 = scmp.eq.s32.totalorder %s31, 3
    %p482 = por %p480, %p481
    %p484 = scmp.ne.s32.totalorder %s467, %s483
    %p485 = scmp.eq.s32.totalorder %s31, 0
    %p486 = por %p484, %p485
    %s488 = sadd.s32 %s487, 1
    %p491 = scmp.eq.s32.totalorder %s25, 3
    %p492 = scmp.ne.s32.totalorder %s487, %s489
    %p493 = scmp.eq.s32.totalorder %s25, 0
    %p494 = por %p492, %p493
    %p495 = scmp.ne.s32.totalorder %s487, %s489
    %p496 = scmp.eq.s32.totalorder %s30, 3
    %p497 = por %p495, %p496
    %p498 = scmp.ne.s32.totalorder %s489, %s490
    %p499 = scmp.eq.s32.totalorder %s30, 0
    %p500 = por %p498, %p499
    %p501 = scmp.ne.s32.totalorder %s489, %s490
    %p502 = scmp.eq.s32.totalorder %s31, 3
    %p503 = por %p501, %p502
    %p505 = scmp.ne.s32.totalorder %s490, %s504
    %p506 = scmp.eq.s32.totalorder %s31, 0
    %p507 = por %p505, %p506
    %s509 = sadd.s32 %s508, 1
    %p512 = scmp.eq.s32.totalorder %s25, 3
    %p513 = scmp.ne.s32.totalorder %s508, %s510
    %p514 = scmp.eq.s32.totalorder %s25, 0
    %p515 = por %p513, %p514
    %p516 = scmp.ne.s32.totalorder %s508, %s510
    %p517 = scmp.eq.s32.totalorder %s30, 3
    %p518 = por %p516, %p517
    %p519 = scmp.ne.s32.totalorder %s510, %s511
    %p520 = scmp.eq.s32.totalorder %s30, 0
    %p521 = por %p519, %p520
    %p522 = scmp.ne.s32.totalorder %s510, %s511
    %p523 = scmp.eq.s32.totalorder %s31, 3
    %p524 = por %p522, %p523
    %p526 = scmp.ne.s32.totalorder %s511, %s525
    %p527 = scmp.eq.s32.totalorder %s31, 0
    %p528 = por %p526, %p527
    %s529 = ssub.s32 %s32, %s44
    %p530 = scmp.eq.s32.totalorder %s529, 0
    %s532 = sadd.s32 %s531, 1
    %s533 = scalar_select %p530, %s531, %s532
    %p536 = pneg %p530
    %p537 = scmp.eq.s32.totalorder %s25, 3
    %p538 = por %p536, %p537
    %p539 = scmp.ne.s32.totalorder %s531, %s534
    %p540 = scmp.eq.s32.totalorder %s25, 0
    %p541 = por %p539, %p540
    %p542 = scmp.ne.s32.totalorder %s531, %s534
    %p543 = scmp.eq.s32.totalorder %s30, 3
    %p544 = por %p542, %p543
    %p545 = scmp.ne.s32.totalorder %s534, %s535
    %p546 = scmp.eq.s32.totalorder %s30, 0
    %p547 = por %p545, %p546
    %p548 = scmp.ne.s32.totalorder %s534, %s535
    %p549 = scmp.eq.s32.totalorder %s31, 3
    %p550 = por %p548, %p549
    %p552 = scmp.ne.s32.totalorder %s535, %s551
    %p553 = scmp.eq.s32.totalorder %s31, 0
    %p554 = por %p552, %p553
    %p555 = scmp.le.s32.totalorder 1, %s25
    %p556 = scmp.lt.s32.totalorder %s25, 5
    %p557 = pnand %p555, %p556
    %p558 = pneg %p557
    // Predicated region
    $region9: #{transformer_decoder_forward.3} parent=5 // pred_check
      _
    $region10: #{transformer_decoder_forward.3} parent=5 // pred_check_branch
      %560 = sbr.rel (%p557) target = $region12
    $region11: #{transformer_decoder_forward.3} parent=5 // pred_region
      %s561 = ssub.s32 %s25, 1
      // Predicated region
      $region13: #{transformer_decoder_forward.3} parent=11 // pred_check
        %p562 = pneg %p500
      $region14: #{transformer_decoder_forward.3} parent=11 // pred_check_branch
        %564 = sbr.rel (%p562) target = $region16
      $region15: #{transformer_decoder_forward.3} parent=11 // pred_region
        _
      $region16: #{transformer_decoder_forward.3} parent=11 // pred_fallthru
        _
      // Predicated region
      $region17: #{transformer_decoder_forward.3} parent=11 // pred_check
        %p565 = pneg %p521
      $region18: #{transformer_decoder_forward.3} parent=11 // pred_check_branch
        %567 = sbr.rel (%p565) target = $region20
      $region19: #{transformer_decoder_forward.3} parent=11 // pred_region
        _
      $region20: #{transformer_decoder_forward.3} parent=11 // pred_fallthru
        _
    $region12: #{transformer_decoder_forward.3} parent=5 // pred_fallthru
      _
    %p568 = scmp.lt.s32.totalorder %s25, 4
    // Predicated region
    $region21: #{transformer_decoder_forward.3} parent=5 // pred_check
      %p569 = pneg %p568
    $region22: #{transformer_decoder_forward.3} parent=5 // pred_check_branch
      %571 = sbr.rel (%p569) target = $region24
    $region23: #{transformer_decoder_forward.3} parent=5 // pred_region
      // Predicated region
      $region25: #{transformer_decoder_forward.3} parent=23 // pred_check
        %p572 = pneg %p57
      $region26: #{transformer_decoder_forward.3} parent=23 // pred_check_branch
        %574 = sbr.rel (%p572) target = $region28
      $region27: #{transformer_decoder_forward.3} parent=23 // pred_region
        %p575 = scmp.lt.s32.totalorder %s32, 1
        %s576 = scalar_select %p575, %s32, 1
        %s577 = smul.addr %s576, 2
        %s578 = smul.addr %s577, 4
        %s579 = scalar_lea.vmem %s0, %s578
      $region28: #{transformer_decoder_forward.3} parent=23 // pred_fallthru
        _
      // Predicated region
      $region29: #{transformer_decoder_forward.3} parent=23 // pred_check
        %p580 = pneg %p83
      $region30: #{transformer_decoder_forward.3} parent=23 // pred_check_branch
        %582 = sbr.rel (%p580) target = $region32
      $region31: #{transformer_decoder_forward.3} parent=23 // pred_region
        %p583 = scmp.lt.s32.totalorder %s32, 1
        %s584 = scalar_select %p583, %s32, 1
        %s585 = smul.addr %s584, 4
        %s586 = scalar_lea.vmem %s1, %s585
      $region32: #{transformer_decoder_forward.3} parent=23 // pred_fallthru
        _
      // Predicated region
      $region33: #{transformer_decoder_forward.3} parent=23 // pred_check
        %p587 = pneg %p109
      $region34: #{transformer_decoder_forward.3} parent=23 // pred_check_branch
        %589 = sbr.rel (%p587) target = $region36
      $region35: #{transformer_decoder_forward.3} parent=23 // pred_region
        %p590 = scmp.lt.s32.totalorder %s33, 1
        %s591 = scalar_select %p590, %s33, 1
        %s592 = smul.addr %s591, 2
        %s593 = smul.addr %s592, 4
        %s594 = scalar_lea.vmem %s2, %s593
      $region36: #{transformer_decoder_forward.3} parent=23 // pred_fallthru
        _
      // Predicated region
      $region37: #{transformer_decoder_forward.3} parent=23 // pred_check
        %p595 = pneg %p135
      $region38: #{transformer_decoder_forward.3} parent=23 // pred_check_branch
        %597 = sbr.rel (%p595) target = $region40
      $region39: #{transformer_decoder_forward.3} parent=23 // pred_region
        %p598 = scmp.lt.s32.totalorder %s33, 1
        %s599 = scalar_select %p598, %s33, 1
        %s600 = scalar_lea.vmem %s3, %s599
      $region40: #{transformer_decoder_forward.3} parent=23 // pred_fallthru
        _
      // Predicated region
      $region41: #{transformer_decoder_forward.3} parent=23 // pred_check
        %p601 = pneg %p161
      $region42: #{transformer_decoder_forward.3} parent=23 // pred_check_branch
        %603 = sbr.rel (%p601) target = $region44
      $region43: #{transformer_decoder_forward.3} parent=23 // pred_region
        %p604 = scmp.lt.s32.totalorder %s33, 1
        %s605 = scalar_select %p604, %s33, 1
        %s606 = smul.addr %s605, 2
        %s607 = smul.addr %s606, 4
        %s608 = scalar_lea.vmem %s4, %s607
      $region44: #{transformer_decoder_forward.3} parent=23 // pred_fallthru
        _
      // Predicated region
      $region45: #{transformer_decoder_forward.3} parent=23 // pred_check
        %p609 = pneg %p187
      $region46: #{transformer_decoder_forward.3} parent=23 // pred_check_branch
        %611 = sbr.rel (%p609) target = $region48
      $region47: #{transformer_decoder_forward.3} parent=23 // pred_region
        %p612 = scmp.lt.s32.totalorder %s33, 1
        %s613 = scalar_select %p612, %s33, 1
        %s614 = scalar_lea.vmem %s5, %s613
      $region48: #{transformer_decoder_forward.3} parent=23 // pred_fallthru
        _
      // Predicated region
      $region49: #{transformer_decoder_forward.3} parent=23 // pred_check
        %p615 = pneg %p213
      $region50: #{transformer_decoder_forward.3} parent=23 // pred_check_branch
        %617 = sbr.rel (%p615) target = $region52
      $region51: #{transformer_decoder_forward.3} parent=23 // pred_region
        %p618 = scmp.lt.s32.totalorder %s33, 1
        %s619 = scalar_select %p618, %s33, 1
        %s620 = smul.addr %s619, 2
        %s621 = smul.addr %s620, 4
        %s622 = scalar_lea.vmem %s6, %s621
      $region52: #{transformer_decoder_forward.3} parent=23 // pred_fallthru
        _
      // Predicated region
      $region53: #{transformer_decoder_forward.3} parent=23 // pred_check
        %p623 = pneg %p239
      $region54: #{transformer_decoder_forward.3} parent=23 // pred_check_branch
        %625 = sbr.rel (%p623) target = $region56
      $region55: #{transformer_decoder_forward.3} parent=23 // pred_region
        %p626 = scmp.lt.s32.totalorder %s33, 1
        %s627 = scalar_select %p626, %s33, 1
        %s628 = scalar_lea.vmem %s7, %s627
      $region56: #{transformer_decoder_forward.3} parent=23 // pred_fallthru
        _
      // Predicated region
      $region57: #{transformer_decoder_forward.3} parent=23 // pred_check
        %p629 = pneg %p265
      $region58: #{transformer_decoder_forward.3} parent=23 // pred_check_branch
        %631 = sbr.rel (%p629) target = $region60
      $region59: #{transformer_decoder_forward.3} parent=23 // pred_region
        %p632 = scmp.lt.s32.totalorder %s33, 1
        %s633 = scalar_select %p632, %s33, 1
        %s634 = smul.addr %s633, 2
        %s635 = smul.addr %s634, 4
        %s636 = scalar_lea.vmem %s8, %s635
      $region60: #{transformer_decoder_forward.3} parent=23 // pred_fallthru
        _
      // Predicated region
      $region61: #{transformer_decoder_forward.3} parent=23 // pred_check
        %p637 = pneg %p291
      $region62: #{transformer_decoder_forward.3} parent=23 // pred_check_branch
        %639 = sbr.rel (%p637) target = $region64
      $region63: #{transformer_decoder_forward.3} parent=23 // pred_region
        %p640 = scmp.lt.s32.totalorder %s33, 1
        %s641 = scalar_select %p640, %s33, 1
        %s642 = scalar_lea.vmem %s9, %s641
      $region64: #{transformer_decoder_forward.3} parent=23 // pred_fallthru
        _
      // Predicated region
      $region65: #{transformer_decoder_forward.3} parent=23 // pred_check
        %p643 = pneg %p317
      $region66: #{transformer_decoder_forward.3} parent=23 // pred_check_branch
        %645 = sbr.rel (%p643) target = $region68
      $region67: #{transformer_decoder_forward.3} parent=23 // pred_region
        %p646 = scmp.lt.s32.totalorder %s33, 1
        %s647 = scalar_select %p646, %s33, 1
        %s648 = smul.addr %s647, 2
        %s649 = smul.addr %s648, 4
        %s650 = scalar_lea.vmem %s10, %s649
      $region68: #{transformer_decoder_forward.3} parent=23 // pred_fallthru
        _
      // Predicated region
      $region69: #{transformer_decoder_forward.3} parent=23 // pred_check
        %p651 = pneg %p343
      $region70: #{transformer_decoder_forward.3} parent=23 // pred_check_branch
        %653 = sbr.rel (%p651) target = $region72
      $region71: #{transformer_decoder_forward.3} parent=23 // pred_region
        %p654 = scmp.lt.s32.totalorder %s33, 1
        %s655 = scalar_select %p654, %s33, 1
        %s656 = scalar_lea.vmem %s11, %s655
      $region72: #{transformer_decoder_forward.3} parent=23 // pred_fallthru
        _
      // Predicated region
      $region73: #{transformer_decoder_forward.3} parent=23 // pred_check
        %p657 = pneg %p369
      $region74: #{transformer_decoder_forward.3} parent=23 // pred_check_branch
        %659 = sbr.rel (%p657) target = $region76
      $region75: #{transformer_decoder_forward.3} parent=23 // pred_region
        %p660 = scmp.lt.s32.totalorder %s33, 1
        %s661 = scalar_select %p660, %s33, 1
        %s662 = smul.addr %s661, 2
        %s663 = smul.addr %s662, 4
        %s664 = scalar_lea.vmem %s12, %s663
      $region76: #{transformer_decoder_forward.3} parent=23 // pred_fallthru
        _
      // Predicated region
      $region77: #{transformer_decoder_forward.3} parent=23 // pred_check
        %p665 = pneg %p395
      $region78: #{transformer_decoder_forward.3} parent=23 // pred_check_branch
        %667 = sbr.rel (%p665) target = $region80
      $region79: #{transformer_decoder_forward.3} parent=23 // pred_region
        %p668 = scmp.lt.s32.totalorder %s33, 1
        %s669 = scalar_select %p668, %s33, 1
        %s670 = scalar_lea.vmem %s13, %s669
      $region80: #{transformer_decoder_forward.3} parent=23 // pred_fallthru
        _
      // Predicated region
      $region81: #{transformer_decoder_forward.3} parent=23 // pred_check
        %p671 = pneg %p421
      $region82: #{transformer_decoder_forward.3} parent=23 // pred_check_branch
        %673 = sbr.rel (%p671) target = $region84
      $region83: #{transformer_decoder_forward.3} parent=23 // pred_region
        %p674 = scmp.lt.s32.totalorder %s33, 1
        %s675 = scalar_select %p674, %s33, 1
        %s676 = smul.addr %s675, 16
        %s677 = smul.addr %s676, 4
        %s678 = scalar_lea.vmem %s14, %s677
      $region84: #{transformer_decoder_forward.3} parent=23 // pred_fallthru
        _
      // Predicated region
      $region85: #{transformer_decoder_forward.3} parent=23 // pred_check
        %p679 = pneg %p447
      $region86: #{transformer_decoder_forward.3} parent=23 // pred_check_branch
        %681 = sbr.rel (%p679) target = $region88
      $region87: #{transformer_decoder_forward.3} parent=23 // pred_region
        %p682 = scmp.lt.s32.totalorder %s33, 1
        %s683 = scalar_select %p682, %s33, 1
        %s684 = scalar_lea.vmem %s15, %s683
      $region88: #{transformer_decoder_forward.3} parent=23 // pred_fallthru
        _
      // Predicated region
      $region89: #{transformer_decoder_forward.3} parent=23 // pred_check
        %p685 = pneg %p473
      $region90: #{transformer_decoder_forward.3} parent=23 // pred_check_branch
        %687 = sbr.rel (%p685) target = $region92
      $region91: #{transformer_decoder_forward.3} parent=23 // pred_region
        %p688 = scmp.lt.s32.totalorder %s33, 1
        %s689 = scalar_select %p688, %s33, 1
        %s690 = smul.addr %s689, 8
        %s691 = scalar_lea.vmem %s16, %s690
      $region92: #{transformer_decoder_forward.3} parent=23 // pred_fallthru
        _
    $region24: #{transformer_decoder_forward.3} parent=5 // pred_fallthru
      _
    %p692 = scmp.le.s32.totalorder 1, %s25
    %p693 = scmp.lt.s32.totalorder %s25, 5
    %p694 = pnand %p692, %p693
    %p695 = pneg %p694
    // Predicated region
    $region93: #{transformer_decoder_forward.3} parent=5 // pred_check
      _
    $region94: #{transformer_decoder_forward.3} parent=5 // pred_check_branch
      %697 = sbr.rel (%p694) target = $region96
    $region95: #{transformer_decoder_forward.3} parent=5 // pred_region
      %s698 = ssub.s32 %s25, 1
      %p699 = scmp.lt.s32.totalorder %s34, 1
      %s700 = scalar_select %p699, %s34, 1
      %s701 = smul.addr %s700, 2
      %s702 = smul.addr %s701, 4
      %s703 = scalar_lea.vmem %s0, %s702
      %p704 = pneg %p63
      %p705 = pneg %p60
      %p706 = scmp.lt.s32.totalorder %s34, 1
      %s707 = scalar_select %p706, %s34, 1
      %s708 = smul.addr %s707, 4
      %s709 = scalar_lea.vmem %s1, %s708
      %p710 = pneg %p89
      %p711 = pneg %p86
      %p712 = scmp.lt.s32.totalorder %s35, 1
      %s713 = scalar_select %p712, %s35, 1
      %s714 = smul.addr %s713, 2
      %s715 = smul.addr %s714, 4
      %s716 = scalar_lea.vmem %s2, %s715
      %p717 = pneg %p115
      %p718 = pneg %p112
      %p719 = scmp.lt.s32.totalorder %s35, 1
      %s720 = scalar_select %p719, %s35, 1
      %s721 = scalar_lea.vmem %s3, %s720
      %p722 = pneg %p141
      %p723 = pneg %p138
      %p724 = scmp.lt.s32.totalorder %s35, 1
      %s725 = scalar_select %p724, %s35, 1
      %s726 = smul.addr %s725, 2
      %s727 = smul.addr %s726, 4
      %s728 = scalar_lea.vmem %s4, %s727
      %p729 = pneg %p167
      %p730 = pneg %p164
      %p731 = scmp.lt.s32.totalorder %s35, 1
      %s732 = scalar_select %p731, %s35, 1
      %s733 = scalar_lea.vmem %s5, %s732
      %p734 = pneg %p193
      %p735 = pneg %p190
      %p736 = scmp.lt.s32.totalorder %s35, 1
      %s737 = scalar_select %p736, %s35, 1
      %s738 = smul.addr %s737, 2
      %s739 = smul.addr %s738, 4
      %s740 = scalar_lea.vmem %s6, %s739
      %p741 = pneg %p219
      %p742 = pneg %p216
      %p743 = scmp.lt.s32.totalorder %s35, 1
      %s744 = scalar_select %p743, %s35, 1
      %s745 = scalar_lea.vmem %s7, %s744
      %p746 = pneg %p245
      %p747 = pneg %p242
      %p748 = scmp.lt.s32.totalorder %s35, 1
      %s749 = scalar_select %p748, %s35, 1
      %s750 = smul.addr %s749, 2
      %s751 = smul.addr %s750, 4
      %s752 = scalar_lea.vmem %s8, %s751
      %p753 = pneg %p271
      %p754 = pneg %p268
      %p755 = scmp.lt.s32.totalorder %s35, 1
      %s756 = scalar_select %p755, %s35, 1
      %s757 = scalar_lea.vmem %s9, %s756
      %p758 = pneg %p297
      %p759 = pneg %p294
      %p760 = scmp.lt.s32.totalorder %s35, 1
      %s761 = scalar_select %p760, %s35, 1
      %s762 = smul.addr %s761, 2
      %s763 = smul.addr %s762, 4
      %s764 = scalar_lea.vmem %s10, %s763
      %p765 = pneg %p323
      %p766 = pneg %p320
      %p767 = scmp.lt.s32.totalorder %s35, 1
      %s768 = scalar_select %p767, %s35, 1
      %s769 = scalar_lea.vmem %s11, %s768
      %p770 = pneg %p349
      %p771 = pneg %p346
      %p772 = scmp.lt.s32.totalorder %s35, 1
      %s773 = scalar_select %p772, %s35, 1
      %s774 = smul.addr %s773, 2
      %s775 = smul.addr %s774, 4
      %s776 = scalar_lea.vmem %s12, %s775
      %p777 = pneg %p375
      %p778 = pneg %p372
      %p779 = scmp.lt.s32.totalorder %s35, 1
      %s780 = scalar_select %p779, %s35, 1
      %s781 = scalar_lea.vmem %s13, %s780
      %p782 = pneg %p401
      %p783 = pneg %p398
      %p784 = scmp.lt.s32.totalorder %s35, 1
      %s785 = scalar_select %p784, %s35, 1
      %s786 = smul.addr %s785, 16
      %s787 = smul.addr %s786, 4
      %s788 = scalar_lea.vmem %s14, %s787
      %p789 = pneg %p427
      %p790 = pneg %p424
      %p791 = scmp.lt.s32.totalorder %s35, 1
      %s792 = scalar_select %p791, %s35, 1
      %s793 = scalar_lea.vmem %s15, %s792
      %p794 = pneg %p453
      %p795 = pneg %p450
      %p796 = scmp.lt.s32.totalorder %s35, 1
      %s797 = scalar_select %p796, %s35, 1
      %s798 = smul.addr %s797, 8
      %s799 = scalar_lea.vmem %s16, %s798
      %p800 = pneg %p479
      %p801 = pneg %p476
      %p802 = pneg %p500
      %p803 = pneg %p497
      %p804 = pneg %p521
      %p805 = pneg %p518
      %p806 = pneg %p547
      %p807 = pneg %p544
      %p808 = scmp.lt.s32.totalorder %s34, 1
      %s809 = scalar_select %p808, %s34, 1
      %s810 = smul.addr %s809, 2
      %s811 = smul.addr %s810, 8
      %s812 = scalar_lea.vmem %s19, %s811
      %p813 = scmp.lt.s32.totalorder %s34, 1
      %s814 = scalar_select %p813, %s34, 1
      %s815 = smul.addr %s814, 2
      %s816 = smul.addr %s815, 4
      %s817 = scalar_lea.vmem %s0, %s816
      %p818 = scmp.lt.s32.totalorder %s34, 1
      %s819 = scalar_select %p818, %s34, 1
      %s820 = smul.addr %s819, 4
      %s821 = scalar_lea.vmem %s1, %s820
      %p822 = scmp.lt.s32.totalorder %s35, 1
      %s823 = scalar_select %p822, %s35, 1
      %s824 = smul.addr %s823, 2
      %s825 = smul.addr %s824, 4
      %s826 = scalar_lea.vmem %s2, %s825
      %p827 = scmp.lt.s32.totalorder %s35, 1
      %s828 = scalar_select %p827, %s35, 1
      %s829 = scalar_lea.vmem %s3, %s828
      %p830 = scmp.lt.s32.totalorder %s35, 1
      %s831 = scalar_select %p830, %s35, 1
      %s832 = smul.addr %s831, 2
      %s833 = smul.addr %s832, 4
      %s834 = scalar_lea.vmem %s4, %s833
      %p835 = scmp.lt.s32.totalorder %s35, 1
      %s836 = scalar_select %p835, %s35, 1
      %s837 = scalar_lea.vmem %s5, %s836
      %p838 = scmp.lt.s32.totalorder %s35, 1
      %s839 = scalar_select %p838, %s35, 1
      %s840 = smul.addr %s839, 2
      %s841 = smul.addr %s840, 4
      %s842 = scalar_lea.vmem %s6, %s841
      %p843 = scmp.lt.s32.totalorder %s35, 1
      %s844 = scalar_select %p843, %s35, 1
      %s845 = scalar_lea.vmem %s7, %s844
      %p846 = scmp.lt.s32.totalorder %s35, 1
      %s847 = scalar_select %p846, %s35, 1
      %s848 = smul.addr %s847, 2
      %s849 = smul.addr %s848, 4
      %s850 = scalar_lea.vmem %s8, %s849
      %p851 = scmp.lt.s32.totalorder %s35, 1
      %s852 = scalar_select %p851, %s35, 1
      %s853 = scalar_lea.vmem %s9, %s852
      %p854 = scmp.lt.s32.totalorder %s35, 1
      %s855 = scalar_select %p854, %s35, 1
      %s856 = smul.addr %s855, 2
      %s857 = smul.addr %s856, 4
      %s858 = scalar_lea.vmem %s10, %s857
      %p859 = scmp.lt.s32.totalorder %s35, 1
      %s860 = scalar_select %p859, %s35, 1
      %s861 = scalar_lea.vmem %s11, %s860
      %p862 = scmp.lt.s32.totalorder %s35, 1
      %s863 = scalar_select %p862, %s35, 1
      %s864 = smul.addr %s863, 2
      %s865 = smul.addr %s864, 4
      %s866 = scalar_lea.vmem %s12, %s865
      %p867 = scmp.lt.s32.totalorder %s35, 1
      %s868 = scalar_select %p867, %s35, 1
      %s869 = scalar_lea.vmem %s13, %s868
      %p870 = scmp.lt.s32.totalorder %s35, 1
      %s871 = scalar_select %p870, %s35, 1
      %s872 = smul.addr %s871, 16
      %s873 = smul.addr %s872, 4
      %s874 = scalar_lea.vmem %s14, %s873
      %p875 = scmp.lt.s32.totalorder %s35, 1
      %s876 = scalar_select %p875, %s35, 1
      %s877 = scalar_lea.vmem %s15, %s876
      %p878 = scmp.lt.s32.totalorder %s35, 1
      %s879 = scalar_select %p878, %s35, 1
      %s880 = smul.addr %s879, 8
      %s881 = scalar_lea.vmem %s16, %s880
      %p882 = scmp.lt.s32.totalorder %s34, 1
      %s883 = scalar_select %p882, %s34, 1
      %s884 = smul.addr %s883, 2
      %s885 = smul.addr %s884, 8
      %s886 = scalar_lea.vmem %s19, %s885
      %p888 = scmp.eq.s32.totalorder %s35, 0
      // Predicated region
      $region97: #{transformer_decoder_forward.3} parent=95 // pred_check
        %p889 = pneg %p888
      $region98: #{transformer_decoder_forward.3} parent=95 // pred_check_branch
        %891 = sbr.rel (%p889) target = $region100
      $region99: #{transformer_decoder_forward.3} parent=95 // pred_region
        %v892 = vld [vmem:[%s817] sm:$0xf]
        %v893 = vld [vmem:[%s817 + $0x4] sm:$0xf]
        %v896 = vunpack.c.l.b16 %v892
        %v897 = vunpack.c.l.b16 %v893
        %v898 = vpack.c.b16 %v897, %v896
        %vm900 = vcmask 130048
        %901 = vst.msk [vmem:[#allocation2] sm:$0xff] %vm900, %v898
      $region100: #{transformer_decoder_forward.3} parent=95 // pred_fallthru
        _
      %v902 = vld [vmem:[#allocation2] sm:$0xff]
      %v903 = vunpack.c.l.bf16 %v902
      %v904 = vunpack.c.h.bf16 %v902
      %v905 = vld [vmem:[%s821] sm:$0xf]
      %v906 = vld [vmem:[%s881] sm:$0x3f]
      %v907 = vld [vmem:[%s826] sm:$0xf]
      %v908 = vld [vmem:[%s826 + $0x4] sm:$0xf]
      %v909 = vld [vmem:[%s829] sm:$0x1]
      %v911 = vlaneseq
      %v912 = vshrl.u32 %v911, 7
      %v913 = vsub.s32 0, %v912
      %v914 = vrot.slane %v909, %v913
      %v918 = vunpack.c.l.b16 %v907
      %v919 = vunpack.c.l.b16 %v908
      %v920 = vpack.c.b16 %v919, %v918
      %vm922 = vcmask 130048
      %v924 = vsel %vm922, %v902, 0
      %926 = vmatprep.subr.bf16.mxu0 0
      %927 = vmatpush1.bf16.msra.mxu0 %v920
      %928 = vmatprep.subr.bf16.mxu0 0
      %929 = vmatpush1.bf16.msra.mxu0 0
      %930 = vmatprep.subr.bf16.mxu0 0
      %931 = vmatpush1.bf16.msra.mxu0 0
      %932 = vmatprep.subr.bf16.mxu0 0
      %933 = vmatpush1.bf16.msra.mxu0 0
      %934 = vmatprep.subr.bf16.mxu0 0
      %935 = vmatpush1.bf16.msra.mxu0 0
      %936 = vmatprep.subr.bf16.mxu0 0
      %937 = vmatpush1.bf16.msra.mxu0 0
      %938 = vmatprep.subr.bf16.mxu0 0
      %939 = vmatpush1.bf16.msra.mxu0 0
      %940 = vmatprep.subr.bf16.mxu0 0
      %941 = vmatpush1.bf16.msra.mxu0 0
      %942 = vmatprep.subr.bf16.mxu0 0
      %943 = vmatpush1.bf16.msra.mxu0 0
      %944 = vmatprep.subr.bf16.mxu0 0
      %945 = vmatpush1.bf16.msra.mxu0 0
      %946 = vmatprep.subr.bf16.mxu0 0
      %947 = vmatpush1.bf16.msra.mxu0 0
      %948 = vmatprep.subr.bf16.mxu0 0
      %949 = vmatpush1.bf16.msra.mxu0 0
      %950 = vmatprep.subr.bf16.mxu0 0
      %951 = vmatpush1.bf16.msra.mxu0 0
      %952 = vmatprep.subr.bf16.mxu0 0
      %953 = vmatpush1.bf16.msra.mxu0 0
      %954 = vmatprep.subr.bf16.mxu0 0
      %955 = vmatpush1.bf16.msra.mxu0 0
      %956 = vmatprep.subr.bf16.mxu0 0
      %957 = vmatpush1.bf16.msra.mxu0 0
      %958 = vmatprep.mubr.bf16.mxu0 0
      %959 = vmatmul.mubr.bf16.gmra.mrb[0].mxu0 %v924
      %v960 = vpop.f32.mrb[0].mxu0
      %v961 = vadd.f32 %v914, %v960
      %v962 = vpop.f32.mrb[0].mxu0
      %v963 = vpop.f32.mrb[0].mxu0
      %v964 = vadd.f32 %v914, %v963
      %v965 = vpop.f32.mrb[0].mxu0
      %966 = vdwg.mxu0
      %v967 = vld [vmem:[%s834] sm:$0xf]
      %v968 = vld [vmem:[%s834 + $0x4] sm:$0xf]
      %v969 = vpack.c.bf16 %v964, %v961
      %971 = vrot.lane.b32.xlu0 %v969, 112
      %v972 = vpop.permute.xlu0 %971
      %vm973 = vcmask 31744
      %v975 = vsel %vm973, %v969, 0
      %v978 = vsel %vm973, %v972, 0
      %980 = vmatprep.subr.bf16.mxu0 0
      %981 = vmatpush1.bf16.xpose.msra.mxu0 %v978
      %982 = vmatprep.subr.bf16.mxu0 0
      %983 = vmatpush1.bf16.xpose.msra.mxu0 0
      %984 = vmatprep.subr.bf16.mxu0 0
      %985 = vmatpush1.bf16.xpose.msra.mxu0 0
      %986 = vmatprep.subr.bf16.mxu0 0
      %987 = vmatpush1.bf16.xpose.msra.mxu0 0
      %988 = vmatprep.subr.bf16.mxu0 0
      %989 = vmatpush1.bf16.xpose.msra.mxu0 0
      %990 = vmatprep.subr.bf16.mxu0 0
      %991 = vmatpush1.bf16.xpose.msra.mxu0 0
      %992 = vmatprep.subr.bf16.mxu0 0
      %993 = vmatpush1.bf16.xpose.msra.mxu0 0
      %994 = vmatprep.subr.bf16.mxu0 0
      %995 = vmatpush1.bf16.xpose.msra.mxu0 0
      %996 = vmatprep.subr.bf16.mxu0 0
      %997 = vmatpush1.bf16.xpose.msra.mxu0 0
      %998 = vmatprep.subr.bf16.mxu0 0
      %999 = vmatpush1.bf16.xpose.msra.mxu0 0
      %1000 = vmatprep.subr.bf16.mxu0 0
      %1001 = vmatpush1.bf16.xpose.msra.mxu0 0
      %1002 = vmatprep.subr.bf16.mxu0 0
      %1003 = vmatpush1.bf16.xpose.msra.mxu0 0
      %1004 = vmatprep.subr.bf16.mxu0 0
      %1005 = vmatpush1.bf16.xpose.msra.mxu0 0
      %1006 = vmatprep.subr.bf16.mxu0 0
      %1007 = vmatpush1.bf16.xpose.msra.mxu0 0
      %1008 = vmatprep.subr.bf16.mxu0 0
      %1009 = vmatpush1.bf16.xpose.msra.mxu0 0
      %1010 = vmatprep.subr.bf16.mxu0 0
      %1011 = vmatpush1.bf16.xpose.msra.mxu0 0
      %1012 = vmatprep.mubr.bf16.mxu0 0
      %1013 = vmatmul.mubr.bf16.gmra.mrb[0].mxu0 %v975
      %v1014 = vpop.f32.mrb[0].mxu0
      %v1015 = vadd.f32 0.0, %v1014
      %v1016 = vpop.f32.mrb[0].mxu0
      %v1017 = vpop.f32.mrb[0].mxu0
      %v1018 = vadd.f32 0.0, %v1017
      %v1019 = vpop.f32.mrb[0].mxu0
      %1020 = vdwg.mxu0
      %v1021 = vsel %vm922, %v1015, -inf
      %1022 = vmax.xlane.f32.xlu0 %v1021
      %v1023 = vpop.xlane.xlu0 %1022
      %v1024 = vsel %vm922, %v1018, -inf
      %1025 = vmax.xlane.f32.xlu0 %v1024
      %v1026 = vpop.xlane.xlu0 %1025
      %v1027 = vsub.f32 %v1015, %v1023
      %v1028 = vsub.f32 %v1018, %v1026
      %v1029 = vmul.f32 %v1027, 1.442695
      %v1030 = vpow.pop %v1029
      %v1031 = vmul.f32 %v1028, 1.442695
      %v1032 = vpow.pop %v1031
      %v1033 = vsel %vm922, %v1030, 0.0
      %1034 = vadd.xlane.f32.xlu0 %v1033
      %v1035 = vpop.xlane.xlu0 %1034
      %v1036 = vsel %vm922, %v1032, 0.0
      %1037 = vadd.xlane.f32.xlu0 %v1036
      %v1038 = vpop.xlane.xlu0 %1037
      %v1039 = vrcp.pop %v1035
      %v1040 = vrcp.pop %v1038
      %v1041 = vmul.f32 %v1030, %v1039
      %v1042 = vmul.f32 %v1032, %v1040
      %v1043 = vpack.c.bf16 %v1042, %v1041
      %1044 = vrot.lane.b32.xlu0 %v969, 96
      %v1045 = vpop.permute.xlu0 %1044
      %v1048 = vsel %vm922, %v1043, 0
      %1050 = vmatprep.subr.bf16.mxu0 0
      %1051 = vmatpush1.bf16.msra.mxu0 %v1045
      %1052 = vmatprep.subr.bf16.mxu0 0
      %1053 = vmatpush1.bf16.msra.mxu0 0
      %1054 = vmatprep.subr.bf16.mxu0 0
      %1055 = vmatpush1.bf16.msra.mxu0 0
      %1056 = vmatprep.subr.bf16.mxu0 0
      %1057 = vmatpush1.bf16.msra.mxu0 0
      %1058 = vmatprep.subr.bf16.mxu0 0
      %1059 = vmatpush1.bf16.msra.mxu0 0
      %1060 = vmatprep.subr.bf16.mxu0 0
      %1061 = vmatpush1.bf16.msra.mxu0 0
      %1062 = vmatprep.subr.bf16.mxu0 0
      %1063 = vmatpush1.bf16.msra.mxu0 0
      %1064 = vmatprep.subr.bf16.mxu0 0
      %1065 = vmatpush1.bf16.msra.mxu0 0
      %1066 = vmatprep.subr.bf16.mxu0 0
      %1067 = vmatpush1.bf16.msra.mxu0 0
      %1068 = vmatprep.subr.bf16.mxu0 0
      %1069 = vmatpush1.bf16.msra.mxu0 0
      %1070 = vmatprep.subr.bf16.mxu0 0
      %1071 = vmatpush1.bf16.msra.mxu0 0
      %1072 = vmatprep.subr.bf16.mxu0 0
      %1073 = vmatpush1.bf16.msra.mxu0 0
      %1074 = vmatprep.subr.bf16.mxu0 0
      %1075 = vmatpush1.bf16.msra.mxu0 0
      %1076 = vmatprep.subr.bf16.mxu0 0
      %1077 = vmatpush1.bf16.msra.mxu0 0
      %1078 = vmatprep.subr.bf16.mxu0 0
      %1079 = vmatpush1.bf16.msra.mxu0 0
      %1080 = vmatprep.subr.bf16.mxu0 0
      %1081 = vmatpush1.bf16.msra.mxu0 0
      %1082 = vmatprep.mubr.bf16.mxu0 0
      %1083 = vmatmul.mubr.bf16.gmra.mrb[0].mxu0 %v1048
      %v1084 = vpop.f32.mrb[0].mxu0
      %v1085 = vadd.f32 0.0, %v1084
      %v1086 = vpop.f32.mrb[0].mxu0
      %v1087 = vpop.f32.mrb[0].mxu0
      %v1088 = vadd.f32 0.0, %v1087
      %v1089 = vpop.f32.mrb[0].mxu0
      %1090 = vdwg.mxu0
      %v1091 = vpack.c.bf16 %v1088, %v1085
      %1092 = vrot.lane.b32.xlu0 %v969, 124
      %v1093 = vpop.permute.xlu0 %1092
      %1094 = vrot.lane.b32.xlu0 %v969, 108
      %v1095 = vpop.permute.xlu0 %1094
      %v1097 = vsel %vm973, %v1093, 0
      %v1100 = vsel %vm973, %v1095, 0
      %1102 = vmatprep.subr.bf16.mxu0 0
      %1103 = vmatpush1.bf16.xpose.msra.mxu0 %v1100
      %1104 = vmatprep.subr.bf16.mxu0 0
      %1105 = vmatpush1.bf16.xpose.msra.mxu0 0
      %1106 = vmatprep.subr.bf16.mxu0 0
      %1107 = vmatpush1.bf16.xpose.msra.mxu0 0
      %1108 = vmatprep.subr.bf16.mxu0 0
      %1109 = vmatpush1.bf16.xpose.msra.mxu0 0
      %1110 = vmatprep.subr.bf16.mxu0 0
      %1111 = vmatpush1.bf16.xpose.msra.mxu0 0
      %1112 = vmatprep.subr.bf16.mxu0 0
      %1113 = vmatpush1.bf16.xpose.msra.mxu0 0
      %1114 = vmatprep.subr.bf16.mxu0 0
      %1115 = vmatpush1.bf16.xpose.msra.mxu0 0
      %1116 = vmatprep.subr.bf16.mxu0 0
      %1117 = vmatpush1.bf16.xpose.msra.mxu0 0
      %1118 = vmatprep.subr.bf16.mxu0 0
      %1119 = vmatpush1.bf16.xpose.msra.mxu0 0
      %1120 = vmatprep.subr.bf16.mxu0 0
      %1121 = vmatpush1.bf16.xpose.msra.mxu0 0
      %1122 = vmatprep.subr.bf16.mxu0 0
      %1123 = vmatpush1.bf16.xpose.msra.mxu0 0
      %1124 = vmatprep.subr.bf16.mxu0 0
      %1125 = vmatpush1.bf16.xpose.msra.mxu0 0
      %1126 = vmatprep.subr.bf16.mxu0 0
      %1127 = vmatpush1.bf16.xpose.msra.mxu0 0
      %1128 = vmatprep.subr.bf16.mxu0 0
      %1129 = vmatpush1.bf16.xpose.msra.mxu0 0
      %1130 = vmatprep.subr.bf16.mxu0 0
      %1131 = vmatpush1.bf16.xpose.msra.mxu0 0
      %1132 = vmatprep.subr.bf16.mxu0 0
      %1133 = vmatpush1.bf16.xpose.msra.mxu0 0
      %1134 = vmatprep.mubr.bf16.mxu0 0
      %1135 = vmatmul.mubr.bf16.gmra.mrb[0].mxu0 %v1097
      %v1136 = vpop.f32.mrb[0].mxu0
      %v1137 = vadd.f32 0.0, %v1136
      %v1138 = vpop.f32.mrb[0].mxu0
      %v1139 = vpop.f32.mrb[0].mxu0
      %v1140 = vadd.f32 0.0, %v1139
      %v1141 = vpop.f32.mrb[0].mxu0
      %1142 = vdwg.mxu0
      %v1143 = vsel %vm922, %v1137, -inf
      %1144 = vmax.xlane.f32.xlu0 %v1143
      %v1145 = vpop.xlane.xlu0 %1144
      %v1146 = vsel %vm922, %v1140, -inf
      %1147 = vmax.xlane.f32.xlu0 %v1146
      %v1148 = vpop.xlane.xlu0 %1147
      %v1149 = vsub.f32 %v1137, %v1145
      %v1150 = vsub.f32 %v1140, %v1148
      %v1151 = vmul.f32 %v1149, 1.442695
      %v1152 = vpow.pop %v1151
      %v1153 = vmul.f32 %v1150, 1.442695
      %v1154 = vpow.pop %v1153
      %v1155 = vsel %vm922, %v1152, 0.0
      %1156 = vadd.xlane.f32.xlu0 %v1155
      %v1157 = vpop.xlane.xlu0 %1156
      %v1158 = vsel %vm922, %v1154, 0.0
      %1159 = vadd.xlane.f32.xlu0 %v1158
      %v1160 = vpop.xlane.xlu0 %1159
      %v1161 = vrcp.pop %v1157
      %v1162 = vrcp.pop %v1160
      %v1163 = vmul.f32 %v1152, %v1161
      %v1164 = vmul.f32 %v1154, %v1162
      %v1165 = vpack.c.bf16 %v1164, %v1163
      %1166 = vrot.lane.b32.xlu0 %v969, 92
      %v1167 = vpop.permute.xlu0 %1166
      %v1170 = vsel %vm922, %v1165, 0
      %1172 = vmatprep.subr.bf16.mxu0 0
      %1173 = vmatpush1.bf16.msra.mxu0 %v1167
      %1174 = vmatprep.subr.bf16.mxu0 0
      %1175 = vmatpush1.bf16.msra.mxu0 0
      %1176 = vmatprep.subr.bf16.mxu0 0
      %1177 = vmatpush1.bf16.msra.mxu0 0
      %1178 = vmatprep.subr.bf16.mxu0 0
      %1179 = vmatpush1.bf16.msra.mxu0 0
      %1180 = vmatprep.subr.bf16.mxu0 0
      %1181 = vmatpush1.bf16.msra.mxu0 0
      %1182 = vmatprep.subr.bf16.mxu0 0
      %1183 = vmatpush1.bf16.msra.mxu0 0
      %1184 = vmatprep.subr.bf16.mxu0 0
      %1185 = vmatpush1.bf16.msra.mxu0 0
      %1186 = vmatprep.subr.bf16.mxu0 0
      %1187 = vmatpush1.bf16.msra.mxu0 0
      %1188 = vmatprep.subr.bf16.mxu0 0
      %1189 = vmatpush1.bf16.msra.mxu0 0
      %1190 = vmatprep.subr.bf16.mxu0 0
      %1191 = vmatpush1.bf16.msra.mxu0 0
      %1192 = vmatprep.subr.bf16.mxu0 0
      %1193 = vmatpush1.bf16.msra.mxu0 0
      %1194 = vmatprep.subr.bf16.mxu0 0
      %1195 = vmatpush1.bf16.msra.mxu0 0
      %1196 = vmatprep.subr.bf16.mxu0 0
      %1197 = vmatpush1.bf16.msra.mxu0 0
      %1198 = vmatprep.subr.bf16.mxu0 0
      %1199 = vmatpush1.bf16.msra.mxu0 0
      %1200 = vmatprep.subr.bf16.mxu0 0
      %1201 = vmatpush1.bf16.msra.mxu0 0
      %1202 = vmatprep.subr.bf16.mxu0 0
      %1203 = vmatpush1.bf16.msra.mxu0 0
      %1204 = vmatprep.mubr.bf16.mxu0 0
      %1205 = vmatmul.mubr.bf16.gmra.mrb[0].mxu0 %v1170
      %v1206 = vpop.f32.mrb[0].mxu0
      %v1207 = vadd.f32 0.0, %v1206
      %v1208 = vpop.f32.mrb[0].mxu0
      %v1209 = vpop.f32.mrb[0].mxu0
      %v1210 = vadd.f32 0.0, %v1209
      %v1211 = vpop.f32.mrb[0].mxu0
      %1212 = vdwg.mxu0
      %v1213 = vpack.c.bf16 %v1210, %v1207
      %v1215 = vunpack.c.l.b16 %v967
      %v1216 = vpack.c.b16 %v1215, %v1215
      %v1217 = vrot.slane %v1216, 2
      %v1219 = vsel %vm973, %v1213, 0
      %vm1221 = vcmask 1041408
      %v1223 = vsel %vm1221, %v1217, 0
      %1225 = vmatprep.subr.bf16.mxu0 0
      %1226 = vmatpush1.bf16.msra.mxu0 %v1223
      %1227 = vmatprep.subr.bf16.mxu0 0
      %1228 = vmatpush1.bf16.msra.mxu0 0
      %1229 = vmatprep.subr.bf16.mxu0 0
      %1230 = vmatpush1.bf16.msra.mxu0 0
      %1231 = vmatprep.subr.bf16.mxu0 0
      %1232 = vmatpush1.bf16.msra.mxu0 0
      %1233 = vmatprep.subr.bf16.mxu0 0
      %1234 = vmatpush1.bf16.msra.mxu0 0
      %1235 = vmatprep.subr.bf16.mxu0 0
      %1236 = vmatpush1.bf16.msra.mxu0 0
      %1237 = vmatprep.subr.bf16.mxu0 0
      %1238 = vmatpush1.bf16.msra.mxu0 0
      %1239 = vmatprep.subr.bf16.mxu0 0
      %1240 = vmatpush1.bf16.msra.mxu0 0
      %1241 = vmatprep.subr.bf16.mxu0 0
      %1242 = vmatpush1.bf16.msra.mxu0 0
      %1243 = vmatprep.subr.bf16.mxu0 0
      %1244 = vmatpush1.bf16.msra.mxu0 0
      %1245 = vmatprep.subr.bf16.mxu0 0
      %1246 = vmatpush1.bf16.msra.mxu0 0
      %1247 = vmatprep.subr.bf16.mxu0 0
      %1248 = vmatpush1.bf16.msra.mxu0 0
      %1249 = vmatprep.subr.bf16.mxu0 0
      %1250 = vmatpush1.bf16.msra.mxu0 0
      %1251 = vmatprep.subr.bf16.mxu0 0
      %1252 = vmatpush1.bf16.msra.mxu0 0
      %1253 = vmatprep.subr.bf16.mxu0 0
      %1254 = vmatpush1.bf16.msra.mxu0 0
      %1255 = vmatprep.subr.bf16.mxu0 0
      %1256 = vmatpush1.bf16.msra.mxu0 0
      %1257 = vmatprep.mubr.bf16.mxu0 0
      %1258 = vmatmul.mubr.bf16.gmra.mrb[0].mxu0 %v1219
      %v1259 = vpop.f32.mrb[0].mxu0
      %v1260 = vadd.f32 0.0, %v1259
      %v1261 = vpop.f32.mrb[0].mxu0
      %v1262 = vpop.f32.mrb[0].mxu0
      %v1263 = vadd.f32 0.0, %v1262
      %v1264 = vpop.f32.mrb[0].mxu0
      %1265 = vdwg.mxu0
      %v1267 = vsel %vm973, %v1091, 0
      %v1270 = vsel %vm1221, %v967, 0
      %1272 = vmatprep.subr.bf16.mxu0 0
      %1273 = vmatpush1.bf16.msra.mxu0 %v1270
      %1274 = vmatprep.subr.bf16.mxu0 0
      %1275 = vmatpush1.bf16.msra.mxu0 0
      %1276 = vmatprep.subr.bf16.mxu0 0
      %1277 = vmatpush1.bf16.msra.mxu0 0
      %1278 = vmatprep.subr.bf16.mxu0 0
      %1279 = vmatpush1.bf16.msra.mxu0 0
      %1280 = vmatprep.subr.bf16.mxu0 0
      %1281 = vmatpush1.bf16.msra.mxu0 0
      %1282 = vmatprep.subr.bf16.mxu0 0
      %1283 = vmatpush1.bf16.msra.mxu0 0
      %1284 = vmatprep.subr.bf16.mxu0 0
      %1285 = vmatpush1.bf16.msra.mxu0 0
      %1286 = vmatprep.subr.bf16.mxu0 0
      %1287 = vmatpush1.bf16.msra.mxu0 0
      %1288 = vmatprep.subr.bf16.mxu0 0
      %1289 = vmatpush1.bf16.msra.mxu0 0
      %1290 = vmatprep.subr.bf16.mxu0 0
      %1291 = vmatpush1.bf16.msra.mxu0 0
      %1292 = vmatprep.subr.bf16.mxu0 0
      %1293 = vmatpush1.bf16.msra.mxu0 0
      %1294 = vmatprep.subr.bf16.mxu0 0
      %1295 = vmatpush1.bf16.msra.mxu0 0
      %1296 = vmatprep.subr.bf16.mxu0 0
      %1297 = vmatpush1.bf16.msra.mxu0 0
      %1298 = vmatprep.subr.bf16.mxu0 0
      %1299 = vmatpush1.bf16.msra.mxu0 0
      %1300 = vmatprep.subr.bf16.mxu0 0
      %1301 = vmatpush1.bf16.msra.mxu0 0
      %1302 = vmatprep.subr.bf16.mxu0 0
      %1303 = vmatpush1.bf16.msra.mxu0 0
      %1304 = vmatprep.mubr.bf16.mxu0 0
      %1305 = vmatmul.mubr.bf16.gmra.mrb[0].mxu0 %v1267
      %v1306 = vpop.f32.mrb[0].mxu0
      %v1307 = vadd.f32 %v1260, %v1306
      %v1308 = vpop.f32.mrb[0].mxu0
      %v1309 = vpop.f32.mrb[0].mxu0
      %v1310 = vadd.f32 %v1263, %v1309
      %v1311 = vpop.f32.mrb[0].mxu0
      %1312 = vdwg.mxu0
      %1313 = vrot.lane.b32.xlu0 %v969, 120
      %v1314 = vpop.permute.xlu0 %1313
      %1315 = vrot.lane.b32.xlu0 %v969, 104
      %v1316 = vpop.permute.xlu0 %1315
      %v1318 = vsel %vm973, %v1314, 0
      %v1321 = vsel %vm973, %v1316, 0
      %1323 = vmatprep.subr.bf16.mxu0 0
      %1324 = vmatpush1.bf16.xpose.msra.mxu0 %v1321
      %1325 = vmatprep.subr.bf16.mxu0 0
      %1326 = vmatpush1.bf16.xpose.msra.mxu0 0
      %1327 = vmatprep.subr.bf16.mxu0 0
      %1328 = vmatpush1.bf16.xpose.msra.mxu0 0
      %1329 = vmatprep.subr.bf16.mxu0 0
      %1330 = vmatpush1.bf16.xpose.msra.mxu0 0
      %1331 = vmatprep.subr.bf16.mxu0 0
      %1332 = vmatpush1.bf16.xpose.msra.mxu0 0
      %1333 = vmatprep.subr.bf16.mxu0 0
      %1334 = vmatpush1.bf16.xpose.msra.mxu0 0
      %1335 = vmatprep.subr.bf16.mxu0 0
      %1336 = vmatpush1.bf16.xpose.msra.mxu0 0
      %1337 = vmatprep.subr.bf16.mxu0 0
      %1338 = vmatpush1.bf16.xpose.msra.mxu0 0
      %1339 = vmatprep.subr.bf16.mxu0 0
      %1340 = vmatpush1.bf16.xpose.msra.mxu0 0
      %1341 = vmatprep.subr.bf16.mxu0 0
      %1342 = vmatpush1.bf16.xpose.msra.mxu0 0
      %1343 = vmatprep.subr.bf16.mxu0 0
      %1344 = vmatpush1.bf16.xpose.msra.mxu0 0
      %1345 = vmatprep.subr.bf16.mxu0 0
      %1346 = vmatpush1.bf16.xpose.msra.mxu0 0
      %1347 = vmatprep.subr.bf16.mxu0 0
      %1348 = vmatpush1.bf16.xpose.msra.mxu0 0
      %1349 = vmatprep.subr.bf16.mxu0 0
      %1350 = vmatpush1.bf16.xpose.msra.mxu0 0
      %1351 = vmatprep.subr.bf16.mxu0 0
      %1352 = vmatpush1.bf16.xpose.msra.mxu0 0
      %1353 = vmatprep.subr.bf16.mxu0 0
      %1354 = vmatpush1.bf16.xpose.msra.mxu0 0
      %1355 = vmatprep.mubr.bf16.mxu0 0
      %1356 = vmatmul.mubr.bf16.gmra.mrb[0].mxu0 %v1318
      %v1357 = vpop.f32.mrb[0].mxu0
      %v1358 = vadd.f32 0.0, %v1357
      %v1359 = vpop.f32.mrb[0].mxu0
      %v1360 = vpop.f32.mrb[0].mxu0
      %v1361 = vadd.f32 0.0, %v1360
      %v1362 = vpop.f32.mrb[0].mxu0
      %1363 = vdwg.mxu0
      %v1364 = vsel %vm922, %v1358, -inf
      %1365 = vmax.xlane.f32.xlu0 %v1364
      %v1366 = vpop.xlane.xlu0 %1365
      %v1367 = vsel %vm922, %v1361, -inf
      %1368 = vmax.xlane.f32.xlu0 %v1367
      %v1369 = vpop.xlane.xlu0 %1368
      %v1370 = vsub.f32 %v1358, %v1366
      %v1371 = vsub.f32 %v1361, %v1369
      %v1372 = vmul.f32 %v1370, 1.442695
      %v1373 = vpow.pop %v1372
      %v1374 = vmul.f32 %v1371, 1.442695
      %v1375 = vpow.pop %v1374
      %v1376 = vsel %vm922, %v1373, 0.0
      %1377 = vadd.xlane.f32.xlu0 %v1376
      %v1378 = vpop.xlane.xlu0 %1377
      %v1379 = vsel %vm922, %v1375, 0.0
      %1380 = vadd.xlane.f32.xlu0 %v1379
      %v1381 = vpop.xlane.xlu0 %1380
      %v1382 = vrcp.pop %v1378
      %v1383 = vrcp.pop %v1381
      %v1384 = vmul.f32 %v1373, %v1382
      %v1385 = vmul.f32 %v1375, %v1383
      %v1386 = vpack.c.bf16 %v1385, %v1384
      %1387 = vrot.lane.b32.xlu0 %v969, 88
      %v1388 = vpop.permute.xlu0 %1387
      %v1391 = vsel %vm922, %v1386, 0
      %1393 = vmatprep.subr.bf16.mxu0 0
      %1394 = vmatpush1.bf16.msra.mxu0 %v1388
      %1395 = vmatprep.subr.bf16.mxu0 0
      %1396 = vmatpush1.bf16.msra.mxu0 0
      %1397 = vmatprep.subr.bf16.mxu0 0
      %1398 = vmatpush1.bf16.msra.mxu0 0
      %1399 = vmatprep.subr.bf16.mxu0 0
      %1400 = vmatpush1.bf16.msra.mxu0 0
      %1401 = vmatprep.subr.bf16.mxu0 0
      %1402 = vmatpush1.bf16.msra.mxu0 0
      %1403 = vmatprep.subr.bf16.mxu0 0
      %1404 = vmatpush1.bf16.msra.mxu0 0
      %1405 = vmatprep.subr.bf16.mxu0 0
      %1406 = vmatpush1.bf16.msra.mxu0 0
      %1407 = vmatprep.subr.bf16.mxu0 0
      %1408 = vmatpush1.bf16.msra.mxu0 0
      %1409 = vmatprep.subr.bf16.mxu0 0
      %1410 = vmatpush1.bf16.msra.mxu0 0
      %1411 = vmatprep.subr.bf16.mxu0 0
      %1412 = vmatpush1.bf16.msra.mxu0 0
      %1413 = vmatprep.subr.bf16.mxu0 0
      %1414 = vmatpush1.bf16.msra.mxu0 0
      %1415 = vmatprep.subr.bf16.mxu0 0
      %1416 = vmatpush1.bf16.msra.mxu0 0
      %1417 = vmatprep.subr.bf16.mxu0 0
      %1418 = vmatpush1.bf16.msra.mxu0 0
      %1419 = vmatprep.subr.bf16.mxu0 0
      %1420 = vmatpush1.bf16.msra.mxu0 0
      %1421 = vmatprep.subr.bf16.mxu0 0
      %1422 = vmatpush1.bf16.msra.mxu0 0
      %1423 = vmatprep.subr.bf16.mxu0 0
      %1424 = vmatpush1.bf16.msra.mxu0 0
      %1425 = vmatprep.mubr.bf16.mxu0 0
      %1426 = vmatmul.mubr.bf16.gmra.mrb[0].mxu0 %v1391
      %v1427 = vpop.f32.mrb[0].mxu0
      %v1428 = vadd.f32 0.0, %v1427
      %v1429 = vpop.f32.mrb[0].mxu0
      %v1430 = vpop.f32.mrb[0].mxu0
      %v1431 = vadd.f32 0.0, %v1430
      %v1432 = vpop.f32.mrb[0].mxu0
      %1433 = vdwg.mxu0
      %v1434 = vpack.c.bf16 %v1431, %v1428
      %v1436 = vsel %vm973, %v1434, 0
      %v1439 = vsel %vm1221, %v968, 0
      %1441 = vmatprep.subr.bf16.mxu0 0
      %1442 = vmatpush1.bf16.msra.mxu0 %v1439
      %1443 = vmatprep.subr.bf16.mxu0 0
      %1444 = vmatpush1.bf16.msra.mxu0 0
      %1445 = vmatprep.subr.bf16.mxu0 0
      %1446 = vmatpush1.bf16.msra.mxu0 0
      %1447 = vmatprep.subr.bf16.mxu0 0
      %1448 = vmatpush1.bf16.msra.mxu0 0
      %1449 = vmatprep.subr.bf16.mxu0 0
      %1450 = vmatpush1.bf16.msra.mxu0 0
      %1451 = vmatprep.subr.bf16.mxu0 0
      %1452 = vmatpush1.bf16.msra.mxu0 0
      %1453 = vmatprep.subr.bf16.mxu0 0
      %1454 = vmatpush1.bf16.msra.mxu0 0
      %1455 = vmatprep.subr.bf16.mxu0 0
      %1456 = vmatpush1.bf16.msra.mxu0 0
      %1457 = vmatprep.subr.bf16.mxu0 0
      %1458 = vmatpush1.bf16.msra.mxu0 0
      %1459 = vmatprep.subr.bf16.mxu0 0
      %1460 = vmatpush1.bf16.msra.mxu0 0
      %1461 = vmatprep.subr.bf16.mxu0 0
      %1462 = vmatpush1.bf16.msra.mxu0 0
      %1463 = vmatprep.subr.bf16.mxu0 0
      %1464 = vmatpush1.bf16.msra.mxu0 0
      %1465 = vmatprep.subr.bf16.mxu0 0
      %1466 = vmatpush1.bf16.msra.mxu0 0
      %1467 = vmatprep.subr.bf16.mxu0 0
      %1468 = vmatpush1.bf16.msra.mxu0 0
      %1469 = vmatprep.subr.bf16.mxu0 0
      %1470 = vmatpush1.bf16.msra.mxu0 0
      %1471 = vmatprep.subr.bf16.mxu0 0
      %1472 = vmatpush1.bf16.msra.mxu0 0
      %1473 = vmatprep.mubr.bf16.mxu0 0
      %1474 = vmatmul.mubr.bf16.gmra.mrb[0].mxu0 %v1436
      %v1475 = vpop.f32.mrb[0].mxu0
      %v1476 = vadd.f32 0.0, %v1475
      %v1477 = vpop.f32.mrb[0].mxu0
      %v1478 = vpop.f32.mrb[0].mxu0
      %v1479 = vadd.f32 0.0, %v1478
      %v1480 = vpop.f32.mrb[0].mxu0
      %1481 = vdwg.mxu0
      %v1482 = vadd.f32 %v1307, %v1476
      %v1483 = vadd.f32 %v1310, %v1479
      %1484 = vrot.lane.b32.xlu0 %v969, 116
      %v1485 = vpop.permute.xlu0 %1484
      %1486 = vrot.lane.b32.xlu0 %v969, 100
      %v1487 = vpop.permute.xlu0 %1486
      %v1489 = vsel %vm973, %v1485, 0
      %v1492 = vsel %vm973, %v1487, 0
      %1494 = vmatprep.subr.bf16.mxu0 0
      %1495 = vmatpush1.bf16.xpose.msra.mxu0 %v1492
      %1496 = vmatprep.subr.bf16.mxu0 0
      %1497 = vmatpush1.bf16.xpose.msra.mxu0 0
      %1498 = vmatprep.subr.bf16.mxu0 0
      %1499 = vmatpush1.bf16.xpose.msra.mxu0 0
      %1500 = vmatprep.subr.bf16.mxu0 0
      %1501 = vmatpush1.bf16.xpose.msra.mxu0 0
      %1502 = vmatprep.subr.bf16.mxu0 0
      %1503 = vmatpush1.bf16.xpose.msra.mxu0 0
      %1504 = vmatprep.subr.bf16.mxu0 0
      %1505 = vmatpush1.bf16.xpose.msra.mxu0 0
      %1506 = vmatprep.subr.bf16.mxu0 0
      %1507 = vmatpush1.bf16.xpose.msra.mxu0 0
      %1508 = vmatprep.subr.bf16.mxu0 0
      %1509 = vmatpush1.bf16.xpose.msra.mxu0 0
      %1510 = vmatprep.subr.bf16.mxu0 0
      %1511 = vmatpush1.bf16.xpose.msra.mxu0 0
      %1512 = vmatprep.subr.bf16.mxu0 0
      %1513 = vmatpush1.bf16.xpose.msra.mxu0 0
      %1514 = vmatprep.subr.bf16.mxu0 0
      %1515 = vmatpush1.bf16.xpose.msra.mxu0 0
      %1516 = vmatprep.subr.bf16.mxu0 0
      %1517 = vmatpush1.bf16.xpose.msra.mxu0 0
      %1518 = vmatprep.subr.bf16.mxu0 0
      %1519 = vmatpush1.bf16.xpose.msra.mxu0 0
      %1520 = vmatprep.subr.bf16.mxu0 0
      %1521 = vmatpush1.bf16.xpose.msra.mxu0 0
      %1522 = vmatprep.subr.bf16.mxu0 0
      %1523 = vmatpush1.bf16.xpose.msra.mxu0 0
      %1524 = vmatprep.subr.bf16.mxu0 0
      %1525 = vmatpush1.bf16.xpose.msra.mxu0 0
      %1526 = vmatprep.mubr.bf16.mxu0 0
      %1527 = vmatmul.mubr.bf16.gmra.mrb[0].mxu0 %v1489
      %v1528 = vpop.f32.mrb[0].mxu0
      %v1529 = vadd.f32 0.0, %v1528
      %v1530 = vpop.f32.mrb[0].mxu0
      %v1531 = vpop.f32.mrb[0].mxu0
      %v1532 = vadd.f32 0.0, %v1531
      %v1533 = vpop.f32.mrb[0].mxu0
      %1534 = vdwg.mxu0
      %v1535 = vsel %vm922, %v1529, -inf
      %1536 = vmax.xlane.f32.xlu0 %v1535
      %v1537 = vpop.xlane.xlu0 %1536
      %v1538 = vsel %vm922, %v1532, -inf
      %1539 = vmax.xlane.f32.xlu0 %v1538
      %v1540 = vpop.xlane.xlu0 %1539
      %v1541 = vsub.f32 %v1529, %v1537
      %v1542 = vsub.f32 %v1532, %v1540
      %v1543 = vmul.f32 %v1541, 1.442695
      %v1544 = vpow.pop %v1543
      %v1545 = vmul.f32 %v1542, 1.442695
      %v1546 = vpow.pop %v1545
      %v1547 = vsel %vm922, %v1544, 0.0
      %1548 = vadd.xlane.f32.xlu0 %v1547
      %v1549 = vpop.xlane.xlu0 %1548
      %v1550 = vsel %vm922, %v1546, 0.0
      %1551 = vadd.xlane.f32.xlu0 %v1550
      %v1552 = vpop.xlane.xlu0 %1551
      %v1553 = vrcp.pop %v1549
      %v1554 = vrcp.pop %v1552
      %v1555 = vmul.f32 %v1544, %v1553
      %v1556 = vmul.f32 %v1546, %v1554
      %v1557 = vpack.c.bf16 %v1556, %v1555
      %1558 = vrot.lane.b32.xlu0 %v969, 84
      %v1559 = vpop.permute.xlu0 %1558
      %v1562 = vsel %vm922, %v1557, 0
      %1564 = vmatprep.subr.bf16.mxu0 0
      %1565 = vmatpush1.bf16.msra.mxu0 %v1559
      %1566 = vmatprep.subr.bf16.mxu0 0
      %1567 = vmatpush1.bf16.msra.mxu0 0
      %1568 = vmatprep.subr.bf16.mxu0 0
      %1569 = vmatpush1.bf16.msra.mxu0 0
      %1570 = vmatprep.subr.bf16.mxu0 0
      %1571 = vmatpush1.bf16.msra.mxu0 0
      %1572 = vmatprep.subr.bf16.mxu0 0
      %1573 = vmatpush1.bf16.msra.mxu0 0
      %1574 = vmatprep.subr.bf16.mxu0 0
      %1575 = vmatpush1.bf16.msra.mxu0 0
      %1576 = vmatprep.subr.bf16.mxu0 0
      %1577 = vmatpush1.bf16.msra.mxu0 0
      %1578 = vmatprep.subr.bf16.mxu0 0
      %1579 = vmatpush1.bf16.msra.mxu0 0
      %1580 = vmatprep.subr.bf16.mxu0 0
      %1581 = vmatpush1.bf16.msra.mxu0 0
      %1582 = vmatprep.subr.bf16.mxu0 0
      %1583 = vmatpush1.bf16.msra.mxu0 0
      %1584 = vmatprep.subr.bf16.mxu0 0
      %1585 = vmatpush1.bf16.msra.mxu0 0
      %1586 = vmatprep.subr.bf16.mxu0 0
      %1587 = vmatpush1.bf16.msra.mxu0 0
      %1588 = vmatprep.subr.bf16.mxu0 0
      %1589 = vmatpush1.bf16.msra.mxu0 0
      %1590 = vmatprep.subr.bf16.mxu0 0
      %1591 = vmatpush1.bf16.msra.mxu0 0
      %1592 = vmatprep.subr.bf16.mxu0 0
      %1593 = vmatpush1.bf16.msra.mxu0 0
      %1594 = vmatprep.subr.bf16.mxu0 0
      %1595 = vmatpush1.bf16.msra.mxu0 0
      %1596 = vmatprep.mubr.bf16.mxu0 0
      %1597 = vmatmul.mubr.bf16.gmra.mrb[0].mxu0 %v1562
      %v1598 = vpop.f32.mrb[0].mxu0
      %v1599 = vadd.f32 0.0, %v1598
      %v1600 = vpop.f32.mrb[0].mxu0
      %v1601 = vpop.f32.mrb[0].mxu0
      %v1602 = vadd.f32 0.0, %v1601
      %v1603 = vpop.f32.mrb[0].mxu0
      %1604 = vdwg.mxu0
      %v1605 = vpack.c.bf16 %v1602, %v1599
      %v1607 = vunpack.c.l.b16 %v968
      %v1608 = vpack.c.b16 %v1607, %v1607
      %v1609 = vrot.slane %v1608, 2
      %v1611 = vsel %vm973, %v1605, 0
      %v1614 = vsel %vm1221, %v1609, 0
      %1616 = vmatprep.subr.bf16.mxu0 0
      %1617 = vmatpush1.bf16.msra.mxu0 %v1614
      %1618 = vmatprep.subr.bf16.mxu0 0
      %1619 = vmatpush1.bf16.msra.mxu0 0
      %1620 = vmatprep.subr.bf16.mxu0 0
      %1621 = vmatpush1.bf16.msra.mxu0 0
      %1622 = vmatprep.subr.bf16.mxu0 0
      %1623 = vmatpush1.bf16.msra.mxu0 0
      %1624 = vmatprep.subr.bf16.mxu0 0
      %1625 = vmatpush1.bf16.msra.mxu0 0
      %1626 = vmatprep.subr.bf16.mxu0 0
      %1627 = vmatpush1.bf16.msra.mxu0 0
      %1628 = vmatprep.subr.bf16.mxu0 0
      %1629 = vmatpush1.bf16.msra.mxu0 0
      %1630 = vmatprep.subr.bf16.mxu0 0
      %1631 = vmatpush1.bf16.msra.mxu0 0
      %1632 = vmatprep.subr.bf16.mxu0 0
      %1633 = vmatpush1.bf16.msra.mxu0 0
      %1634 = vmatprep.subr.bf16.mxu0 0
      %1635 = vmatpush1.bf16.msra.mxu0 0
      %1636 = vmatprep.subr.bf16.mxu0 0
      %1637 = vmatpush1.bf16.msra.mxu0 0
      %1638 = vmatprep.subr.bf16.mxu0 0
      %1639 = vmatpush1.bf16.msra.mxu0 0
      %1640 = vmatprep.subr.bf16.mxu0 0
      %1641 = vmatpush1.bf16.msra.mxu0 0
      %1642 = vmatprep.subr.bf16.mxu0 0
      %1643 = vmatpush1.bf16.msra.mxu0 0
      %1644 = vmatprep.subr.bf16.mxu0 0
      %1645 = vmatpush1.bf16.msra.mxu0 0
      %1646 = vmatprep.subr.bf16.mxu0 0
      %1647 = vmatpush1.bf16.msra.mxu0 0
      %1648 = vmatprep.mubr.bf16.mxu0 0
      %1649 = vmatmul.mubr.bf16.gmra.mrb[0].mxu0 %v1611
      %v1650 = vpop.f32.mrb[0].mxu0
      %v1651 = vadd.f32 0.0, %v1650
      %v1652 = vpop.f32.mrb[0].mxu0
      %v1653 = vpop.f32.mrb[0].mxu0
      %v1654 = vadd.f32 0.0, %v1653
      %v1655 = vpop.f32.mrb[0].mxu0
      %1656 = vdwg.mxu0
      %v1657 = vadd.f32 %v1482, %v1651
      %v1658 = vadd.f32 %v1483, %v1654
      %v1659 = vld [vmem:[%s837] sm:$0x1]
      %v1661 = vlaneseq
      %v1662 = vshrl.u32 %v1661, 7
      %v1663 = vsub.s32 0, %v1662
      %v1664 = vrot.slane %v1659, %v1663
      %v1666 = vadd.f32 %v1657, %v1664
      %v1667 = vadd.f32 %v1658, %v1664
      %v1668 = vadd.f32 %v903, %v1666
      %v1669 = vadd.f32 %v904, %v1667
      %v1670 = vsel %vm922, %v1668, 0.0
      %1671 = vadd.xlane.f32.xlu0 %v1670
      %v1672 = vpop.xlane.xlu0 %1671
      %v1673 = vsel %vm922, %v1669, 0.0
      %1674 = vadd.xlane.f32.xlu0 %v1673
      %v1675 = vpop.xlane.xlu0 %1674
      %v1676 = vrcp.pop 16.0
      %v1677 = vmul.f32 %v1672, %v1676
      %v1678 = vmul.f32 %v1675, %v1676
      %v1679 = vsub.f32 %v1668, %v1677
      %v1680 = vsub.f32 %v1669, %v1678
      %v1681 = vmul.f32 %v1679, %v1679
      %v1682 = vmul.f32 %v1680, %v1680
      %v1683 = vsel %vm922, %v1681, 0.0
      %1684 = vadd.xlane.f32.xlu0 %v1683
      %v1685 = vpop.xlane.xlu0 %1684
      %v1686 = vsel %vm922, %v1682, 0.0
      %1687 = vadd.xlane.f32.xlu0 %v1686
      %v1688 = vpop.xlane.xlu0 %1687
      %v1689 = vmul.f32 %v1685, %v1676
      %v1690 = vmul.f32 %v1688, %v1676
      %v1691 = vadd.f32 %v1689, 1e-05
      %v1692 = vadd.f32 %v1690, 1e-05
      %v1693 = vrsqrt.pop %v1691
      %v1694 = vrsqrt.pop %v1692
      %v1695 = vmul.f32 %v1679, %v1693
      %v1696 = vmul.f32 %v1680, %v1694
      %v1697 = vlaneseq
      %v1698 = vshrl.u32 %v1697, 7
      %v1699 = vsub.s32 0, %v1698
      %v1700 = vrot.slane %v906, %v1699
      %v1701 = vmul.f32 %v1695, %v1700
      %v1702 = vmul.f32 %v1696, %v1700
      %v1703 = vlaneseq
      %v1704 = vshrl.u32 %v1703, 7
      %v1705 = vsub.s32 1, %v1704
      %v1706 = vrot.slane %v906, %v1705
      %v1707 = vadd.f32 %v1701, %v1706
      %v1708 = vadd.f32 %v1702, %v1706
      %v1709 = vpack.c.bf16 %v1708, %v1707
      %v1710 = vld [vmem:[%s842] sm:$0xf]
      %v1711 = vld [vmem:[%s842 + $0x4] sm:$0xf]
      %v1712 = vld [vmem:[%s845] sm:$0x1]
      %v1714 = vlaneseq
      %v1715 = vshrl.u32 %v1714, 7
      %v1716 = vsub.s32 0, %v1715
      %v1717 = vrot.slane %v1712, %v1716
      %v1721 = vunpack.c.l.b16 %v1710
      %v1722 = vunpack.c.l.b16 %v1711
      %v1723 = vpack.c.b16 %v1722, %v1721
      %v1726 = vsel %vm922, %v1709, 0
      %1728 = vmatprep.subr.bf16.mxu0 0
      %1729 = vmatpush1.bf16.msra.mxu0 %v1723
      %1730 = vmatprep.subr.bf16.mxu0 0
      %1731 = vmatpush1.bf16.msra.mxu0 0
      %1732 = vmatprep.subr.bf16.mxu0 0
      %1733 = vmatpush1.bf16.msra.mxu0 0
      %1734 = vmatprep.subr.bf16.mxu0 0
      %1735 = vmatpush1.bf16.msra.mxu0 0
      %1736 = vmatprep.subr.bf16.mxu0 0
      %1737 = vmatpush1.bf16.msra.mxu0 0
      %1738 = vmatprep.subr.bf16.mxu0 0
      %1739 = vmatpush1.bf16.msra.mxu0 0
      %1740 = vmatprep.subr.bf16.mxu0 0
      %1741 = vmatpush1.bf16.msra.mxu0 0
      %1742 = vmatprep.subr.bf16.mxu0 0
      %1743 = vmatpush1.bf16.msra.mxu0 0
      %1744 = vmatprep.subr.bf16.mxu0 0
      %1745 = vmatpush1.bf16.msra.mxu0 0
      %1746 = vmatprep.subr.bf16.mxu0 0
      %1747 = vmatpush1.bf16.msra.mxu0 0
      %1748 = vmatprep.subr.bf16.mxu0 0
      %1749 = vmatpush1.bf16.msra.mxu0 0
      %1750 = vmatprep.subr.bf16.mxu0 0
      %1751 = vmatpush1.bf16.msra.mxu0 0
      %1752 = vmatprep.subr.bf16.mxu0 0
      %1753 = vmatpush1.bf16.msra.mxu0 0
      %1754 = vmatprep.subr.bf16.mxu0 0
      %1755 = vmatpush1.bf16.msra.mxu0 0
      %1756 = vmatprep.subr.bf16.mxu0 0
      %1757 = vmatpush1.bf16.msra.mxu0 0
      %1758 = vmatprep.subr.bf16.mxu0 0
      %1759 = vmatpush1.bf16.msra.mxu0 0
      %1760 = vmatprep.mubr.bf16.mxu0 0
      %1761 = vmatmul.mubr.bf16.gmra.mrb[0].mxu0 %v1726
      %v1762 = vpop.f32.mrb[0].mxu0
      %v1763 = vadd.f32 %v1717, %v1762
      %v1764 = vpop.f32.mrb[0].mxu0
      %v1765 = vpop.f32.mrb[0].mxu0
      %v1766 = vadd.f32 %v1717, %v1765
      %v1767 = vpop.f32.mrb[0].mxu0
      %1768 = vdwg.mxu0
      %v1769 = vld [vmem:[%s850] sm:$0xf]
      %v1770 = vld [vmem:[%s850 + $0x4] sm:$0xf]
      %v1771 = vld [vmem:[%s853] sm:$0x1]
      %v1773 = vlaneseq
      %v1774 = vshrl.u32 %v1773, 7
      %v1775 = vsub.s32 0, %v1774
      %v1776 = vrot.slane %v1771, %v1775
      %v1780 = vunpack.c.l.b16 %v1769
      %v1781 = vunpack.c.l.b16 %v1770
      %v1782 = vpack.c.b16 %v1781, %v1780
      %v1785 = vsel %vm922, %v905, 0
      %1787 = vmatprep.subr.bf16.mxu0 0
      %1788 = vmatpush1.bf16.msra.mxu0 %v1782
      %1789 = vmatprep.subr.bf16.mxu0 0
      %1790 = vmatpush1.bf16.msra.mxu0 0
      %1791 = vmatprep.subr.bf16.mxu0 0
      %1792 = vmatpush1.bf16.msra.mxu0 0
      %1793 = vmatprep.subr.bf16.mxu0 0
      %1794 = vmatpush1.bf16.msra.mxu0 0
      %1795 = vmatprep.subr.bf16.mxu0 0
      %1796 = vmatpush1.bf16.msra.mxu0 0
      %1797 = vmatprep.subr.bf16.mxu0 0
      %1798 = vmatpush1.bf16.msra.mxu0 0
      %1799 = vmatprep.subr.bf16.mxu0 0
      %1800 = vmatpush1.bf16.msra.mxu0 0
      %1801 = vmatprep.subr.bf16.mxu0 0
      %1802 = vmatpush1.bf16.msra.mxu0 0
      %1803 = vmatprep.subr.bf16.mxu0 0
      %1804 = vmatpush1.bf16.msra.mxu0 0
      %1805 = vmatprep.subr.bf16.mxu0 0
      %1806 = vmatpush1.bf16.msra.mxu0 0
      %1807 = vmatprep.subr.bf16.mxu0 0
      %1808 = vmatpush1.bf16.msra.mxu0 0
      %1809 = vmatprep.subr.bf16.mxu0 0
      %1810 = vmatpush1.bf16.msra.mxu0 0
      %1811 = vmatprep.subr.bf16.mxu0 0
      %1812 = vmatpush1.bf16.msra.mxu0 0
      %1813 = vmatprep.subr.bf16.mxu0 0
      %1814 = vmatpush1.bf16.msra.mxu0 0
      %1815 = vmatprep.subr.bf16.mxu0 0
      %1816 = vmatpush1.bf16.msra.mxu0 0
      %1817 = vmatprep.subr.bf16.mxu0 0
      %1818 = vmatpush1.bf16.msra.mxu0 0
      %1819 = vmatprep.mubr.bf16.mxu0 0
      %1820 = vmatmul.mubr.bf16.gmra.mrb[0].mxu0 %v1785
      %v1821 = vpop.f32.mrb[0].mxu0
      %v1822 = vadd.f32 %v1776, %v1821
      %v1823 = vpop.f32.mrb[0].mxu0
      %v1824 = vpop.f32.mrb[0].mxu0
      %v1825 = vpop.f32.mrb[0].mxu0
      %1826 = vdwg.mxu0
      %v1827 = vld [vmem:[%s858] sm:$0xf]
      %v1828 = vld [vmem:[%s858 + $0x4] sm:$0xf]
      %v1829 = vpack.c.bf16 %v1766, %v1763
      %v1830 = vpack.c.bf16 %v1822, %v1822
      %v1832 = vsel %vm973, %v1829, 0
      %v1835 = vsel %vm973, %v1830, 0
      %1837 = vmatprep.subr.bf16.mxu0 0
      %1838 = vmatpush1.bf16.xpose.msra.mxu0 %v1835
      %1839 = vmatprep.subr.bf16.mxu0 0
      %1840 = vmatpush1.bf16.xpose.msra.mxu0 0
      %1841 = vmatprep.subr.bf16.mxu0 0
      %1842 = vmatpush1.bf16.xpose.msra.mxu0 0
      %1843 = vmatprep.subr.bf16.mxu0 0
      %1844 = vmatpush1.bf16.xpose.msra.mxu0 0
      %1845 = vmatprep.subr.bf16.mxu0 0
      %1846 = vmatpush1.bf16.xpose.msra.mxu0 0
      %1847 = vmatprep.subr.bf16.mxu0 0
      %1848 = vmatpush1.bf16.xpose.msra.mxu0 0
      %1849 = vmatprep.subr.bf16.mxu0 0
      %1850 = vmatpush1.bf16.xpose.msra.mxu0 0
      %1851 = vmatprep.subr.bf16.mxu0 0
      %1852 = vmatpush1.bf16.xpose.msra.mxu0 0
      %1853 = vmatprep.subr.bf16.mxu0 0
      %1854 = vmatpush1.bf16.xpose.msra.mxu0 0
      %1855 = vmatprep.subr.bf16.mxu0 0
      %1856 = vmatpush1.bf16.xpose.msra.mxu0 0
      %1857 = vmatprep.subr.bf16.mxu0 0
      %1858 = vmatpush1.bf16.xpose.msra.mxu0 0
      %1859 = vmatprep.subr.bf16.mxu0 0
      %1860 = vmatpush1.bf16.xpose.msra.mxu0 0
      %1861 = vmatprep.subr.bf16.mxu0 0
      %1862 = vmatpush1.bf16.xpose.msra.mxu0 0
      %1863 = vmatprep.subr.bf16.mxu0 0
      %1864 = vmatpush1.bf16.xpose.msra.mxu0 0
      %1865 = vmatprep.subr.bf16.mxu0 0
      %1866 = vmatpush1.bf16.xpose.msra.mxu0 0
      %1867 = vmatprep.subr.bf16.mxu0 0
      %1868 = vmatpush1.bf16.xpose.msra.mxu0 0
      %1869 = vmatprep.mubr.bf16.mxu0 0
      %1870 = vmatmul.mubr.bf16.gmra.mrb[0].mxu0 %v1832
      %v1871 = vpop.f32.mrb[0].mxu0
      %v1872 = vadd.f32 0.0, %v1871
      %v1873 = vpop.f32.mrb[0].mxu0
      %v1874 = vpop.f32.mrb[0].mxu0
      %v1875 = vadd.f32 0.0, %v1874
      %v1876 = vpop.f32.mrb[0].mxu0
      %1877 = vdwg.mxu0
      %vm1878 = vcmask 64512
      %v1879 = vsel %vm1878, %v1872, -inf
      %1880 = vmax.xlane.f32.xlu0 %v1879
      %v1881 = vpop.xlane.xlu0 %1880
      %v1882 = vsel %vm1878, %v1875, -inf
      %1883 = vmax.xlane.f32.xlu0 %v1882
      %v1884 = vpop.xlane.xlu0 %1883
      %v1885 = vsub.f32 %v1872, %v1881
      %v1886 = vsub.f32 %v1875, %v1884
      %v1887 = vmul.f32 %v1885, 1.442695
      %v1888 = vpow.pop %v1887
      %v1889 = vmul.f32 %v1886, 1.442695
      %v1890 = vpow.pop %v1889
      %v1891 = vsel %vm1878, %v1888, 0.0
      %1892 = vadd.xlane.f32.xlu0 %v1891
      %v1893 = vpop.xlane.xlu0 %1892
      %v1894 = vsel %vm1878, %v1890, 0.0
      %1895 = vadd.xlane.f32.xlu0 %v1894
      %v1896 = vpop.xlane.xlu0 %1895
      %v1897 = vrcp.pop %v1893
      %v1898 = vrcp.pop %v1896
      %v1899 = vmul.f32 %v1888, %v1897
      %v1900 = vmul.f32 %v1890, %v1898
      %v1901 = vpack.c.bf16 %v1900, %v1899
      %1903 = vrot.lane.b32.xlu0 %v1830, 112
      %v1904 = vpop.permute.xlu0 %1903
      %v1906 = vsel %vm1878, %v1901, 0
      %vm1908 = vcmask 1043456
      %v1910 = vsel %vm1908, %v1904, 0
      %1912 = vmatprep.subr.bf16.mxu0 0
      %1913 = vmatpush1.bf16.msra.mxu0 %v1910
      %1914 = vmatprep.subr.bf16.mxu0 0
      %1915 = vmatpush1.bf16.msra.mxu0 0
      %1916 = vmatprep.subr.bf16.mxu0 0
      %1917 = vmatpush1.bf16.msra.mxu0 0
      %1918 = vmatprep.subr.bf16.mxu0 0
      %1919 = vmatpush1.bf16.msra.mxu0 0
      %1920 = vmatprep.subr.bf16.mxu0 0
      %1921 = vmatpush1.bf16.msra.mxu0 0
      %1922 = vmatprep.subr.bf16.mxu0 0
      %1923 = vmatpush1.bf16.msra.mxu0 0
      %1924 = vmatprep.subr.bf16.mxu0 0
      %1925 = vmatpush1.bf16.msra.mxu0 0
      %1926 = vmatprep.subr.bf16.mxu0 0
      %1927 = vmatpush1.bf16.msra.mxu0 0
      %1928 = vmatprep.subr.bf16.mxu0 0
      %1929 = vmatpush1.bf16.msra.mxu0 0
      %1930 = vmatprep.subr.bf16.mxu0 0
      %1931 = vmatpush1.bf16.msra.mxu0 0
      %1932 = vmatprep.subr.bf16.mxu0 0
      %1933 = vmatpush1.bf16.msra.mxu0 0
      %1934 = vmatprep.subr.bf16.mxu0 0
      %1935 = vmatpush1.bf16.msra.mxu0 0
      %1936 = vmatprep.subr.bf16.mxu0 0
      %1937 = vmatpush1.bf16.msra.mxu0 0
      %1938 = vmatprep.subr.bf16.mxu0 0
      %1939 = vmatpush1.bf16.msra.mxu0 0
      %1940 = vmatprep.subr.bf16.mxu0 0
      %1941 = vmatpush1.bf16.msra.mxu0 0
      %1942 = vmatprep.subr.bf16.mxu0 0
      %1943 = vmatpush1.bf16.msra.mxu0 0
      %1944 = vmatprep.mubr.bf16.mxu0 0
      %1945 = vmatmul.mubr.bf16.gmra.mrb[0].mxu0 %v1906
      %v1946 = vpop.f32.mrb[0].mxu0
      %v1947 = vadd.f32 0.0, %v1946
      %v1948 = vpop.f32.mrb[0].mxu0
      %v1949 = vpop.f32.mrb[0].mxu0
      %v1950 = vadd.f32 0.0, %v1949
      %v1951 = vpop.f32.mrb[0].mxu0
      %1952 = vdwg.mxu0
      %v1953 = vpack.c.bf16 %v1950, %v1947
      %1955 = vrot.lane.b32.xlu0 %v1829, 124
      %v1956 = vpop.permute.xlu0 %1955
      %1957 = vrot.lane.b32.xlu0 %v1830, 124
      %v1958 = vpop.permute.xlu0 %1957
      %v1960 = vsel %vm973, %v1956, 0
      %v1963 = vsel %vm973, %v1958, 0
      %1965 = vmatprep.subr.bf16.mxu0 0
      %1966 = vmatpush1.bf16.xpose.msra.mxu0 %v1963
      %1967 = vmatprep.subr.bf16.mxu0 0
      %1968 = vmatpush1.bf16.xpose.msra.mxu0 0
      %1969 = vmatprep.subr.bf16.mxu0 0
      %1970 = vmatpush1.bf16.xpose.msra.mxu0 0
      %1971 = vmatprep.subr.bf16.mxu0 0
      %1972 = vmatpush1.bf16.xpose.msra.mxu0 0
      %1973 = vmatprep.subr.bf16.mxu0 0
      %1974 = vmatpush1.bf16.xpose.msra.mxu0 0
      %1975 = vmatprep.subr.bf16.mxu0 0
      %1976 = vmatpush1.bf16.xpose.msra.mxu0 0
      %1977 = vmatprep.subr.bf16.mxu0 0
      %1978 = vmatpush1.bf16.xpose.msra.mxu0 0
      %1979 = vmatprep.subr.bf16.mxu0 0
      %1980 = vmatpush1.bf16.xpose.msra.mxu0 0
      %1981 = vmatprep.subr.bf16.mxu0 0
      %1982 = vmatpush1.bf16.xpose.msra.mxu0 0
      %1983 = vmatprep.subr.bf16.mxu0 0
      %1984 = vmatpush1.bf16.xpose.msra.mxu0 0
      %1985 = vmatprep.subr.bf16.mxu0 0
      %1986 = vmatpush1.bf16.xpose.msra.mxu0 0
      %1987 = vmatprep.subr.bf16.mxu0 0
      %1988 = vmatpush1.bf16.xpose.msra.mxu0 0
      %1989 = vmatprep.subr.bf16.mxu0 0
      %1990 = vmatpush1.bf16.xpose.msra.mxu0 0
      %1991 = vmatprep.subr.bf16.mxu0 0
      %1992 = vmatpush1.bf16.xpose.msra.mxu0 0
      %1993 = vmatprep.subr.bf16.mxu0 0
      %1994 = vmatpush1.bf16.xpose.msra.mxu0 0
      %1995 = vmatprep.subr.bf16.mxu0 0
      %1996 = vmatpush1.bf16.xpose.msra.mxu0 0
      %1997 = vmatprep.mubr.bf16.mxu0 0
      %1998 = vmatmul.mubr.bf16.gmra.mrb[0].mxu0 %v1960
      %v1999 = vpop.f32.mrb[0].mxu0
      %v2000 = vadd.f32 0.0, %v1999
      %v2001 = vpop.f32.mrb[0].mxu0
      %v2002 = vpop.f32.mrb[0].mxu0
      %v2003 = vadd.f32 0.0, %v2002
      %v2004 = vpop.f32.mrb[0].mxu0
      %2005 = vdwg.mxu0
      %v2006 = vsel %vm1878, %v2000, -inf
      %2007 = vmax.xlane.f32.xlu0 %v2006
      %v2008 = vpop.xlane.xlu0 %2007
      %v2009 = vsel %vm1878, %v2003, -inf
      %2010 = vmax.xlane.f32.xlu0 %v2009
      %v2011 = vpop.xlane.xlu0 %2010
      %v2012 = vsub.f32 %v2000, %v2008
      %v2013 = vsub.f32 %v2003, %v2011
      %v2014 = vmul.f32 %v2012, 1.442695
      %v2015 = vpow.pop %v2014
      %v2016 = vmul.f32 %v2013, 1.442695
      %v2017 = vpow.pop %v2016
      %v2018 = vsel %vm1878, %v2015, 0.0
      %2019 = vadd.xlane.f32.xlu0 %v2018
      %v2020 = vpop.xlane.xlu0 %2019
      %v2021 = vsel %vm1878, %v2017, 0.0
      %2022 = vadd.xlane.f32.xlu0 %v2021
      %v2023 = vpop.xlane.xlu0 %2022
      %v2024 = vrcp.pop %v2020
      %v2025 = vrcp.pop %v2023
      %v2026 = vmul.f32 %v2015, %v2024
      %v2027 = vmul.f32 %v2017, %v2025
      %v2028 = vpack.c.bf16 %v2027, %v2026
      %2029 = vrot.lane.b32.xlu0 %v1830, 108
      %v2030 = vpop.permute.xlu0 %2029
      %v2032 = vsel %vm1878, %v2028, 0
      %v2035 = vsel %vm1908, %v2030, 0
      %2037 = vmatprep.subr.bf16.mxu0 0
      %2038 = vmatpush1.bf16.msra.mxu0 %v2035
      %2039 = vmatprep.subr.bf16.mxu0 0
      %2040 = vmatpush1.bf16.msra.mxu0 0
      %2041 = vmatprep.subr.bf16.mxu0 0
      %2042 = vmatpush1.bf16.msra.mxu0 0
      %2043 = vmatprep.subr.bf16.mxu0 0
      %2044 = vmatpush1.bf16.msra.mxu0 0
      %2045 = vmatprep.subr.bf16.mxu0 0
      %2046 = vmatpush1.bf16.msra.mxu0 0
      %2047 = vmatprep.subr.bf16.mxu0 0
      %2048 = vmatpush1.bf16.msra.mxu0 0
      %2049 = vmatprep.subr.bf16.mxu0 0
      %2050 = vmatpush1.bf16.msra.mxu0 0
      %2051 = vmatprep.subr.bf16.mxu0 0
      %2052 = vmatpush1.bf16.msra.mxu0 0
      %2053 = vmatprep.subr.bf16.mxu0 0
      %2054 = vmatpush1.bf16.msra.mxu0 0
      %2055 = vmatprep.subr.bf16.mxu0 0
      %2056 = vmatpush1.bf16.msra.mxu0 0
      %2057 = vmatprep.subr.bf16.mxu0 0
      %2058 = vmatpush1.bf16.msra.mxu0 0
      %2059 = vmatprep.subr.bf16.mxu0 0
      %2060 = vmatpush1.bf16.msra.mxu0 0
      %2061 = vmatprep.subr.bf16.mxu0 0
      %2062 = vmatpush1.bf16.msra.mxu0 0
      %2063 = vmatprep.subr.bf16.mxu0 0
      %2064 = vmatpush1.bf16.msra.mxu0 0
      %2065 = vmatprep.subr.bf16.mxu0 0
      %2066 = vmatpush1.bf16.msra.mxu0 0
      %2067 = vmatprep.subr.bf16.mxu0 0
      %2068 = vmatpush1.bf16.msra.mxu0 0
      %2069 = vmatprep.mubr.bf16.mxu0 0
      %2070 = vmatmul.mubr.bf16.gmra.mrb[0].mxu0 %v2032
      %v2071 = vpop.f32.mrb[0].mxu0
      %v2072 = vadd.f32 0.0, %v2071
      %v2073 = vpop.f32.mrb[0].mxu0
      %v2074 = vpop.f32.mrb[0].mxu0
      %v2075 = vadd.f32 0.0, %v2074
      %v2076 = vpop.f32.mrb[0].mxu0
      %2077 = vdwg.mxu0
      %v2078 = vpack.c.bf16 %v2075, %v2072
      %v2080 = vunpack.c.l.b16 %v1827
      %v2081 = vpack.c.b16 %v2080, %v2080
      %v2082 = vrot.slane %v2081, 2
      %v2084 = vsel %vm973, %v2078, 0
      %v2087 = vsel %vm1221, %v2082, 0
      %2089 = vmatprep.subr.bf16.mxu0 0
      %2090 = vmatpush1.bf16.msra.mxu0 %v2087
      %2091 = vmatprep.subr.bf16.mxu0 0
      %2092 = vmatpush1.bf16.msra.mxu0 0
      %2093 = vmatprep.subr.bf16.mxu0 0
      %2094 = vmatpush1.bf16.msra.mxu0 0
      %2095 = vmatprep.subr.bf16.mxu0 0
      %2096 = vmatpush1.bf16.msra.mxu0 0
      %2097 = vmatprep.subr.bf16.mxu0 0
      %2098 = vmatpush1.bf16.msra.mxu0 0
      %2099 = vmatprep.subr.bf16.mxu0 0
      %2100 = vmatpush1.bf16.msra.mxu0 0
      %2101 = vmatprep.subr.bf16.mxu0 0
      %2102 = vmatpush1.bf16.msra.mxu0 0
      %2103 = vmatprep.subr.bf16.mxu0 0
      %2104 = vmatpush1.bf16.msra.mxu0 0
      %2105 = vmatprep.subr.bf16.mxu0 0
      %2106 = vmatpush1.bf16.msra.mxu0 0
      %2107 = vmatprep.subr.bf16.mxu0 0
      %2108 = vmatpush1.bf16.msra.mxu0 0
      %2109 = vmatprep.subr.bf16.mxu0 0
      %2110 = vmatpush1.bf16.msra.mxu0 0
      %2111 = vmatprep.subr.bf16.mxu0 0
      %2112 = vmatpush1.bf16.msra.mxu0 0
      %2113 = vmatprep.subr.bf16.mxu0 0
      %2114 = vmatpush1.bf16.msra.mxu0 0
      %2115 = vmatprep.subr.bf16.mxu0 0
      %2116 = vmatpush1.bf16.msra.mxu0 0
      %2117 = vmatprep.subr.bf16.mxu0 0
      %2118 = vmatpush1.bf16.msra.mxu0 0
      %2119 = vmatprep.subr.bf16.mxu0 0
      %2120 = vmatpush1.bf16.msra.mxu0 0
      %2121 = vmatprep.mubr.bf16.mxu0 0
      %2122 = vmatmul.mubr.bf16.gmra.mrb[0].mxu0 %v2084
      %v2123 = vpop.f32.mrb[0].mxu0
      %v2124 = vadd.f32 0.0, %v2123
      %v2125 = vpop.f32.mrb[0].mxu0
      %v2126 = vpop.f32.mrb[0].mxu0
      %v2127 = vadd.f32 0.0, %v2126
      %v2128 = vpop.f32.mrb[0].mxu0
      %2129 = vdwg.mxu0
      %v2131 = vsel %vm973, %v1953, 0
      %v2134 = vsel %vm1221, %v1827, 0
      %2136 = vmatprep.subr.bf16.mxu0 0
      %2137 = vmatpush1.bf16.msra.mxu0 %v2134
      %2138 = vmatprep.subr.bf16.mxu0 0
      %2139 = vmatpush1.bf16.msra.mxu0 0
      %2140 = vmatprep.subr.bf16.mxu0 0
      %2141 = vmatpush1.bf16.msra.mxu0 0
      %2142 = vmatprep.subr.bf16.mxu0 0
      %2143 = vmatpush1.bf16.msra.mxu0 0
      %2144 = vmatprep.subr.bf16.mxu0 0
      %2145 = vmatpush1.bf16.msra.mxu0 0
      %2146 = vmatprep.subr.bf16.mxu0 0
      %2147 = vmatpush1.bf16.msra.mxu0 0
      %2148 = vmatprep.subr.bf16.mxu0 0
      %2149 = vmatpush1.bf16.msra.mxu0 0
      %2150 = vmatprep.subr.bf16.mxu0 0
      %2151 = vmatpush1.bf16.msra.mxu0 0
      %2152 = vmatprep.subr.bf16.mxu0 0
      %2153 = vmatpush1.bf16.msra.mxu0 0
      %2154 = vmatprep.subr.bf16.mxu0 0
      %2155 = vmatpush1.bf16.msra.mxu0 0
      %2156 = vmatprep.subr.bf16.mxu0 0
      %2157 = vmatpush1.bf16.msra.mxu0 0
      %2158 = vmatprep.subr.bf16.mxu0 0
      %2159 = vmatpush1.bf16.msra.mxu0 0
      %2160 = vmatprep.subr.bf16.mxu0 0
      %2161 = vmatpush1.bf16.msra.mxu0 0
      %2162 = vmatprep.subr.bf16.mxu0 0
      %2163 = vmatpush1.bf16.msra.mxu0 0
      %2164 = vmatprep.subr.bf16.mxu0 0
      %2165 = vmatpush1.bf16.msra.mxu0 0
      %2166 = vmatprep.subr.bf16.mxu0 0
      %2167 = vmatpush1.bf16.msra.mxu0 0
      %2168 = vmatprep.mubr.bf16.mxu0 0
      %2169 = vmatmul.mubr.bf16.gmra.mrb[0].mxu0 %v2131
      %v2170 = vpop.f32.mrb[0].mxu0
      %v2171 = vadd.f32 %v2124, %v2170
      %v2172 = vpop.f32.mrb[0].mxu0
      %v2173 = vpop.f32.mrb[0].mxu0
      %v2174 = vadd.f32 %v2127, %v2173
      %v2175 = vpop.f32.mrb[0].mxu0
      %2176 = vdwg.mxu0
      %2177 = vrot.lane.b32.xlu0 %v1829, 120
      %v2178 = vpop.permute.xlu0 %2177
      %2179 = vrot.lane.b32.xlu0 %v1830, 120
      %v2180 = vpop.permute.xlu0 %2179
      %v2182 = vsel %vm973, %v2178, 0
      %v2185 = vsel %vm973, %v2180, 0
      %2187 = vmatprep.subr.bf16.mxu0 0
      %2188 = vmatpush1.bf16.xpose.msra.mxu0 %v2185
      %2189 = vmatprep.subr.bf16.mxu0 0
      %2190 = vmatpush1.bf16.xpose.msra.mxu0 0
      %2191 = vmatprep.subr.bf16.mxu0 0
      %2192 = vmatpush1.bf16.xpose.msra.mxu0 0
      %2193 = vmatprep.subr.bf16.mxu0 0
      %2194 = vmatpush1.bf16.xpose.msra.mxu0 0
      %2195 = vmatprep.subr.bf16.mxu0 0
      %2196 = vmatpush1.bf16.xpose.msra.mxu0 0
      %2197 = vmatprep.subr.bf16.mxu0 0
      %2198 = vmatpush1.bf16.xpose.msra.mxu0 0
      %2199 = vmatprep.subr.bf16.mxu0 0
      %2200 = vmatpush1.bf16.xpose.msra.mxu0 0
      %2201 = vmatprep.subr.bf16.mxu0 0
      %2202 = vmatpush1.bf16.xpose.msra.mxu0 0
      %2203 = vmatprep.subr.bf16.mxu0 0
      %2204 = vmatpush1.bf16.xpose.msra.mxu0 0
      %2205 = vmatprep.subr.bf16.mxu0 0
      %2206 = vmatpush1.bf16.xpose.msra.mxu0 0
      %2207 = vmatprep.subr.bf16.mxu0 0
      %2208 = vmatpush1.bf16.xpose.msra.mxu0 0
      %2209 = vmatprep.subr.bf16.mxu0 0
      %2210 = vmatpush1.bf16.xpose.msra.mxu0 0
      %2211 = vmatprep.subr.bf16.mxu0 0
      %2212 = vmatpush1.bf16.xpose.msra.mxu0 0
      %2213 = vmatprep.subr.bf16.mxu0 0
      %2214 = vmatpush1.bf16.xpose.msra.mxu0 0
      %2215 = vmatprep.subr.bf16.mxu0 0
      %2216 = vmatpush1.bf16.xpose.msra.mxu0 0
      %2217 = vmatprep.subr.bf16.mxu0 0
      %2218 = vmatpush1.bf16.xpose.msra.mxu0 0
      %2219 = vmatprep.mubr.bf16.mxu0 0
      %2220 = vmatmul.mubr.bf16.gmra.mrb[0].mxu0 %v2182
      %v2221 = vpop.f32.mrb[0].mxu0
      %v2222 = vadd.f32 0.0, %v2221
      %v2223 = vpop.f32.mrb[0].mxu0
      %v2224 = vpop.f32.mrb[0].mxu0
      %v2225 = vadd.f32 0.0, %v2224
      %v2226 = vpop.f32.mrb[0].mxu0
      %2227 = vdwg.mxu0
      %v2228 = vsel %vm1878, %v2222, -inf
      %2229 = vmax.xlane.f32.xlu0 %v2228
      %v2230 = vpop.xlane.xlu0 %2229
      %v2231 = vsel %vm1878, %v2225, -inf
      %2232 = vmax.xlane.f32.xlu0 %v2231
      %v2233 = vpop.xlane.xlu0 %2232
      %v2234 = vsub.f32 %v2222, %v2230
      %v2235 = vsub.f32 %v2225, %v2233
      %v2236 = vmul.f32 %v2234, 1.442695
      %v2237 = vpow.pop %v2236
      %v2238 = vmul.f32 %v2235, 1.442695
      %v2239 = vpow.pop %v2238
      %v2240 = vsel %vm1878, %v2237, 0.0
      %2241 = vadd.xlane.f32.xlu0 %v2240
      %v2242 = vpop.xlane.xlu0 %2241
      %v2243 = vsel %vm1878, %v2239, 0.0
      %2244 = vadd.xlane.f32.xlu0 %v2243
      %v2245 = vpop.xlane.xlu0 %2244
      %v2246 = vrcp.pop %v2242
      %v2247 = vrcp.pop %v2245
      %v2248 = vmul.f32 %v2237, %v2246
      %v2249 = vmul.f32 %v2239, %v2247
      %v2250 = vpack.c.bf16 %v2249, %v2248
      %2251 = vrot.lane.b32.xlu0 %v1830, 104
      %v2252 = vpop.permute.xlu0 %2251
      %v2254 = vsel %vm1878, %v2250, 0
      %v2257 = vsel %vm1908, %v2252, 0
      %2259 = vmatprep.subr.bf16.mxu0 0
      %2260 = vmatpush1.bf16.msra.mxu0 %v2257
      %2261 = vmatprep.subr.bf16.mxu0 0
      %2262 = vmatpush1.bf16.msra.mxu0 0
      %2263 = vmatprep.subr.bf16.mxu0 0
      %2264 = vmatpush1.bf16.msra.mxu0 0
      %2265 = vmatprep.subr.bf16.mxu0 0
      %2266 = vmatpush1.bf16.msra.mxu0 0
      %2267 = vmatprep.subr.bf16.mxu0 0
      %2268 = vmatpush1.bf16.msra.mxu0 0
      %2269 = vmatprep.subr.bf16.mxu0 0
      %2270 = vmatpush1.bf16.msra.mxu0 0
      %2271 = vmatprep.subr.bf16.mxu0 0
      %2272 = vmatpush1.bf16.msra.mxu0 0
      %2273 = vmatprep.subr.bf16.mxu0 0
      %2274 = vmatpush1.bf16.msra.mxu0 0
      %2275 = vmatprep.subr.bf16.mxu0 0
      %2276 = vmatpush1.bf16.msra.mxu0 0
      %2277 = vmatprep.subr.bf16.mxu0 0
      %2278 = vmatpush1.bf16.msra.mxu0 0
      %2279 = vmatprep.subr.bf16.mxu0 0
      %2280 = vmatpush1.bf16.msra.mxu0 0
      %2281 = vmatprep.subr.bf16.mxu0 0
      %2282 = vmatpush1.bf16.msra.mxu0 0
      %2283 = vmatprep.subr.bf16.mxu0 0
      %2284 = vmatpush1.bf16.msra.mxu0 0
      %2285 = vmatprep.subr.bf16.mxu0 0
      %2286 = vmatpush1.bf16.msra.mxu0 0
      %2287 = vmatprep.subr.bf16.mxu0 0
      %2288 = vmatpush1.bf16.msra.mxu0 0
      %2289 = vmatprep.subr.bf16.mxu0 0
      %2290 = vmatpush1.bf16.msra.mxu0 0
      %2291 = vmatprep.mubr.bf16.mxu0 0
      %2292 = vmatmul.mubr.bf16.gmra.mrb[0].mxu0 %v2254
      %v2293 = vpop.f32.mrb[0].mxu0
      %v2294 = vadd.f32 0.0, %v2293
      %v2295 = vpop.f32.mrb[0].mxu0
      %v2296 = vpop.f32.mrb[0].mxu0
      %v2297 = vadd.f32 0.0, %v2296
      %v2298 = vpop.f32.mrb[0].mxu0
      %2299 = vdwg.mxu0
      %v2300 = vpack.c.bf16 %v2297, %v2294
      %v2302 = vsel %vm973, %v2300, 0
      %v2305 = vsel %vm1221, %v1828, 0
      %2307 = vmatprep.subr.bf16.mxu0 0
      %2308 = vmatpush1.bf16.msra.mxu0 %v2305
      %2309 = vmatprep.subr.bf16.mxu0 0
      %2310 = vmatpush1.bf16.msra.mxu0 0
      %2311 = vmatprep.subr.bf16.mxu0 0
      %2312 = vmatpush1.bf16.msra.mxu0 0
      %2313 = vmatprep.subr.bf16.mxu0 0
      %2314 = vmatpush1.bf16.msra.mxu0 0
      %2315 = vmatprep.subr.bf16.mxu0 0
      %2316 = vmatpush1.bf16.msra.mxu0 0
      %2317 = vmatprep.subr.bf16.mxu0 0
      %2318 = vmatpush1.bf16.msra.mxu0 0
      %2319 = vmatprep.subr.bf16.mxu0 0
      %2320 = vmatpush1.bf16.msra.mxu0 0
      %2321 = vmatprep.subr.bf16.mxu0 0
      %2322 = vmatpush1.bf16.msra.mxu0 0
      %2323 = vmatprep.subr.bf16.mxu0 0
      %2324 = vmatpush1.bf16.msra.mxu0 0
      %2325 = vmatprep.subr.bf16.mxu0 0
      %2326 = vmatpush1.bf16.msra.mxu0 0
      %2327 = vmatprep.subr.bf16.mxu0 0
      %2328 = vmatpush1.bf16.msra.mxu0 0
      %2329 = vmatprep.subr.bf16.mxu0 0
      %2330 = vmatpush1.bf16.msra.mxu0 0
      %2331 = vmatprep.subr.bf16.mxu0 0
      %2332 = vmatpush1.bf16.msra.mxu0 0
      %2333 = vmatprep.subr.bf16.mxu0 0
      %2334 = vmatpush1.bf16.msra.mxu0 0
      %2335 = vmatprep.subr.bf16.mxu0 0
      %2336 = vmatpush1.bf16.msra.mxu0 0
      %2337 = vmatprep.subr.bf16.mxu0 0
      %2338 = vmatpush1.bf16.msra.mxu0 0
      %2339 = vmatprep.mubr.bf16.mxu0 0
      %2340 = vmatmul.mubr.bf16.gmra.mrb[0].mxu0 %v2302
      %v2341 = vpop.f32.mrb[0].mxu0
      %v2342 = vadd.f32 0.0, %v2341
      %v2343 = vpop.f32.mrb[0].mxu0
      %v2344 = vpop.f32.mrb[0].mxu0
      %v2345 = vadd.f32 0.0, %v2344
      %v2346 = vpop.f32.mrb[0].mxu0
      %2347 = vdwg.mxu0
      %v2348 = vadd.f32 %v2171, %v2342
      %v2349 = vadd.f32 %v2174, %v2345
      %2350 = vrot.lane.b32.xlu0 %v1829, 116
      %v2351 = vpop.permute.xlu0 %2350
      %2352 = vrot.lane.b32.xlu0 %v1830, 116
      %v2353 = vpop.permute.xlu0 %2352
      %v2355 = vsel %vm973, %v2351, 0
      %v2358 = vsel %vm973, %v2353, 0
      %2360 = vmatprep.subr.bf16.mxu0 0
      %2361 = vmatpush1.bf16.xpose.msra.mxu0 %v2358
      %2362 = vmatprep.subr.bf16.mxu0 0
      %2363 = vmatpush1.bf16.xpose.msra.mxu0 0
      %2364 = vmatprep.subr.bf16.mxu0 0
      %2365 = vmatpush1.bf16.xpose.msra.mxu0 0
      %2366 = vmatprep.subr.bf16.mxu0 0
      %2367 = vmatpush1.bf16.xpose.msra.mxu0 0
      %2368 = vmatprep.subr.bf16.mxu0 0
      %2369 = vmatpush1.bf16.xpose.msra.mxu0 0
      %2370 = vmatprep.subr.bf16.mxu0 0
      %2371 = vmatpush1.bf16.xpose.msra.mxu0 0
      %2372 = vmatprep.subr.bf16.mxu0 0
      %2373 = vmatpush1.bf16.xpose.msra.mxu0 0
      %2374 = vmatprep.subr.bf16.mxu0 0
      %2375 = vmatpush1.bf16.xpose.msra.mxu0 0
      %2376 = vmatprep.subr.bf16.mxu0 0
      %2377 = vmatpush1.bf16.xpose.msra.mxu0 0
      %2378 = vmatprep.subr.bf16.mxu0 0
      %2379 = vmatpush1.bf16.xpose.msra.mxu0 0
      %2380 = vmatprep.subr.bf16.mxu0 0
      %2381 = vmatpush1.bf16.xpose.msra.mxu0 0
      %2382 = vmatprep.subr.bf16.mxu0 0
      %2383 = vmatpush1.bf16.xpose.msra.mxu0 0
      %2384 = vmatprep.subr.bf16.mxu0 0
      %2385 = vmatpush1.bf16.xpose.msra.mxu0 0
      %2386 = vmatprep.subr.bf16.mxu0 0
      %2387 = vmatpush1.bf16.xpose.msra.mxu0 0
      %2388 = vmatprep.subr.bf16.mxu0 0
      %2389 = vmatpush1.bf16.xpose.msra.mxu0 0
      %2390 = vmatprep.subr.bf16.mxu0 0
      %2391 = vmatpush1.bf16.xpose.msra.mxu0 0
      %2392 = vmatprep.mubr.bf16.mxu0 0
      %2393 = vmatmul.mubr.bf16.gmra.mrb[0].mxu0 %v2355
      %v2394 = vpop.f32.mrb[0].mxu0
      %v2395 = vadd.f32 0.0, %v2394
      %v2396 = vpop.f32.mrb[0].mxu0
      %v2397 = vpop.f32.mrb[0].mxu0
      %v2398 = vadd.f32 0.0, %v2397
      %v2399 = vpop.f32.mrb[0].mxu0
      %2400 = vdwg.mxu0
      %v2401 = vsel %vm1878, %v2395, -inf
      %2402 = vmax.xlane.f32.xlu0 %v2401
      %v2403 = vpop.xlane.xlu0 %2402
      %v2404 = vsel %vm1878, %v2398, -inf
      %2405 = vmax.xlane.f32.xlu0 %v2404
      %v2406 = vpop.xlane.xlu0 %2405
      %v2407 = vsub.f32 %v2395, %v2403
      %v2408 = vsub.f32 %v2398, %v2406
      %v2409 = vmul.f32 %v2407, 1.442695
      %v2410 = vpow.pop %v2409
      %v2411 = vmul.f32 %v2408, 1.442695
      %v2412 = vpow.pop %v2411
      %v2413 = vsel %vm1878, %v2410, 0.0
      %2414 = vadd.xlane.f32.xlu0 %v2413
      %v2415 = vpop.xlane.xlu0 %2414
      %v2416 = vsel %vm1878, %v2412, 0.0
      %2417 = vadd.xlane.f32.xlu0 %v2416
      %v2418 = vpop.xlane.xlu0 %2417
      %v2419 = vrcp.pop %v2415
      %v2420 = vrcp.pop %v2418
      %v2421 = vmul.f32 %v2410, %v2419
      %v2422 = vmul.f32 %v2412, %v2420
      %v2423 = vpack.c.bf16 %v2422, %v2421
      %2424 = vrot.lane.b32.xlu0 %v1830, 100
      %v2425 = vpop.permute.xlu0 %2424
      %v2427 = vsel %vm1878, %v2423, 0
      %v2430 = vsel %vm1908, %v2425, 0
      %2432 = vmatprep.subr.bf16.mxu0 0
      %2433 = vmatpush1.bf16.msra.mxu0 %v2430
      %2434 = vmatprep.subr.bf16.mxu0 0
      %2435 = vmatpush1.bf16.msra.mxu0 0
      %2436 = vmatprep.subr.bf16.mxu0 0
      %2437 = vmatpush1.bf16.msra.mxu0 0
      %2438 = vmatprep.subr.bf16.mxu0 0
      %2439 = vmatpush1.bf16.msra.mxu0 0
      %2440 = vmatprep.subr.bf16.mxu0 0
      %2441 = vmatpush1.bf16.msra.mxu0 0
      %2442 = vmatprep.subr.bf16.mxu0 0
      %2443 = vmatpush1.bf16.msra.mxu0 0
      %2444 = vmatprep.subr.bf16.mxu0 0
      %2445 = vmatpush1.bf16.msra.mxu0 0
      %2446 = vmatprep.subr.bf16.mxu0 0
      %2447 = vmatpush1.bf16.msra.mxu0 0
      %2448 = vmatprep.subr.bf16.mxu0 0
      %2449 = vmatpush1.bf16.msra.mxu0 0
      %2450 = vmatprep.subr.bf16.mxu0 0
      %2451 = vmatpush1.bf16.msra.mxu0 0
      %2452 = vmatprep.subr.bf16.mxu0 0
      %2453 = vmatpush1.bf16.msra.mxu0 0
      %2454 = vmatprep.subr.bf16.mxu0 0
      %2455 = vmatpush1.bf16.msra.mxu0 0
      %2456 = vmatprep.subr.bf16.mxu0 0
      %2457 = vmatpush1.bf16.msra.mxu0 0
      %2458 = vmatprep.subr.bf16.mxu0 0
      %2459 = vmatpush1.bf16.msra.mxu0 0
      %2460 = vmatprep.subr.bf16.mxu0 0
      %2461 = vmatpush1.bf16.msra.mxu0 0
      %2462 = vmatprep.subr.bf16.mxu0 0
      %2463 = vmatpush1.bf16.msra.mxu0 0
      %2464 = vmatprep.mubr.bf16.mxu0 0
      %2465 = vmatmul.mubr.bf16.gmra.mrb[0].mxu0 %v2427
      %v2466 = vpop.f32.mrb[0].mxu0
      %v2467 = vadd.f32 0.0, %v2466
      %v2468 = vpop.f32.mrb[0].mxu0
      %v2469 = vpop.f32.mrb[0].mxu0
      %v2470 = vadd.f32 0.0, %v2469
      %v2471 = vpop.f32.mrb[0].mxu0
      %2472 = vdwg.mxu0
      %v2473 = vpack.c.bf16 %v2470, %v2467
      %v2475 = vunpack.c.l.b16 %v1828
      %v2476 = vpack.c.b16 %v2475, %v2475
      %v2477 = vrot.slane %v2476, 2
      %v2479 = vsel %vm973, %v2473, 0
      %v2482 = vsel %vm1221, %v2477, 0
      %2484 = vmatprep.subr.bf16.mxu0 0
      %2485 = vmatpush1.bf16.msra.mxu0 %v2482
      %2486 = vmatprep.subr.bf16.mxu0 0
      %2487 = vmatpush1.bf16.msra.mxu0 0
      %2488 = vmatprep.subr.bf16.mxu0 0
      %2489 = vmatpush1.bf16.msra.mxu0 0
      %2490 = vmatprep.subr.bf16.mxu0 0
      %2491 = vmatpush1.bf16.msra.mxu0 0
      %2492 = vmatprep.subr.bf16.mxu0 0
      %2493 = vmatpush1.bf16.msra.mxu0 0
      %2494 = vmatprep.subr.bf16.mxu0 0
      %2495 = vmatpush1.bf16.msra.mxu0 0
      %2496 = vmatprep.subr.bf16.mxu0 0
      %2497 = vmatpush1.bf16.msra.mxu0 0
      %2498 = vmatprep.subr.bf16.mxu0 0
      %2499 = vmatpush1.bf16.msra.mxu0 0
      %2500 = vmatprep.subr.bf16.mxu0 0
      %2501 = vmatpush1.bf16.msra.mxu0 0
      %2502 = vmatprep.subr.bf16.mxu0 0
      %2503 = vmatpush1.bf16.msra.mxu0 0
      %2504 = vmatprep.subr.bf16.mxu0 0
      %2505 = vmatpush1.bf16.msra.mxu0 0
      %2506 = vmatprep.subr.bf16.mxu0 0
      %2507 = vmatpush1.bf16.msra.mxu0 0
      %2508 = vmatprep.subr.bf16.mxu0 0
      %2509 = vmatpush1.bf16.msra.mxu0 0
      %2510 = vmatprep.subr.bf16.mxu0 0
      %2511 = vmatpush1.bf16.msra.mxu0 0
      %2512 = vmatprep.subr.bf16.mxu0 0
      %2513 = vmatpush1.bf16.msra.mxu0 0
      %2514 = vmatprep.subr.bf16.mxu0 0
      %2515 = vmatpush1.bf16.msra.mxu0 0
      %2516 = vmatprep.mubr.bf16.mxu0 0
      %2517 = vmatmul.mubr.bf16.gmra.mrb[0].mxu0 %v2479
      %v2518 = vpop.f32.mrb[0].mxu0
      %v2519 = vadd.f32 0.0, %v2518
      %v2520 = vpop.f32.mrb[0].mxu0
      %v2521 = vpop.f32.mrb[0].mxu0
      %v2522 = vadd.f32 0.0, %v2521
      %v2523 = vpop.f32.mrb[0].mxu0
      %2524 = vdwg.mxu0
      %v2525 = vadd.f32 %v2348, %v2519
      %v2526 = vadd.f32 %v2349, %v2522
      %v2527 = vld [vmem:[%s861] sm:$0x1]
      %v2529 = vlaneseq
      %v2530 = vshrl.u32 %v2529, 7
      %v2531 = vsub.s32 0, %v2530
      %v2532 = vrot.slane %v2527, %v2531
      %v2534 = vadd.f32 %v2525, %v2532
      %v2535 = vadd.f32 %v2526, %v2532
      %v2536 = vadd.f32 %v1707, %v2534
      %v2537 = vadd.f32 %v1708, %v2535
      %v2538 = vsel %vm922, %v2536, 0.0
      %2539 = vadd.xlane.f32.xlu0 %v2538
      %v2540 = vpop.xlane.xlu0 %2539
      %v2541 = vsel %vm922, %v2537, 0.0
      %2542 = vadd.xlane.f32.xlu0 %v2541
      %v2543 = vpop.xlane.xlu0 %2542
      %v2544 = vmul.f32 %v2540, %v1676
      %v2545 = vmul.f32 %v2543, %v1676
      %v2546 = vsub.f32 %v2536, %v2544
      %v2547 = vsub.f32 %v2537, %v2545
      %v2548 = vmul.f32 %v2546, %v2546
      %v2549 = vmul.f32 %v2547, %v2547
      %v2550 = vsel %vm922, %v2548, 0.0
      %2551 = vadd.xlane.f32.xlu0 %v2550
      %v2552 = vpop.xlane.xlu0 %2551
      %v2553 = vsel %vm922, %v2549, 0.0
      %2554 = vadd.xlane.f32.xlu0 %v2553
      %v2555 = vpop.xlane.xlu0 %2554
      %v2556 = vmul.f32 %v2552, %v1676
      %v2557 = vmul.f32 %v2555, %v1676
      %v2558 = vadd.f32 %v2556, 1e-05
      %v2559 = vadd.f32 %v2557, 1e-05
      %v2560 = vrsqrt.pop %v2558
      %v2561 = vrsqrt.pop %v2559
      %v2562 = vmul.f32 %v2546, %v2560
      %v2563 = vmul.f32 %v2547, %v2561
      %v2564 = vlaneseq
      %v2565 = vshrl.u32 %v2564, 7
      %v2566 = vsub.s32 2, %v2565
      %v2567 = vrot.slane %v906, %v2566
      %v2568 = vmul.f32 %v2562, %v2567
      %v2569 = vmul.f32 %v2563, %v2567
      %v2570 = vlaneseq
      %v2571 = vshrl.u32 %v2570, 7
      %v2572 = vsub.s32 3, %v2571
      %v2573 = vrot.slane %v906, %v2572
      %v2574 = vadd.f32 %v2568, %v2573
      %v2575 = vadd.f32 %v2569, %v2573
      %v2576 = vpack.c.bf16 %v2575, %v2574
      %v2577 = vld [vmem:[%s866] sm:$0xf]
      %v2578 = vld [vmem:[%s866 + $0x4] sm:$0xf]
      %v2579 = vld [vmem:[%s869] sm:$0x1]
      %v2581 = vlaneseq
      %v2582 = vshrl.u32 %v2581, 7
      %v2583 = vsub.s32 0, %v2582
      %v2584 = vrot.slane %v2579, %v2583
      %v2588 = vunpack.c.l.b16 %v2577
      %v2589 = vunpack.c.l.b16 %v2578
      %v2590 = vpack.c.b16 %v2589, %v2588
      %v2593 = vsel %vm922, %v2576, 0
      %2595 = vmatprep.subr.bf16.mxu0 0
      %2596 = vmatpush1.bf16.msra.mxu0 %v2590
      %2597 = vmatprep.subr.bf16.mxu0 0
      %2598 = vmatpush1.bf16.msra.mxu0 0
      %2599 = vmatprep.subr.bf16.mxu0 0
      %2600 = vmatpush1.bf16.msra.mxu0 0
      %2601 = vmatprep.subr.bf16.mxu0 0
      %2602 = vmatpush1.bf16.msra.mxu0 0
      %2603 = vmatprep.subr.bf16.mxu0 0
      %2604 = vmatpush1.bf16.msra.mxu0 0
      %2605 = vmatprep.subr.bf16.mxu0 0
      %2606 = vmatpush1.bf16.msra.mxu0 0
      %2607 = vmatprep.subr.bf16.mxu0 0
      %2608 = vmatpush1.bf16.msra.mxu0 0
      %2609 = vmatprep.subr.bf16.mxu0 0
      %2610 = vmatpush1.bf16.msra.mxu0 0
      %2611 = vmatprep.subr.bf16.mxu0 0
      %2612 = vmatpush1.bf16.msra.mxu0 0
      %2613 = vmatprep.subr.bf16.mxu0 0
      %2614 = vmatpush1.bf16.msra.mxu0 0
      %2615 = vmatprep.subr.bf16.mxu0 0
      %2616 = vmatpush1.bf16.msra.mxu0 0
      %2617 = vmatprep.subr.bf16.mxu0 0
      %2618 = vmatpush1.bf16.msra.mxu0 0
      %2619 = vmatprep.subr.bf16.mxu0 0
      %2620 = vmatpush1.bf16.msra.mxu0 0
      %2621 = vmatprep.subr.bf16.mxu0 0
      %2622 = vmatpush1.bf16.msra.mxu0 0
      %2623 = vmatprep.subr.bf16.mxu0 0
      %2624 = vmatpush1.bf16.msra.mxu0 0
      %2625 = vmatprep.subr.bf16.mxu0 0
      %2626 = vmatpush1.bf16.msra.mxu0 0
      %2627 = vmatprep.mubr.bf16.mxu0 0
      %2628 = vmatmul.mubr.bf16.gmra.mrb[0].mxu0 %v2593
      %v2629 = vpop.f32.mrb[0].mxu0
      %v2630 = vadd.f32 %v2584, %v2629
      %v2631 = vpop.f32.mrb[0].mxu0
      %v2632 = vpop.f32.mrb[0].mxu0
      %v2633 = vadd.f32 %v2584, %v2632
      %v2634 = vpop.f32.mrb[0].mxu0
      %2635 = vdwg.mxu0
      %v2636 = vmax.f32 %v2630, 0.0
      %v2637 = vmax.f32 %v2633, 0.0
      %v2638 = vpack.c.bf16 %v2637, %v2636
      %v2639 = vld [vmem:[%s874] sm:$0xf]
      %v2640 = vld [vmem:[%s874 + $0x4] sm:$0xf]
      %v2641 = vld [vmem:[%s874 + $0x8] sm:$0xf]
      %v2642 = vld [vmem:[%s874 + $0xc] sm:$0xf]
      %v2643 = vld [vmem:[%s874 + $0x10] sm:$0xf]
      %v2644 = vld [vmem:[%s874 + $0x14] sm:$0xf]
      %v2645 = vld [vmem:[%s874 + $0x18] sm:$0xf]
      %v2646 = vld [vmem:[%s874 + $0x1c] sm:$0xf]
      %v2647 = vld [vmem:[%s874 + $0x20] sm:$0xf]
      %v2648 = vld [vmem:[%s874 + $0x24] sm:$0xf]
      %v2649 = vld [vmem:[%s874 + $0x28] sm:$0xf]
      %v2650 = vld [vmem:[%s874 + $0x2c] sm:$0xf]
      %v2651 = vld [vmem:[%s874 + $0x30] sm:$0xf]
      %v2652 = vld [vmem:[%s874 + $0x34] sm:$0xf]
      %v2653 = vld [vmem:[%s874 + $0x38] sm:$0xf]
      %v2654 = vld [vmem:[%s874 + $0x3c] sm:$0xf]
      %v2655 = vld [vmem:[%s877] sm:$0x1]
      %v2657 = vlaneseq
      %v2658 = vshrl.u32 %v2657, 7
      %v2659 = vsub.s32 0, %v2658
      %v2660 = vrot.slane %v2655, %v2659
      %v2678 = vunpack.c.l.b16 %v2639
      %v2679 = vunpack.c.l.b16 %v2640
      %v2680 = vunpack.c.l.b16 %v2641
      %v2681 = vunpack.c.l.b16 %v2642
      %v2682 = vunpack.c.l.b16 %v2643
      %v2683 = vunpack.c.l.b16 %v2644
      %v2684 = vunpack.c.l.b16 %v2645
      %v2685 = vunpack.c.l.b16 %v2646
      %v2686 = vunpack.c.l.b16 %v2647
      %v2687 = vunpack.c.l.b16 %v2648
      %v2688 = vunpack.c.l.b16 %v2649
      %v2689 = vunpack.c.l.b16 %v2650
      %v2690 = vunpack.c.l.b16 %v2651
      %v2691 = vunpack.c.l.b16 %v2652
      %v2692 = vunpack.c.l.b16 %v2653
      %v2693 = vunpack.c.l.b16 %v2654
      %v2694 = vpack.c.b16 %v2679, %v2678
      %v2695 = vpack.c.b16 %v2681, %v2680
      %v2696 = vpack.c.b16 %v2683, %v2682
      %v2697 = vpack.c.b16 %v2685, %v2684
      %v2698 = vpack.c.b16 %v2687, %v2686
      %v2699 = vpack.c.b16 %v2689, %v2688
      %v2700 = vpack.c.b16 %v2691, %v2690
      %v2701 = vpack.c.b16 %v2693, %v2692
      %2710 = vmatprep.subr.bf16.mxu0 0
      %2711 = vmatpush1.bf16.msra.mxu0 %v2694
      %2712 = vmatprep.subr.bf16.mxu0 0
      %2713 = vmatpush1.bf16.msra.mxu0 %v2695
      %2714 = vmatprep.subr.bf16.mxu0 0
      %2715 = vmatpush1.bf16.msra.mxu0 %v2696
      %2716 = vmatprep.subr.bf16.mxu0 0
      %2717 = vmatpush1.bf16.msra.mxu0 %v2697
      %2718 = vmatprep.subr.bf16.mxu0 0
      %2719 = vmatpush1.bf16.msra.mxu0 %v2698
      %2720 = vmatprep.subr.bf16.mxu0 0
      %2721 = vmatpush1.bf16.msra.mxu0 %v2699
      %2722 = vmatprep.subr.bf16.mxu0 0
      %2723 = vmatpush1.bf16.msra.mxu0 %v2700
      %2724 = vmatprep.subr.bf16.mxu0 0
      %2725 = vmatpush1.bf16.msra.mxu0 %v2701
      %2726 = vmatprep.subr.bf16.mxu0 0
      %2727 = vmatpush1.bf16.msra.mxu0 0
      %2728 = vmatprep.subr.bf16.mxu0 0
      %2729 = vmatpush1.bf16.msra.mxu0 0
      %2730 = vmatprep.subr.bf16.mxu0 0
      %2731 = vmatpush1.bf16.msra.mxu0 0
      %2732 = vmatprep.subr.bf16.mxu0 0
      %2733 = vmatpush1.bf16.msra.mxu0 0
      %2734 = vmatprep.subr.bf16.mxu0 0
      %2735 = vmatpush1.bf16.msra.mxu0 0
      %2736 = vmatprep.subr.bf16.mxu0 0
      %2737 = vmatpush1.bf16.msra.mxu0 0
      %2738 = vmatprep.subr.bf16.mxu0 0
      %2739 = vmatpush1.bf16.msra.mxu0 0
      %2740 = vmatprep.subr.bf16.mxu0 0
      %2741 = vmatpush1.bf16.msra.mxu0 0
      %2742 = vmatprep.mubr.bf16.mxu0 0
      %2743 = vmatmul.mubr.bf16.gmra.mrb[0].mxu0 %v2638
      %v2744 = vpop.f32.mrb[0].mxu0
      %v2745 = vadd.f32 %v2660, %v2744
      %v2746 = vpop.f32.mrb[0].mxu0
      %v2747 = vpop.f32.mrb[0].mxu0
      %v2748 = vadd.f32 %v2660, %v2747
      %v2749 = vpop.f32.mrb[0].mxu0
      %2750 = vdwg.mxu0
      %v2751 = vadd.f32 %v2574, %v2745
      %v2752 = vadd.f32 %v2575, %v2748
      %v2753 = vsel %vm922, %v2751, 0.0
      %2754 = vadd.xlane.f32.xlu0 %v2753
      %v2755 = vpop.xlane.xlu0 %2754
      %v2756 = vsel %vm922, %v2752, 0.0
      %2757 = vadd.xlane.f32.xlu0 %v2756
      %v2758 = vpop.xlane.xlu0 %2757
      %v2759 = vmul.f32 %v2755, %v1676
      %v2760 = vmul.f32 %v2758, %v1676
      %v2761 = vsub.f32 %v2751, %v2759
      %v2762 = vsub.f32 %v2752, %v2760
      %v2763 = vmul.f32 %v2761, %v2761
      %v2764 = vmul.f32 %v2762, %v2762
      %v2765 = vsel %vm922, %v2763, 0.0
      %2766 = vadd.xlane.f32.xlu0 %v2765
      %v2767 = vpop.xlane.xlu0 %2766
      %v2768 = vsel %vm922, %v2764, 0.0
      %2769 = vadd.xlane.f32.xlu0 %v2768
      %v2770 = vpop.xlane.xlu0 %2769
      %v2771 = vmul.f32 %v2767, %v1676
      %v2772 = vmul.f32 %v2770, %v1676
      %v2773 = vadd.f32 %v2771, 1e-05
      %v2774 = vadd.f32 %v2772, 1e-05
      %v2775 = vrsqrt.pop %v2773
      %v2776 = vrsqrt.pop %v2774
      %v2777 = vmul.f32 %v2761, %v2775
      %v2778 = vmul.f32 %v2762, %v2776
      %v2779 = vlaneseq
      %v2780 = vshrl.u32 %v2779, 7
      %v2781 = vsub.s32 4, %v2780
      %v2782 = vrot.slane %v906, %v2781
      %v2783 = vmul.f32 %v2777, %v2782
      %v2784 = vmul.f32 %v2778, %v2782
      %v2785 = vlaneseq
      %v2786 = vshrl.u32 %v2785, 7
      %v2787 = vsub.s32 5, %v2786
      %v2788 = vrot.slane %v906, %v2787
      %v2789 = vadd.f32 %v2783, %v2788
      %v2790 = vadd.f32 %v2784, %v2788
      %v2791 = vpack.c.bf16 %v2790, %v2789
      %2792 = vst.msk [vmem:[#allocation2] sm:$0xff] %vm922, %v2791
      %p2793 = scmp.eq.s32.totalorder %s35, 1
      // Predicated region
      $region101: #{transformer_decoder_forward.3} parent=95 // pred_check
        %p2794 = pneg %p2793
      $region102: #{transformer_decoder_forward.3} parent=95 // pred_check_branch
        %2796 = sbr.rel (%p2794) target = $region104
      $region103: #{transformer_decoder_forward.3} parent=95 // pred_region
        %v2797 = vld [vmem:[%s17] sm:$0xf]
        %v2798 = vld [vmem:[%s17 + $0x4] sm:$0xf]
        %v2799 = vld [vmem:[%s18] sm:$0x1]
        %v2801 = vlaneseq
        %v2802 = vshrl.u32 %v2801, 7
        %v2803 = vsub.s32 0, %v2802
        %v2804 = vrot.slane %v2799, %v2803
        %v2808 = vunpack.c.l.b16 %v2797
        %v2809 = vunpack.c.l.b16 %v2798
        %v2810 = vpack.c.b16 %v2809, %v2808
        %v2813 = vsel %vm922, %v2791, 0
        %2815 = vmatprep.subr.bf16.mxu0 0
        %2816 = vmatpush1.bf16.msra.mxu0 %v2810
        %2817 = vmatprep.subr.bf16.mxu0 0
        %2818 = vmatpush1.bf16.msra.mxu0 0
        %2819 = vmatprep.subr.bf16.mxu0 0
        %2820 = vmatpush1.bf16.msra.mxu0 0
        %2821 = vmatprep.subr.bf16.mxu0 0
        %2822 = vmatpush1.bf16.msra.mxu0 0
        %2823 = vmatprep.subr.bf16.mxu0 0
        %2824 = vmatpush1.bf16.msra.mxu0 0
        %2825 = vmatprep.subr.bf16.mxu0 0
        %2826 = vmatpush1.bf16.msra.mxu0 0
        %2827 = vmatprep.subr.bf16.mxu0 0
        %2828 = vmatpush1.bf16.msra.mxu0 0
        %2829 = vmatprep.subr.bf16.mxu0 0
        %2830 = vmatpush1.bf16.msra.mxu0 0
        %2831 = vmatprep.subr.bf16.mxu0 0
        %2832 = vmatpush1.bf16.msra.mxu0 0
        %2833 = vmatprep.subr.bf16.mxu0 0
        %2834 = vmatpush1.bf16.msra.mxu0 0
        %2835 = vmatprep.subr.bf16.mxu0 0
        %2836 = vmatpush1.bf16.msra.mxu0 0
        %2837 = vmatprep.subr.bf16.mxu0 0
        %2838 = vmatpush1.bf16.msra.mxu0 0
        %2839 = vmatprep.subr.bf16.mxu0 0
        %2840 = vmatpush1.bf16.msra.mxu0 0
        %2841 = vmatprep.subr.bf16.mxu0 0
        %2842 = vmatpush1.bf16.msra.mxu0 0
        %2843 = vmatprep.subr.bf16.mxu0 0
        %2844 = vmatpush1.bf16.msra.mxu0 0
        %2845 = vmatprep.subr.bf16.mxu0 0
        %2846 = vmatpush1.bf16.msra.mxu0 0
        %2847 = vmatprep.mubr.bf16.mxu0 0
        %2848 = vmatmul.mubr.bf16.gmra.mrb[0].mxu0 %v2813
        %v2849 = vpop.f32.mrb[0].mxu0
        %v2850 = vadd.f32 %v2804, %v2849
        %v2851 = vpop.f32.mrb[0].mxu0
        %v2852 = vpop.f32.mrb[0].mxu0
        %v2853 = vadd.f32 %v2804, %v2852
        %v2854 = vpop.f32.mrb[0].mxu0
        %2855 = vdwg.mxu0
        %2856 = vst.msk [vmem:[%s886] sm:$0xff] %vm973, %v2850
        %2857 = vst.msk [vmem:[%s886 + $0x8] sm:$0xff] %vm973, %v2853
      $region104: #{transformer_decoder_forward.3} parent=95 // pred_fallthru
        _
      %p2858 = scmp.lt.s32.totalorder %s34, 1
      %s2859 = scalar_select %p2858, %s34, 1
      %s2860 = smul.addr %s2859, 2
      %s2861 = smul.addr %s2860, 8
      %s2862 = scalar_lea.vmem %s19, %s2861
      // Predicated region
      $region105: #{transformer_decoder_forward.3} parent=95 // pred_check
        %p2863 = pneg %p544
      $region106: #{transformer_decoder_forward.3} parent=95 // pred_check_branch
        %2865 = sbr.rel (%p2863) target = $region108
      $region107: #{transformer_decoder_forward.3} parent=95 // pred_region
        _
      $region108: #{transformer_decoder_forward.3} parent=95 // pred_fallthru
        _
    $region96: #{transformer_decoder_forward.3} parent=5 // pred_fallthru
      _
    %p2866 = scmp.le.s32.totalorder 2, %s25
    // Predicated region
    $region109: #{transformer_decoder_forward.3} parent=5 // pred_check
      %p2867 = pneg %p2866
    $region110: #{transformer_decoder_forward.3} parent=5 // pred_check_branch
      %2869 = sbr.rel (%p2867) target = $region112
    $region111: #{transformer_decoder_forward.3} parent=5 // pred_region
      %s2870 = ssub.s32 %s25, 2
      // Predicated region
      $region113: #{transformer_decoder_forward.3} parent=111 // pred_check
        %p2871 = pneg %p550
      $region114: #{transformer_decoder_forward.3} parent=111 // pred_check_branch
        %2873 = sbr.rel (%p2871) target = $region116
      $region115: #{transformer_decoder_forward.3} parent=111 // pred_region
        %p2874 = scmp.lt.s32.totalorder %s36, 1
        %s2875 = scalar_select %p2874, %s36, 1
        %s2876 = smul.addr %s2875, 2
        %s2877 = smul.addr %s2876, 8
        %s2878 = scalar_lea.vmem %s19, %s2877
      $region116: #{transformer_decoder_forward.3} parent=111 // pred_fallthru
        _
    $region112: #{transformer_decoder_forward.3} parent=5 // pred_fallthru
      _
  $region6: #{transformer_decoder_forward.3} parent=0 // loop_footer
    %s29 = sadd.s32 1, %s25
  $region7: #{transformer_decoder_forward.3} parent=0 // loop_footer_branch
    %24 = sbr.rel target = $region3
  $region8: #{transformer_decoder_forward.3} parent=0 // loop_exit
    _

</llo_original>
